<compile_context>
chip_gen: v7x
topology: tpu7x:2x2x1
jax: 0.10.0
libtpu: 0.0.40
codegen_flags: <defaults>
</compile_context>

<pallas_src>
import functools

import numpy as np
import jax
import jax.numpy as jnp
from jax import lax
from jax.experimental import pallas as pl
from jax.experimental.pallas import tpu as pltpu


# ------------------------------ fused kernel ------------------------------- #

def _net_kernel(xc_ref, w1_ref, b1_ref, w2_ref, b2_ref,
                wf1_ref, bf1_ref, wf2_ref, bf2_ref, sel_ref, o_ref):
    f32 = jnp.float32
    R = xc_ref.shape[1]                      # B * 12 stacked rows (12 pooled rows / image)

    # ---- conv1 + 2x2 max-pool + ReLU ----------------------------------------
    # xc[dr, b*12+h', i*28+jj] = x[b, 2h'+dr+i, jj]  (built offline in the wrapper).
    # w1cat packs the two pool column phases (dc=0 / dc=1) at lanes [0:120) / [128:248).
    u0 = jnp.dot(xc_ref[0], w1_ref[...], preferred_element_type=f32)    # (R, 256)
    u1 = jnp.dot(xc_ref[1], w1_ref[...], preferred_element_type=f32)    # (R, 256)
    m1 = jnp.maximum(jnp.maximum(u0[:, 0:128], u0[:, 128:256]),
                     jnp.maximum(u1[:, 0:128], u1[:, 128:256]))
    a1 = jnp.maximum(m1 + b1_ref[...], 0.0)                             # (R, 128), lane = w'*10+ci

    # ---- conv2 + 2x2 max-pool + ReLU  (Dropout2d: identity, inference) ------
    # Rows stay at pitch 12; the 5-row band + pool row phase come from shifted
    # sublane slices of the padded activation (VPU/XLU, no selector matmuls).
    zpad1 = jnp.zeros((8, a1.shape[1]), f32)
    a1p = jnp.concatenate([a1, zpad1], axis=0)                          # (R+8, 128)
    A = [a1] + [a1p[s:s + R, :] for s in range(1, 6)]                   # A[s][r] = a1[r+s]

    def conv2_band(dr):
        acc = jnp.dot(A[dr], w2_ref[0], preferred_element_type=f32)
        for i in range(1, 5):
            acc = acc + jnp.dot(A[dr + i], w2_ref[i], preferred_element_type=f32)
        return acc                                                      # (R, 256)

    v0 = conv2_band(0)
    v1 = conv2_band(1)
    m2 = jnp.maximum(jnp.maximum(v0[:, 0:128], v0[:, 128:256]),
                     jnp.maximum(v1[:, 0:128], v1[:, 128:256]))
    a2 = jnp.maximum(m2 + b2_ref[...], 0.0)          # (R, 128), valid rows r%12 in {0,2,4,6}

    # ---- fc1 (torch NCHW view(-1,320) folded into weights) + ReLU -----------
    zpad2 = jnp.zeros((8, a2.shape[1]), f32)
    a2p = jnp.concatenate([a2, zpad2], axis=0)                          # (R+8, 128)
    h = jnp.dot(a2, wf1_ref[0], preferred_element_type=f32)
    for k in range(1, 4):
        h = h + jnp.dot(a2p[2 * k:2 * k + R, :], wf1_ref[k], preferred_element_type=f32)
    h = jnp.maximum(h + bf1_ref[...], 0.0)                              # (R, 50), valid rows r%12==0
    # TODO(synk): training-mode dropout (RNG masks) not implemented; inference only.

    # ---- fc2, compact to one row per image, log_softmax ---------------------
    logits_s = jnp.dot(h, wf2_ref[...], preferred_element_type=f32) + bf2_ref[...]   # (R, 10)
    logits = jnp.dot(sel_ref[...], logits_s, preferred_element_type=f32)             # (B, 10)
    mx = jnp.max(logits, axis=1, keepdims=True)
    z = logits - mx
    lse = jnp.log(jnp.sum(jnp.exp(z), axis=1, keepdims=True))
    o_ref[...] = z - lse


# ------------------------------- wrapper ------------------------------------ #

def _round_up(n, m):
    return ((n + m - 1) // m) * m


def net_forward(x_nchw, prep, block_b=64):
    """x: (N, 1, 28, 28) f32 NCHW -> (N, 10) log-probs.  One fused pallas_call,
    grid over blocks of B images (B a multiple of 8; batch is zero-padded)."""
    N = x_nchw.shape[0]
    x = x_nchw.reshape(N, 28, 28).astype(jnp.float32)

    B = min(block_b, _round_up(N, 8))
    N_pad = _round_up(N, B)
    if N_pad != N:
        x = jnp.concatenate([x, jnp.zeros((N_pad - N, 28, 28), jnp.float32)], axis=0)

    # Pool-folded row-slab extraction (pure XLA plumbing, outside the kernel):
    #   xc[dr, n*12 + h', i*28 + jj] = x[n, 2*h' + dr + i, jj]
    slabs = []
    for dr in range(2):
        parts = [x[:, dr + i: dr + i + 23: 2, :] for i in range(5)]     # each (N_pad, 12, 28)
        slabs.append(jnp.concatenate(parts, axis=-1))                   # (N_pad, 12, 140)
    xc = jnp.stack(slabs, axis=0).reshape(2, N_pad * 12, 140)

    R = B * 12
    # One-hot row compactor: picks row b*12 (the valid fc output row) per image.
    sel = (jnp.arange(R)[None, :] == (jnp.arange(B) * 12)[:, None]).astype(jnp.float32)

    full2 = lambda n: (0, 0)
    full3 = lambda n: (0, 0, 0)

    out = pl.pallas_call(
        _net_kernel,
        out_shape=jax.ShapeDtypeStruct((N_pad, 10), jnp.float32),
        grid=(N_pad // B,),
        in_specs=[
            pl.BlockSpec((2, R, 140), lambda n: (0, n, 0)),   # pool-folded input slabs
            pl.BlockSpec((140, 256), full2),                  # conv1 banded weights (dc packed @0/128)
            pl.BlockSpec((1, 128), full2),                    # conv1 bias (tiled, padded)
            pl.BlockSpec((5, 128, 256), full3),               # conv2 banded weights (dc packed @0/128)
            pl.BlockSpec((1, 128), full2),                    # conv2 bias (tiled, padded)
            pl.BlockSpec((4, 128, 50), full3),                # fc1 weights (NCHW flatten folded)
            pl.BlockSpec((1, 50), full2),                     # fc1 bias
            pl.BlockSpec((50, 10), full2),                    # fc2 weights
            pl.BlockSpec((1, 10), full2),                     # fc2 bias
            pl.BlockSpec((B, R), full2),                      # row compactor (one-hot)
        ],
        out_specs=pl.BlockSpec((B, 10), lambda n: (n, 0)),
        compiler_params=pltpu.CompilerParams(
            dimension_semantics=("parallel",),                # batch blocks split across TCs (v7x)
            vmem_limit_bytes=32 * 1024 * 1024,
        ),
    )(xc, prep["w1cat"], prep["b1t"], prep["w2b2"], prep["b2t"],
      prep["wf1s"], prep["bf1"], prep["wf2"], prep["bf2"], sel)
    return out[:N]


# ------------------- one-time (offline) parameter preparation --------------- #

def prepare_params(params):
    """Fold conv banding, both 2x2 max-pool column phases and the torch NCHW
    flatten into precomputed weight matrices (pure offline weight plumbing)."""
    w1 = np.asarray(params["w1"], np.float32)        # (5, 5, 1, 10)  HWIO
    b1 = np.asarray(params["b1"], np.float32).reshape(10)
    w2 = np.asarray(params["w2"], np.float32)        # (5, 5, 10, 20) HWIO
    b2 = np.asarray(params["b2"], np.float32).reshape(20)
    wf1 = np.asarray(params["wf1"], np.float32)      # (320, 50), rows = torch c*16+h*4+w order

    # conv1 (+pool col phases dc=0/1 packed at lane offsets 0 / 128):
    #   w1cat[i*28 + jj, dc*128 + w'*10 + co] = w1[i, jj-(2w'+dc), 0, co]
    w1cat = np.zeros((140, 256), np.float32)
    for dc in range(2):
        for i in range(5):
            for j in range(5):
                for wp in range(12):
                    jj = 2 * wp + dc + j
                    col = dc * 128 + wp * 10
                    w1cat[i * 28 + jj, col:col + 10] = w1[i, j, 0, :]
    b1t = np.zeros((1, 128), np.float32)
    b1t[0, :120] = np.tile(b1, 12)

    # conv2 banded weights (+pool col phases dc2=0/1 packed at lane offsets 0 / 128):
    #   w2b2[i, (2w''+dc+j)*10 + ci, dc*128 + w''*20 + co] = w2[i, j, ci, co]
    w2b2 = np.zeros((5, 128, 256), np.float32)
    for dc in range(2):
        for i in range(5):
            for j in range(5):
                for wpp in range(4):
                    wp = 2 * wpp + dc + j
                    col = dc * 128 + wpp * 20
                    for ci in range(10):
                        w2b2[i, wp * 10 + ci, col:col + 20] = w2[i, j, ci, :]
    b2t = np.zeros((1, 128), np.float32)
    b2t[0, :80] = np.tile(b2, 4)

    # fc1 weights, one (128, 50) slab per pooled row h'' (torch flat idx = c*16+h*4+w).
    wf1s = np.zeros((4, 128, 50), np.float32)
    for hpp in range(4):
        for wpp in range(4):
            for co in range(20):
                wf1s[hpp, wpp * 20 + co, :] = wf1[co * 16 + hpp * 4 + wpp, :]

    return {
        "w1cat": jnp.asarray(w1cat), "b1t": jnp.asarray(b1t),
        "w2b2": jnp.asarray(w2b2), "b2t": jnp.asarray(b2t),
        "wf1s": jnp.asarray(wf1s),
        "bf1": jnp.asarray(params["bf1"], dtype=jnp.float32),
        "wf2": jnp.asarray(params["wf2"], dtype=jnp.float32),
        "bf2": jnp.asarray(params["bf2"], dtype=jnp.float32),
    }


# --------------------------- reference & params ----------------------------- #

def net_reference(x_nchw, params):
    # Pure-XLA reference of the same forward pass (for correctness checking).
    x = jnp.transpose(x_nchw, (0, 2, 3, 1))                  # NHWC
    dn = ("NHWC", "HWIO", "NHWC")
    y = lax.conv_general_dilated(x, params["w1"], (1, 1), "VALID", dimension_numbers=dn)
    y = y + params["b1"].reshape(1, 1, 1, 10)
    y = lax.reduce_window(y, -jnp.inf, lax.max, (1, 2, 2, 1), (1, 2, 2, 1), "VALID")
    y = jnp.maximum(y, 0.0)
    y = lax.conv_general_dilated(y, params["w2"], (1, 1), "VALID", dimension_numbers=dn)
    y = y + params["b2"].reshape(1, 1, 1, 20)
    y = lax.reduce_window(y, -jnp.inf, lax.max, (1, 2, 2, 1), (1, 2, 2, 1), "VALID")
    y = jnp.maximum(y, 0.0)
    N = y.shape[0]
    y = jnp.transpose(y, (0, 3, 1, 2)).reshape(N, 320)       # torch NCHW flatten
    h = jnp.maximum(y @ params["wf1"] + params["bf1"], 0.0)
    logits = h @ params["wf2"] + params["bf2"]
    return jax.nn.log_softmax(logits, axis=1)


def init_params(key):
    # Deterministic synthetic weights, PyTorch-style uniform(-1/sqrt(fan_in), ..).
    ks = jax.random.split(key, 8)

    def u(k, shape, fan_in):
        bound = 1.0 / (fan_in ** 0.5)
        return jax.random.uniform(k, shape, jnp.float32, -bound, bound)

    return {
        "w1": u(ks[0], (5, 5, 1, 10), 25),       # conv1: 1 -> 10, k=5 (HWIO)
        "b1": u(ks[1], (1, 10), 25),
        "w2": u(ks[2], (5, 5, 10, 20), 250),     # conv2: 10 -> 20, k=5 (HWIO)
        "b2": u(ks[3], (1, 20), 250),
        "wf1": u(ks[4], (320, 50), 320),         # fc1 (rows in torch c*16+h*4+w order)
        "bf1": u(ks[5], (1, 50), 320),
        "wf2": u(ks[6], (50, 10), 50),           # fc2
        "bf2": u(ks[7], (1, 10), 50),
    }


if __name__ == "__main__":
    key = jax.random.PRNGKey(0)
    pkey, xkey, xkey2 = jax.random.split(key, 3)
    params = init_params(pkey)
    prep = prepare_params(params)

    # Small sanity case (batch=2; padded up to one 8-image block inside the wrapper).
    x = jax.random.normal(xkey, (2, 1, 28, 28), dtype=jnp.float32)
    out = jax.block_until_ready(jax.jit(net_forward)(x, prep))
    assert out.shape == (2, 10), out.shape
    # log_softmax rows must (exp-)sum to ~1.
    assert bool(jnp.all(jnp.abs(jnp.sum(jnp.exp(out), axis=1) - 1.0) < 1e-4))
    ref = net_reference(x, params)
    # Loose tol covers MXU vs XLA default-precision conv accumulation differences.
    assert bool(jnp.all(jnp.abs(out - ref) < 2e-2)), float(jnp.max(jnp.abs(out - ref)))

    # Multi-block path: 40 images, block_b=16 -> batch padded to 48, grid of 3 steps.
    x2 = jax.random.normal(xkey2, (40, 1, 28, 28), dtype=jnp.float32)
    fwd2 = jax.jit(functools.partial(net_forward, block_b=16))
    out2 = jax.block_until_ready(fwd2(x2, prep))
    assert out2.shape == (40, 10), out2.shape
    ref2 = net_reference(x2, params)
    assert bool(jnp.all(jnp.abs(out2 - ref2) < 2e-2)), float(jnp.max(jnp.abs(out2 - ref2)))

    print("KERNEL_OK")
</pallas_src>

<mosaic_0001>
module attributes {stable_mosaic.version = 11 : i64} {
  func.func @_net_kernel(%arg0: i32, %arg1: memref<2x96x140xf32, #tpu.memory_space<vmem>>, %arg2: memref<140x256xf32, #tpu.memory_space<vmem>>, %arg3: memref<1x128xf32, #tpu.memory_space<vmem>>, %arg4: memref<5x128x256xf32, #tpu.memory_space<vmem>>, %arg5: memref<1x128xf32, #tpu.memory_space<vmem>>, %arg6: memref<4x128x50xf32, #tpu.memory_space<vmem>>, %arg7: memref<1x50xf32, #tpu.memory_space<vmem>>, %arg8: memref<50x10xf32, #tpu.memory_space<vmem>>, %arg9: memref<1x10xf32, #tpu.memory_space<vmem>>, %arg10: memref<8x96xf32, #tpu.memory_space<vmem>>, %arg11: memref<8x10xf32, #tpu.memory_space<vmem>>) attributes {dimension_semantics = [#tpu.dimension_semantics<parallel>], iteration_bounds = array<i64: 1>, scalar_prefetch = 0 : i64, scratch_operands = 0 : i64, tpu.core_type = #tpu.core_type<tc>, window_params = [{transform_indices = @transform_0, window_bounds = array<i64: 2, 96, 140>}, {pipeline_mode = #tpu.pipeline_mode<synchronous>, transform_indices = @transform_1, window_bounds = array<i64: 140, 256>}, {pipeline_mode = #tpu.pipeline_mode<synchronous>, transform_indices = @transform_2, window_bounds = array<i64: 1, 128>}, {pipeline_mode = #tpu.pipeline_mode<synchronous>, transform_indices = @transform_3, window_bounds = array<i64: 5, 128, 256>}, {pipeline_mode = #tpu.pipeline_mode<synchronous>, transform_indices = @transform_4, window_bounds = array<i64: 1, 128>}, {pipeline_mode = #tpu.pipeline_mode<synchronous>, transform_indices = @transform_5, window_bounds = array<i64: 4, 128, 50>}, {pipeline_mode = #tpu.pipeline_mode<synchronous>, transform_indices = @transform_6, window_bounds = array<i64: 1, 50>}, {pipeline_mode = #tpu.pipeline_mode<synchronous>, transform_indices = @transform_7, window_bounds = array<i64: 50, 10>}, {pipeline_mode = #tpu.pipeline_mode<synchronous>, transform_indices = @transform_8, window_bounds = array<i64: 1, 10>}, {pipeline_mode = #tpu.pipeline_mode<synchronous>, transform_indices = @transform_9, window_bounds = array<i64: 8, 96>}, {transform_indices = @transform_10, window_bounds = array<i64: 8, 10>}]} {
    %c0 = arith.constant 0 : index
    %c0_0 = arith.constant 0 : index
    %c0_1 = arith.constant 0 : index
    %0 = vector.load %arg1[%c0, %c0_0, %c0_1] : memref<2x96x140xf32, #tpu.memory_space<vmem>>, vector<1x96x140xf32>
    %1 = vector.shape_cast %0 : vector<1x96x140xf32> to vector<96x140xf32>
    %c0_2 = arith.constant 0 : index
    %c0_3 = arith.constant 0 : index
    %2 = vector.load %arg2[%c0_2, %c0_3] : memref<140x256xf32, #tpu.memory_space<vmem>>, vector<140x256xf32>
    %cst = arith.constant dense<0.000000e+00> : vector<96x256xf32>
    %3 = tpu.matmul %1, %2, %cst {dimension_numbers = #tpu.dot_dimension_numbers<[1], [0], [0], [1], [0, 0, 1, 1], [], []>} : vector<96x140xf32>, vector<140x256xf32>, vector<96x256xf32> -> vector<96x256xf32>
    %c1 = arith.constant 1 : index
    %c0_4 = arith.constant 0 : index
    %c0_5 = arith.constant 0 : index
    %4 = vector.load %arg1[%c1, %c0_4, %c0_5] : memref<2x96x140xf32, #tpu.memory_space<vmem>>, vector<1x96x140xf32>
    %5 = vector.shape_cast %4 : vector<1x96x140xf32> to vector<96x140xf32>
    %c0_6 = arith.constant 0 : index
    %c0_7 = arith.constant 0 : index
    %6 = vector.load %arg2[%c0_6, %c0_7] : memref<140x256xf32, #tpu.memory_space<vmem>>, vector<140x256xf32>
    %cst_8 = arith.constant dense<0.000000e+00> : vector<96x256xf32>
    %7 = tpu.matmul %5, %6, %cst_8 {dimension_numbers = #tpu.dot_dimension_numbers<[1], [0], [0], [1], [0, 0, 1, 1], [], []>} : vector<96x140xf32>, vector<140x256xf32>, vector<96x256xf32> -> vector<96x256xf32>
    %8 = vector.extract_strided_slice %3 {offsets = [0, 0], sizes = [96, 128], strides = [1, 1]} : vector<96x256xf32> to vector<96x128xf32>
    %9 = vector.extract_strided_slice %3 {offsets = [0, 128], sizes = [96, 128], strides = [1, 1]} : vector<96x256xf32> to vector<96x128xf32>
    %10 = arith.maximumf %8, %9 : vector<96x128xf32>
    %11 = vector.extract_strided_slice %7 {offsets = [0, 0], sizes = [96, 128], strides = [1, 1]} : vector<96x256xf32> to vector<96x128xf32>
    %12 = vector.extract_strided_slice %7 {offsets = [0, 128], sizes = [96, 128], strides = [1, 1]} : vector<96x256xf32> to vector<96x128xf32>
    %13 = arith.maximumf %11, %12 : vector<96x128xf32>
    %14 = arith.maximumf %10, %13 : vector<96x128xf32>
    %c0_9 = arith.constant 0 : index
    %c0_10 = arith.constant 0 : index
    %15 = vector.load %arg3[%c0_9, %c0_10] : memref<1x128xf32, #tpu.memory_space<vmem>>, vector<1x128xf32>
    %16 = vector.broadcast %15 : vector<1x128xf32> to vector<96x128xf32>
    %17 = arith.addf %14, %16 : vector<96x128xf32>
    %cst_11 = arith.constant 0.000000e+00 : f32
    %18 = vector.broadcast %cst_11 : f32 to vector<96x128xf32>
    %19 = arith.maximumf %17, %18 : vector<96x128xf32>
    %cst_12 = arith.constant 0.000000e+00 : f32
    %20 = vector.broadcast %cst_12 : f32 to vector<8x128xf32>
    %21 = tpu.concatenate %19, %20 in 0 : vector<96x128xf32>, vector<8x128xf32> -> vector<104x128xf32>
    %22 = vector.extract_strided_slice %21 {offsets = [1, 0], sizes = [96, 128], strides = [1, 1]} : vector<104x128xf32> to vector<96x128xf32>
    %23 = vector.extract_strided_slice %21 {offsets = [2, 0], sizes = [96, 128], strides = [1, 1]} : vector<104x128xf32> to vector<96x128xf32>
    %24 = vector.extract_strided_slice %21 {offsets = [3, 0], sizes = [96, 128], strides = [1, 1]} : vector<104x128xf32> to vector<96x128xf32>
    %25 = vector.extract_strided_slice %21 {offsets = [4, 0], sizes = [96, 128], strides = [1, 1]} : vector<104x128xf32> to vector<96x128xf32>
    %26 = vector.extract_strided_slice %21 {offsets = [5, 0], sizes = [96, 128], strides = [1, 1]} : vector<104x128xf32> to vector<96x128xf32>
    %c0_13 = arith.constant 0 : index
    %c0_14 = arith.constant 0 : index
    %c0_15 = arith.constant 0 : index
    %27 = vector.load %arg4[%c0_13, %c0_14, %c0_15] : memref<5x128x256xf32, #tpu.memory_space<vmem>>, vector<1x128x256xf32>
    %28 = vector.shape_cast %27 : vector<1x128x256xf32> to vector<128x256xf32>
    %cst_16 = arith.constant dense<0.000000e+00> : vector<96x256xf32>
    %29 = tpu.matmul %19, %28, %cst_16 {dimension_numbers = #tpu.dot_dimension_numbers<[1], [0], [0], [1], [0, 0, 1, 1], [], []>} : vector<96x128xf32>, vector<128x256xf32>, vector<96x256xf32> -> vector<96x256xf32>
    %c1_17 = arith.constant 1 : index
    %c0_18 = arith.constant 0 : index
    %c0_19 = arith.constant 0 : index
    %30 = vector.load %arg4[%c1_17, %c0_18, %c0_19] : memref<5x128x256xf32, #tpu.memory_space<vmem>>, vector<1x128x256xf32>
    %31 = vector.shape_cast %30 : vector<1x128x256xf32> to vector<128x256xf32>
    %cst_20 = arith.constant dense<0.000000e+00> : vector<96x256xf32>
    %32 = tpu.matmul %22, %31, %cst_20 {dimension_numbers = #tpu.dot_dimension_numbers<[1], [0], [0], [1], [0, 0, 1, 1], [], []>} : vector<96x128xf32>, vector<128x256xf32>, vector<96x256xf32> -> vector<96x256xf32>
    %33 = arith.addf %29, %32 : vector<96x256xf32>
    %c2 = arith.constant 2 : index
    %c0_21 = arith.constant 0 : index
    %c0_22 = arith.constant 0 : index
    %34 = vector.load %arg4[%c2, %c0_21, %c0_22] : memref<5x128x256xf32, #tpu.memory_space<vmem>>, vector<1x128x256xf32>
    %35 = vector.shape_cast %34 : vector<1x128x256xf32> to vector<128x256xf32>
    %cst_23 = arith.constant dense<0.000000e+00> : vector<96x256xf32>
    %36 = tpu.matmul %23, %35, %cst_23 {dimension_numbers = #tpu.dot_dimension_numbers<[1], [0], [0], [1], [0, 0, 1, 1], [], []>} : vector<96x128xf32>, vector<128x256xf32>, vector<96x256xf32> -> vector<96x256xf32>
    %37 = arith.addf %33, %36 : vector<96x256xf32>
    %c3 = arith.constant 3 : index
    %c0_24 = arith.constant 0 : index
    %c0_25 = arith.constant 0 : index
    %38 = vector.load %arg4[%c3, %c0_24, %c0_25] : memref<5x128x256xf32, #tpu.memory_space<vmem>>, vector<1x128x256xf32>
    %39 = vector.shape_cast %38 : vector<1x128x256xf32> to vector<128x256xf32>
    %cst_26 = arith.constant dense<0.000000e+00> : vector<96x256xf32>
    %40 = tpu.matmul %24, %39, %cst_26 {dimension_numbers = #tpu.dot_dimension_numbers<[1], [0], [0], [1], [0, 0, 1, 1], [], []>} : vector<96x128xf32>, vector<128x256xf32>, vector<96x256xf32> -> vector<96x256xf32>
    %41 = arith.addf %37, %40 : vector<96x256xf32>
    %c4 = arith.constant 4 : index
    %c0_27 = arith.constant 0 : index
    %c0_28 = arith.constant 0 : index
    %42 = vector.load %arg4[%c4, %c0_27, %c0_28] : memref<5x128x256xf32, #tpu.memory_space<vmem>>, vector<1x128x256xf32>
    %43 = vector.shape_cast %42 : vector<1x128x256xf32> to vector<128x256xf32>
    %cst_29 = arith.constant dense<0.000000e+00> : vector<96x256xf32>
    %44 = tpu.matmul %25, %43, %cst_29 {dimension_numbers = #tpu.dot_dimension_numbers<[1], [0], [0], [1], [0, 0, 1, 1], [], []>} : vector<96x128xf32>, vector<128x256xf32>, vector<96x256xf32> -> vector<96x256xf32>
    %45 = arith.addf %41, %44 : vector<96x256xf32>
    %c0_30 = arith.constant 0 : index
    %c0_31 = arith.constant 0 : index
    %c0_32 = arith.constant 0 : index
    %46 = vector.load %arg4[%c0_30, %c0_31, %c0_32] : memref<5x128x256xf32, #tpu.memory_space<vmem>>, vector<1x128x256xf32>
    %47 = vector.shape_cast %46 : vector<1x128x256xf32> to vector<128x256xf32>
    %cst_33 = arith.constant dense<0.000000e+00> : vector<96x256xf32>
    %48 = tpu.matmul %22, %47, %cst_33 {dimension_numbers = #tpu.dot_dimension_numbers<[1], [0], [0], [1], [0, 0, 1, 1], [], []>} : vector<96x128xf32>, vector<128x256xf32>, vector<96x256xf32> -> vector<96x256xf32>
    %c1_34 = arith.constant 1 : index
    %c0_35 = arith.constant 0 : index
    %c0_36 = arith.constant 0 : index
    %49 = vector.load %arg4[%c1_34, %c0_35, %c0_36] : memref<5x128x256xf32, #tpu.memory_space<vmem>>, vector<1x128x256xf32>
    %50 = vector.shape_cast %49 : vector<1x128x256xf32> to vector<128x256xf32>
    %cst_37 = arith.constant dense<0.000000e+00> : vector<96x256xf32>
    %51 = tpu.matmul %23, %50, %cst_37 {dimension_numbers = #tpu.dot_dimension_numbers<[1], [0], [0], [1], [0, 0, 1, 1], [], []>} : vector<96x128xf32>, vector<128x256xf32>, vector<96x256xf32> -> vector<96x256xf32>
    %52 = arith.addf %48, %51 : vector<96x256xf32>
    %c2_38 = arith.constant 2 : index
    %c0_39 = arith.constant 0 : index
    %c0_40 = arith.constant 0 : index
    %53 = vector.load %arg4[%c2_38, %c0_39, %c0_40] : memref<5x128x256xf32, #tpu.memory_space<vmem>>, vector<1x128x256xf32>
    %54 = vector.shape_cast %53 : vector<1x128x256xf32> to vector<128x256xf32>
    %cst_41 = arith.constant dense<0.000000e+00> : vector<96x256xf32>
    %55 = tpu.matmul %24, %54, %cst_41 {dimension_numbers = #tpu.dot_dimension_numbers<[1], [0], [0], [1], [0, 0, 1, 1], [], []>} : vector<96x128xf32>, vector<128x256xf32>, vector<96x256xf32> -> vector<96x256xf32>
    %56 = arith.addf %52, %55 : vector<96x256xf32>
    %c3_42 = arith.constant 3 : index
    %c0_43 = arith.constant 0 : index
    %c0_44 = arith.constant 0 : index
    %57 = vector.load %arg4[%c3_42, %c0_43, %c0_44] : memref<5x128x256xf32, #tpu.memory_space<vmem>>, vector<1x128x256xf32>
    %58 = vector.shape_cast %57 : vector<1x128x256xf32> to vector<128x256xf32>
    %cst_45 = arith.constant dense<0.000000e+00> : vector<96x256xf32>
    %59 = tpu.matmul %25, %58, %cst_45 {dimension_numbers = #tpu.dot_dimension_numbers<[1], [0], [0], [1], [0, 0, 1, 1], [], []>} : vector<96x128xf32>, vector<128x256xf32>, vector<96x256xf32> -> vector<96x256xf32>
    %60 = arith.addf %56, %59 : vector<96x256xf32>
    %c4_46 = arith.constant 4 : index
    %c0_47 = arith.constant 0 : index
    %c0_48 = arith.constant 0 : index
    %61 = vector.load %arg4[%c4_46, %c0_47, %c0_48] : memref<5x128x256xf32, #tpu.memory_space<vmem>>, vector<1x128x256xf32>
    %62 = vector.shape_cast %61 : vector<1x128x256xf32> to vector<128x256xf32>
    %cst_49 = arith.constant dense<0.000000e+00> : vector<96x256xf32>
    %63 = tpu.matmul %26, %62, %cst_49 {dimension_numbers = #tpu.dot_dimension_numbers<[1], [0], [0], [1], [0, 0, 1, 1], [], []>} : vector<96x128xf32>, vector<128x256xf32>, vector<96x256xf32> -> vector<96x256xf32>
    %64 = arith.addf %60, %63 : vector<96x256xf32>
    %65 = vector.extract_strided_slice %45 {offsets = [0, 0], sizes = [96, 128], strides = [1, 1]} : vector<96x256xf32> to vector<96x128xf32>
    %66 = vector.extract_strided_slice %45 {offsets = [0, 128], sizes = [96, 128], strides = [1, 1]} : vector<96x256xf32> to vector<96x128xf32>
    %67 = arith.maximumf %65, %66 : vector<96x128xf32>
    %68 = vector.extract_strided_slice %64 {offsets = [0, 0], sizes = [96, 128], strides = [1, 1]} : vector<96x256xf32> to vector<96x128xf32>
    %69 = vector.extract_strided_slice %64 {offsets = [0, 128], sizes = [96, 128], strides = [1, 1]} : vector<96x256xf32> to vector<96x128xf32>
    %70 = arith.maximumf %68, %69 : vector<96x128xf32>
    %71 = arith.maximumf %67, %70 : vector<96x128xf32>
    %c0_50 = arith.constant 0 : index
    %c0_51 = arith.constant 0 : index
    %72 = vector.load %arg5[%c0_50, %c0_51] : memref<1x128xf32, #tpu.memory_space<vmem>>, vector<1x128xf32>
    %73 = vector.broadcast %72 : vector<1x128xf32> to vector<96x128xf32>
    %74 = arith.addf %71, %73 : vector<96x128xf32>
    %cst_52 = arith.constant 0.000000e+00 : f32
    %75 = vector.broadcast %cst_52 : f32 to vector<96x128xf32>
    %76 = arith.maximumf %74, %75 : vector<96x128xf32>
    %cst_53 = arith.constant 0.000000e+00 : f32
    %77 = vector.broadcast %cst_53 : f32 to vector<8x128xf32>
    %78 = tpu.concatenate %76, %77 in 0 : vector<96x128xf32>, vector<8x128xf32> -> vector<104x128xf32>
    %c0_54 = arith.constant 0 : index
    %c0_55 = arith.constant 0 : index
    %c0_56 = arith.constant 0 : index
    %79 = vector.load %arg6[%c0_54, %c0_55, %c0_56] : memref<4x128x50xf32, #tpu.memory_space<vmem>>, vector<1x128x50xf32>
    %80 = vector.shape_cast %79 : vector<1x128x50xf32> to vector<128x50xf32>
    %cst_57 = arith.constant dense<0.000000e+00> : vector<96x50xf32>
    %81 = tpu.matmul %76, %80, %cst_57 {dimension_numbers = #tpu.dot_dimension_numbers<[1], [0], [0], [1], [0, 0, 1, 1], [], []>} : vector<96x128xf32>, vector<128x50xf32>, vector<96x50xf32> -> vector<96x50xf32>
    %82 = vector.extract_strided_slice %78 {offsets = [2, 0], sizes = [96, 128], strides = [1, 1]} : vector<104x128xf32> to vector<96x128xf32>
    %c1_58 = arith.constant 1 : index
    %c0_59 = arith.constant 0 : index
    %c0_60 = arith.constant 0 : index
    %83 = vector.load %arg6[%c1_58, %c0_59, %c0_60] : memref<4x128x50xf32, #tpu.memory_space<vmem>>, vector<1x128x50xf32>
    %84 = vector.shape_cast %83 : vector<1x128x50xf32> to vector<128x50xf32>
    %cst_61 = arith.constant dense<0.000000e+00> : vector<96x50xf32>
    %85 = tpu.matmul %82, %84, %cst_61 {dimension_numbers = #tpu.dot_dimension_numbers<[1], [0], [0], [1], [0, 0, 1, 1], [], []>} : vector<96x128xf32>, vector<128x50xf32>, vector<96x50xf32> -> vector<96x50xf32>
    %86 = arith.addf %81, %85 : vector<96x50xf32>
    %87 = vector.extract_strided_slice %78 {offsets = [4, 0], sizes = [96, 128], strides = [1, 1]} : vector<104x128xf32> to vector<96x128xf32>
    %c2_62 = arith.constant 2 : index
    %c0_63 = arith.constant 0 : index
    %c0_64 = arith.constant 0 : index
    %88 = vector.load %arg6[%c2_62, %c0_63, %c0_64] : memref<4x128x50xf32, #tpu.memory_space<vmem>>, vector<1x128x50xf32>
    %89 = vector.shape_cast %88 : vector<1x128x50xf32> to vector<128x50xf32>
    %cst_65 = arith.constant dense<0.000000e+00> : vector<96x50xf32>
    %90 = tpu.matmul %87, %89, %cst_65 {dimension_numbers = #tpu.dot_dimension_numbers<[1], [0], [0], [1], [0, 0, 1, 1], [], []>} : vector<96x128xf32>, vector<128x50xf32>, vector<96x50xf32> -> vector<96x50xf32>
    %91 = arith.addf %86, %90 : vector<96x50xf32>
    %92 = vector.extract_strided_slice %78 {offsets = [6, 0], sizes = [96, 128], strides = [1, 1]} : vector<104x128xf32> to vector<96x128xf32>
    %c3_66 = arith.constant 3 : index
    %c0_67 = arith.constant 0 : index
    %c0_68 = arith.constant 0 : index
    %93 = vector.load %arg6[%c3_66, %c0_67, %c0_68] : memref<4x128x50xf32, #tpu.memory_space<vmem>>, vector<1x128x50xf32>
    %94 = vector.shape_cast %93 : vector<1x128x50xf32> to vector<128x50xf32>
    %cst_69 = arith.constant dense<0.000000e+00> : vector<96x50xf32>
    %95 = tpu.matmul %92, %94, %cst_69 {dimension_numbers = #tpu.dot_dimension_numbers<[1], [0], [0], [1], [0, 0, 1, 1], [], []>} : vector<96x128xf32>, vector<128x50xf32>, vector<96x50xf32> -> vector<96x50xf32>
    %96 = arith.addf %91, %95 : vector<96x50xf32>
    %c0_70 = arith.constant 0 : index
    %c0_71 = arith.constant 0 : index
    %97 = vector.load %arg7[%c0_70, %c0_71] : memref<1x50xf32, #tpu.memory_space<vmem>>, vector<1x50xf32>
    %98 = vector.broadcast %97 : vector<1x50xf32> to vector<96x50xf32>
    %99 = arith.addf %96, %98 : vector<96x50xf32>
    %cst_72 = arith.constant 0.000000e+00 : f32
    %100 = vector.broadcast %cst_72 : f32 to vector<96x50xf32>
    %101 = arith.maximumf %99, %100 : vector<96x50xf32>
    %c0_73 = arith.constant 0 : index
    %c0_74 = arith.constant 0 : index
    %102 = vector.load %arg8[%c0_73, %c0_74] : memref<50x10xf32, #tpu.memory_space<vmem>>, vector<50x10xf32>
    %cst_75 = arith.constant dense<0.000000e+00> : vector<96x10xf32>
    %103 = tpu.matmul %101, %102, %cst_75 {dimension_numbers = #tpu.dot_dimension_numbers<[1], [0], [0], [1], [0, 0, 1, 1], [], []>} : vector<96x50xf32>, vector<50x10xf32>, vector<96x10xf32> -> vector<96x10xf32>
    %c0_76 = arith.constant 0 : index
    %c0_77 = arith.constant 0 : index
    %104 = vector.load %arg9[%c0_76, %c0_77] : memref<1x10xf32, #tpu.memory_space<vmem>>, vector<1x10xf32>
    %105 = vector.broadcast %104 : vector<1x10xf32> to vector<96x10xf32>
    %106 = arith.addf %103, %105 : vector<96x10xf32>
    %c0_78 = arith.constant 0 : index
    %c0_79 = arith.constant 0 : index
    %107 = vector.load %arg10[%c0_78, %c0_79] : memref<8x96xf32, #tpu.memory_space<vmem>>, vector<8x96xf32>
    %cst_80 = arith.constant dense<0.000000e+00> : vector<8x10xf32>
    %108 = tpu.matmul %107, %106, %cst_80 {dimension_numbers = #tpu.dot_dimension_numbers<[1], [0], [0], [1], [0, 0, 1, 1], [], []>} : vector<8x96xf32>, vector<96x10xf32>, vector<8x10xf32> -> vector<8x10xf32>
    %cst_81 = arith.constant dense<0xFF800000> : vector<8xf32>
    %109 = vector.multi_reduction <maximumf>, %108, %cst_81 [1] : vector<8x10xf32> to vector<8xf32>
    %110 = vector.shape_cast %109 : vector<8xf32> to vector<8x1xf32>
    %111 = vector.broadcast %110 : vector<8x1xf32> to vector<8x10xf32>
    %112 = arith.subf %108, %111 : vector<8x10xf32>
    %113 = math.exp %112 : vector<8x10xf32>
    %cst_82 = arith.constant dense<0.000000e+00> : vector<8xf32>
    %114 = vector.multi_reduction <add>, %113, %cst_82 [1] : vector<8x10xf32> to vector<8xf32>
    %115 = vector.shape_cast %114 : vector<8xf32> to vector<8x1xf32>
    %116 = math.log %115 : vector<8x1xf32>
    %117 = vector.broadcast %116 : vector<8x1xf32> to vector<8x10xf32>
    %118 = arith.subf %112, %117 : vector<8x10xf32>
    %c0_83 = arith.constant 0 : index
    %c0_84 = arith.constant 0 : index
    %119 = vector.load %arg11[%c0_83, %c0_84] : memref<8x10xf32, #tpu.memory_space<vmem>>, vector<8x10xf32>
    tpu.vector_store %arg11[%c0_83, %c0_84], %118 {strides = array<i32>} : memref<8x10xf32, #tpu.memory_space<vmem>>, vector<8x10xf32>,
    return
  }
  func.func @transform_0(%arg0: i32) -> (i32, i32, i32) {
    %c0_i32 = arith.constant 0 : i32
    %c0_i32_0 = arith.constant 0 : i32
    %c0_i32_1 = arith.constant 0 : i32
    return %c0_i32, %arg0, %c0_i32_0 : i32, i32, i32
  }
  func.func @transform_1(%arg0: i32) -> (i32, i32) {
    %c0_i32 = arith.constant 0 : i32
    %c0_i32_0 = arith.constant 0 : i32
    %c0_i32_1 = arith.constant 0 : i32
    return %c0_i32, %c0_i32_0 : i32, i32
  }
  func.func @transform_2(%arg0: i32) -> (i32, i32) {
    %c0_i32 = arith.constant 0 : i32
    %c0_i32_0 = arith.constant 0 : i32
    %c0_i32_1 = arith.constant 0 : i32
    return %c0_i32, %c0_i32_0 : i32, i32
  }
  func.func @transform_3(%arg0: i32) -> (i32, i32, i32) {
    %c0_i32 = arith.constant 0 : i32
    %c0_i32_0 = arith.constant 0 : i32
    %c0_i32_1 = arith.constant 0 : i32
    %c0_i32_2 = arith.constant 0 : i32
    return %c0_i32, %c0_i32_0, %c0_i32_1 : i32, i32, i32
  }
  func.func @transform_4(%arg0: i32) -> (i32, i32) {
    %c0_i32 = arith.constant 0 : i32
    %c0_i32_0 = arith.constant 0 : i32
    %c0_i32_1 = arith.constant 0 : i32
    return %c0_i32, %c0_i32_0 : i32, i32
  }
  func.func @transform_5(%arg0: i32) -> (i32, i32, i32) {
    %c0_i32 = arith.constant 0 : i32
    %c0_i32_0 = arith.constant 0 : i32
    %c0_i32_1 = arith.constant 0 : i32
    %c0_i32_2 = arith.constant 0 : i32
    return %c0_i32, %c0_i32_0, %c0_i32_1 : i32, i32, i32
  }
  func.func @transform_6(%arg0: i32) -> (i32, i32) {
    %c0_i32 = arith.constant 0 : i32
    %c0_i32_0 = arith.constant 0 : i32
    %c0_i32_1 = arith.constant 0 : i32
    return %c0_i32, %c0_i32_0 : i32, i32
  }
  func.func @transform_7(%arg0: i32) -> (i32, i32) {
    %c0_i32 = arith.constant 0 : i32
    %c0_i32_0 = arith.constant 0 : i32
    %c0_i32_1 = arith.constant 0 : i32
    return %c0_i32, %c0_i32_0 : i32, i32
  }
  func.func @transform_8(%arg0: i32) -> (i32, i32) {
    %c0_i32 = arith.constant 0 : i32
    %c0_i32_0 = arith.constant 0 : i32
    %c0_i32_1 = arith.constant 0 : i32
    return %c0_i32, %c0_i32_0 : i32, i32
  }
  func.func @transform_9(%arg0: i32) -> (i32, i32) {
    %c0_i32 = arith.constant 0 : i32
    %c0_i32_0 = arith.constant 0 : i32
    %c0_i32_1 = arith.constant 0 : i32
    return %c0_i32, %c0_i32_0 : i32, i32
  }
  func.func @transform_10(%arg0: i32) -> (i32, i32) {
    %c0_i32 = arith.constant 0 : i32
    %c0_i32_0 = arith.constant 0 : i32
    return %arg0, %c0_i32 : i32, i32
  }
}

</mosaic_0001>

<llo_original>
// kernel: net_forward.1
$region0: #{net_forward.1}
  #allocation0 [shape = 'u32[]', space=smem, size = 0x4, offset = 0x4, fixed_abs, tag = 'smem constant byte address 0x4 - core index']
  #allocation1 [shape = 'u32[144,128]{1,0:T(1,128)}', space=vmem, size = 0x12000, scoped, tag = 'internal scratch']
  %s0 = inlined_call_operand.vmem [shape: f32[2,96,140], index: 0, kind: input, shape index: {}]
  %s1 = inlined_call_operand.vmem [shape: f32[140,256], index: 1, kind: input, shape index: {}]
  %s2 = inlined_call_operand.vmem [shape: f32[1,128], index: 2, kind: input, shape index: {}]
  %s3 = inlined_call_operand.vmem [shape: f32[5,128,256], index: 3, kind: input, shape index: {}]
  %s4 = inlined_call_operand.vmem [shape: f32[1,128], index: 4, kind: input, shape index: {}]
  %s5 = inlined_call_operand.vmem [shape: f32[4,128,50], index: 5, kind: input, shape index: {}]
  %s6 = inlined_call_operand.vmem [shape: f32[1,50], index: 6, kind: input, shape index: {}]
  %s7 = inlined_call_operand.vmem [shape: f32[50,10], index: 7, kind: input, shape index: {}]
  %s8 = inlined_call_operand.vmem [shape: f32[1,10], index: 8, kind: input, shape index: {}]
  %s9 = inlined_call_operand.vmem [shape: f32[8,96], index: 9, kind: input, shape index: {}]
  %s10 = inlined_call_operand.vmem [shape: f32[8,10], index: 10, kind: output, shape index: {}]
  %s11 = sld [smem:[#allocation0]]
  $region50: #{net_forward.1} parent=0
    _
  %s13 = ssub.s32 1, %s11
  %s14 = scalar_select 0, %s13, %s11
  // Predicated region
  $region2: #{net_forward.1} parent=0 // pred_check
    _
  $region3: #{net_forward.1} parent=0 // pred_check_branch
    %16 = sbr.rel (0) target = $region5
  $region4: #{net_forward.1} parent=0 // pred_region
    _
  $region5: #{net_forward.1} parent=0 // pred_fallthru
    _
  // Predicated region
  $region6: #{net_forward.1} parent=0 // pred_check
    _
  $region7: #{net_forward.1} parent=0 // pred_check_branch
    %18 = sbr.rel (0) target = $region9
  $region8: #{net_forward.1} parent=0 // pred_region
    _
  $region9: #{net_forward.1} parent=0 // pred_fallthru
    _
  // Predicated region
  $region10: #{net_forward.1} parent=0 // pred_check
    _
  $region11: #{net_forward.1} parent=0 // pred_check_branch
    %20 = sbr.rel (0) target = $region13
  $region12: #{net_forward.1} parent=0 // pred_region
    _
  $region13: #{net_forward.1} parent=0 // pred_fallthru
    _
  // Predicated region
  $region14: #{net_forward.1} parent=0 // pred_check
    _
  $region15: #{net_forward.1} parent=0 // pred_check_branch
    %22 = sbr.rel (0) target = $region17
  $region16: #{net_forward.1} parent=0 // pred_region
    _
  $region17: #{net_forward.1} parent=0 // pred_fallthru
    _
  // Predicated region
  $region18: #{net_forward.1} parent=0 // pred_check
    _
  $region19: #{net_forward.1} parent=0 // pred_check_branch
    %24 = sbr.rel (0) target = $region21
  $region20: #{net_forward.1} parent=0 // pred_region
    _
  $region21: #{net_forward.1} parent=0 // pred_fallthru
    _
  // Predicated region
  $region22: #{net_forward.1} parent=0 // pred_check
    _
  $region23: #{net_forward.1} parent=0 // pred_check_branch
    %26 = sbr.rel (0) target = $region25
  $region24: #{net_forward.1} parent=0 // pred_region
    _
  $region25: #{net_forward.1} parent=0 // pred_fallthru
    _
  // Predicated region
  $region26: #{net_forward.1} parent=0 // pred_check
    _
  $region27: #{net_forward.1} parent=0 // pred_check_branch
    %28 = sbr.rel (0) target = $region29
  $region28: #{net_forward.1} parent=0 // pred_region
    _
  $region29: #{net_forward.1} parent=0 // pred_fallthru
    _
  // Predicated region
  $region30: #{net_forward.1} parent=0 // pred_check
    _
  $region31: #{net_forward.1} parent=0 // pred_check_branch
    %30 = sbr.rel (0) target = $region33
  $region32: #{net_forward.1} parent=0 // pred_region
    _
  $region33: #{net_forward.1} parent=0 // pred_fallthru
    _
  // Predicated region
  $region34: #{net_forward.1} parent=0 // pred_check
    _
  $region35: #{net_forward.1} parent=0 // pred_check_branch
    %32 = sbr.rel (0) target = $region37
  $region36: #{net_forward.1} parent=0 // pred_region
    _
  $region37: #{net_forward.1} parent=0 // pred_fallthru
    _
  // Predicated region
  $region38: #{net_forward.1} parent=0 // pred_check
    _
  $region39: #{net_forward.1} parent=0 // pred_check_branch
    %34 = sbr.rel (0) target = $region41
  $region40: #{net_forward.1} parent=0 // pred_region
    _
  $region41: #{net_forward.1} parent=0 // pred_fallthru
    _
  %v35 = vld [vmem:[%s0] sm:$0xff]
  %v36 = vld [vmem:[%s0 + $0x8] sm:$0xff]
  %v37 = vld [vmem:[%s0 + $0x10] sm:$0xff]
  %v38 = vld [vmem:[%s0 + $0x18] sm:$0xff]
  %v39 = vld [vmem:[%s0 + $0x20] sm:$0xff]
  %v40 = vld [vmem:[%s0 + $0x28] sm:$0xff]
  %v41 = vld [vmem:[%s0 + $0x30] sm:$0xff]
  %v42 = vld [vmem:[%s0 + $0x38] sm:$0xff]
  %v43 = vld [vmem:[%s0 + $0x40] sm:$0xff]
  %v44 = vld [vmem:[%s0 + $0x48] sm:$0xff]
  %v45 = vld [vmem:[%s0 + $0x50] sm:$0xff]
  %v46 = vld [vmem:[%s0 + $0x58] sm:$0xff]
  %v47 = vld [vmem:[%s0 + $0x60] sm:$0xff]
  %v48 = vld [vmem:[%s0 + $0x68] sm:$0xff]
  %v49 = vld [vmem:[%s0 + $0x70] sm:$0xff]
  %v50 = vld [vmem:[%s0 + $0x78] sm:$0xff]
  %v51 = vld [vmem:[%s0 + $0x80] sm:$0xff]
  %v52 = vld [vmem:[%s0 + $0x88] sm:$0xff]
  %v53 = vld [vmem:[%s0 + $0x90] sm:$0xff]
  %v54 = vld [vmem:[%s0 + $0x98] sm:$0xff]
  %v55 = vld [vmem:[%s0 + $0xa0] sm:$0xff]
  %v56 = vld [vmem:[%s0 + $0xa8] sm:$0xff]
  %v57 = vld [vmem:[%s0 + $0xb0] sm:$0xff]
  %v58 = vld [vmem:[%s0 + $0xb8] sm:$0xff]
  %v59 = vld [vmem:[%s1] sm:$0xff]
  %v60 = vld [vmem:[%s1 + $0x8] sm:$0xff]
  %v61 = vld [vmem:[%s1 + $0x10] sm:$0xff]
  %v62 = vld [vmem:[%s1 + $0x18] sm:$0xff]
  %v63 = vld [vmem:[%s1 + $0x20] sm:$0xff]
  %v64 = vld [vmem:[%s1 + $0x28] sm:$0xff]
  %v65 = vld [vmem:[%s1 + $0x30] sm:$0xff]
  %v66 = vld [vmem:[%s1 + $0x38] sm:$0xff]
  %v67 = vld [vmem:[%s1 + $0x40] sm:$0xff]
  %v68 = vld [vmem:[%s1 + $0x48] sm:$0xff]
  %v69 = vld [vmem:[%s1 + $0x50] sm:$0xff]
  %v70 = vld [vmem:[%s1 + $0x58] sm:$0xff]
  %v71 = vld [vmem:[%s1 + $0x60] sm:$0xff]
  %v72 = vld [vmem:[%s1 + $0x68] sm:$0xff]
  %v73 = vld [vmem:[%s1 + $0x70] sm:$0xff]
  %v74 = vld [vmem:[%s1 + $0x78] sm:$0xff]
  %v75 = vld [vmem:[%s1 + $0x80] sm:$0xff]
  %v76 = vld [vmem:[%s1 + $0x88] sm:$0xff]
  %v77 = vld [vmem:[%s1 + $0x90] sm:$0xff]
  %v78 = vld [vmem:[%s1 + $0x98] sm:$0xff]
  %v79 = vld [vmem:[%s1 + $0xa0] sm:$0xff]
  %v80 = vld [vmem:[%s1 + $0xa8] sm:$0xff]
  %v81 = vld [vmem:[%s1 + $0xb0] sm:$0xff]
  %v82 = vld [vmem:[%s1 + $0xb8] sm:$0xff]
  %v83 = vld [vmem:[%s1 + $0xc0] sm:$0xff]
  %v84 = vld [vmem:[%s1 + $0xc8] sm:$0xff]
  %v85 = vld [vmem:[%s1 + $0xd0] sm:$0xff]
  %v86 = vld [vmem:[%s1 + $0xd8] sm:$0xff]
  %v87 = vld [vmem:[%s1 + $0xe0] sm:$0xff]
  %v88 = vld [vmem:[%s1 + $0xe8] sm:$0xff]
  %v89 = vld [vmem:[%s1 + $0xf0] sm:$0xff]
  %v90 = vld [vmem:[%s1 + $0xf8] sm:$0xff]
  %v91 = vld [vmem:[%s1 + $0x100] sm:$0xff]
  %v92 = vld [vmem:[%s1 + $0x108] sm:$0xff]
  %v93 = vld [vmem:[%s1 + $0x110] sm:$0xf]
  %v94 = vld [vmem:[%s1 + $0x118] sm:$0xf]
  %vm95 = vcmask 97280
  %v97 = vsel %vm95, %v36, 0
  %v100 = vsel %vm95, %v38, 0
  %v103 = vsel %vm95, %v40, 0
  %v106 = vsel %vm95, %v42, 0
  %v109 = vsel %vm95, %v44, 0
  %v112 = vsel %vm95, %v46, 0
  %v115 = vsel %vm95, %v48, 0
  %v118 = vsel %vm95, %v50, 0
  %v121 = vsel %vm95, %v52, 0
  %v124 = vsel %vm95, %v54, 0
  %v127 = vsel %vm95, %v56, 0
  %v130 = vsel %vm95, %v58, 0
  %vm132 = vcmask 1043456
  %v134 = vsel %vm132, %v93, 0
  %v137 = vsel %vm132, %v94, 0
  %139 = vmatprep.subr.mxu0 %v60
  %140 = vmatpush1.msra.mxu0 %v59
  %141 = vmatprep.subr.mxu0 %v62
  %142 = vmatpush1.msra.mxu0 %v61
  %143 = vmatprep.subr.mxu0 %v64
  %144 = vmatpush1.msra.mxu0 %v63
  %145 = vmatprep.subr.mxu0 %v66
  %146 = vmatpush1.msra.mxu0 %v65
  %147 = vmatprep.subr.mxu0 %v68
  %148 = vmatpush1.msra.mxu0 %v67
  %149 = vmatprep.subr.mxu0 %v70
  %150 = vmatpush1.msra.mxu0 %v69
  %151 = vmatprep.subr.mxu0 %v72
  %152 = vmatpush1.msra.mxu0 %v71
  %153 = vmatprep.subr.mxu0 %v74
  %154 = vmatpush1.msra.mxu0 %v73
  %155 = vmatprep.subr.mxu0 %v76
  %156 = vmatpush1.msra.mxu0 %v75
  %157 = vmatprep.subr.mxu0 %v78
  %158 = vmatpush1.msra.mxu0 %v77
  %159 = vmatprep.subr.mxu0 %v80
  %160 = vmatpush1.msra.mxu0 %v79
  %161 = vmatprep.subr.mxu0 %v82
  %162 = vmatpush1.msra.mxu0 %v81
  %163 = vmatprep.subr.mxu0 %v84
  %164 = vmatpush1.msra.mxu0 %v83
  %165 = vmatprep.subr.mxu0 %v86
  %166 = vmatpush1.msra.mxu0 %v85
  %167 = vmatprep.subr.mxu0 %v88
  %168 = vmatpush1.msra.mxu0 %v87
  %169 = vmatprep.subr.mxu0 %v90
  %170 = vmatpush1.msra.mxu0 %v89
  %171 = vmatprep.subr.mxu0 %v92
  %172 = vmatpush1.msra.mxu0 %v91
  %173 = vmatprep.subr.mxu0 %v137
  %174 = vmatpush1.msra.mxu0 %v134
  %175 = vmatprep.subr.mxu0 0.0
  %176 = vmatpush1.msra.mxu0 0.0
  %177 = vmatprep.subr.mxu0 0.0
  %178 = vmatpush1.msra.mxu0 0.0
  %179 = vmatprep.subr.mxu0 0.0
  %180 = vmatpush1.msra.mxu0 0.0
  %181 = vmatprep.subr.mxu0 0.0
  %182 = vmatpush1.msra.mxu0 0.0
  %183 = vmatprep.subr.mxu0 0.0
  %184 = vmatpush1.msra.mxu0 0.0
  %185 = vmatprep.subr.mxu0 0.0
  %186 = vmatpush1.msra.mxu0 0.0
  %187 = vmatprep.subr.mxu0 0.0
  %188 = vmatpush1.msra.mxu0 0.0
  %189 = vmatprep.subr.mxu0 0.0
  %190 = vmatpush1.msra.mxu0 0.0
  %191 = vmatprep.subr.mxu0 0.0
  %192 = vmatpush1.msra.mxu0 0.0
  %193 = vmatprep.subr.mxu0 0.0
  %194 = vmatpush1.msra.mxu0 0.0
  %195 = vmatprep.subr.mxu0 0.0
  %196 = vmatpush1.msra.mxu0 0.0
  %197 = vmatprep.subr.mxu0 0.0
  %198 = vmatpush1.msra.mxu0 0.0
  %199 = vmatprep.subr.mxu0 0.0
  %200 = vmatpush1.msra.mxu0 0.0
  %201 = vmatprep.subr.mxu0 0.0
  %202 = vmatpush1.msra.mxu0 0.0
  %203 = vmatprep.mubr.f32.mxu0 %v97
  %204 = vmatmul.mubr.f32.gmra.mrb[0].mxu0 %v35
  %v205 = vpop.f32.mrb[0].mxu0
  %v206 = vadd.f32 0.0, %v205
  %v207 = vpop.f32.mrb[0].mxu0
  %v208 = vadd.f32 0.0, %v207
  %209 = vmatprep.mubr.f32.mxu0 %v100
  %210 = vmatmul.mubr.f32.gmra.mrb[0].mxu0 %v37
  %v211 = vpop.f32.mrb[0].mxu0
  %v212 = vadd.f32 0.0, %v211
  %v213 = vpop.f32.mrb[0].mxu0
  %v214 = vadd.f32 0.0, %v213
  %215 = vmatprep.mubr.f32.mxu0 %v103
  %216 = vmatmul.mubr.f32.gmra.mrb[0].mxu0 %v39
  %v217 = vpop.f32.mrb[0].mxu0
  %v218 = vadd.f32 0.0, %v217
  %v219 = vpop.f32.mrb[0].mxu0
  %v220 = vadd.f32 0.0, %v219
  %221 = vmatprep.mubr.f32.mxu0 %v106
  %222 = vmatmul.mubr.f32.gmra.mrb[0].mxu0 %v41
  %v223 = vpop.f32.mrb[0].mxu0
  %v224 = vadd.f32 0.0, %v223
  %v225 = vpop.f32.mrb[0].mxu0
  %v226 = vadd.f32 0.0, %v225
  %227 = vmatprep.mubr.f32.mxu0 %v109
  %228 = vmatmul.mubr.f32.gmra.mrb[0].mxu0 %v43
  %v229 = vpop.f32.mrb[0].mxu0
  %v230 = vadd.f32 0.0, %v229
  %v231 = vpop.f32.mrb[0].mxu0
  %v232 = vadd.f32 0.0, %v231
  %233 = vmatprep.mubr.f32.mxu0 %v112
  %234 = vmatmul.mubr.f32.gmra.mrb[0].mxu0 %v45
  %v235 = vpop.f32.mrb[0].mxu0
  %v236 = vadd.f32 0.0, %v235
  %v237 = vpop.f32.mrb[0].mxu0
  %v238 = vadd.f32 0.0, %v237
  %239 = vmatprep.mubr.f32.mxu0 %v115
  %240 = vmatmul.mubr.f32.gmra.mrb[0].mxu0 %v47
  %v241 = vpop.f32.mrb[0].mxu0
  %v242 = vadd.f32 0.0, %v241
  %v243 = vpop.f32.mrb[0].mxu0
  %v244 = vadd.f32 0.0, %v243
  %245 = vmatprep.mubr.f32.mxu0 %v118
  %246 = vmatmul.mubr.f32.gmra.mrb[0].mxu0 %v49
  %v247 = vpop.f32.mrb[0].mxu0
  %v248 = vadd.f32 0.0, %v247
  %v249 = vpop.f32.mrb[0].mxu0
  %v250 = vadd.f32 0.0, %v249
  %251 = vmatprep.mubr.f32.mxu0 %v121
  %252 = vmatmul.mubr.f32.gmra.mrb[0].mxu0 %v51
  %v253 = vpop.f32.mrb[0].mxu0
  %v254 = vadd.f32 0.0, %v253
  %v255 = vpop.f32.mrb[0].mxu0
  %v256 = vadd.f32 0.0, %v255
  %257 = vmatprep.mubr.f32.mxu0 %v124
  %258 = vmatmul.mubr.f32.gmra.mrb[0].mxu0 %v53
  %v259 = vpop.f32.mrb[0].mxu0
  %v260 = vadd.f32 0.0, %v259
  %v261 = vpop.f32.mrb[0].mxu0
  %v262 = vadd.f32 0.0, %v261
  %263 = vmatprep.mubr.f32.mxu0 %v127
  %264 = vmatmul.mubr.f32.gmra.mrb[0].mxu0 %v55
  %v265 = vpop.f32.mrb[0].mxu0
  %v266 = vadd.f32 0.0, %v265
  %v267 = vpop.f32.mrb[0].mxu0
  %v268 = vadd.f32 0.0, %v267
  %269 = vmatprep.mubr.f32.mxu0 %v130
  %270 = vmatmul.mubr.f32.gmra.mrb[0].mxu0 %v57
  %v271 = vpop.f32.mrb[0].mxu0
  %v272 = vadd.f32 0.0, %v271
  %v273 = vpop.f32.mrb[0].mxu0
  %v274 = vadd.f32 0.0, %v273
  %275 = vdwg.mxu0
  %s276 = scalar_lea.vmem %s0, 192
  %v277 = vld [vmem:[%s276] sm:$0xff]
  %v278 = vld [vmem:[%s276 + $0x8] sm:$0xff]
  %v279 = vld [vmem:[%s276 + $0x10] sm:$0xff]
  %v280 = vld [vmem:[%s276 + $0x18] sm:$0xff]
  %v281 = vld [vmem:[%s276 + $0x20] sm:$0xff]
  %v282 = vld [vmem:[%s276 + $0x28] sm:$0xff]
  %v283 = vld [vmem:[%s276 + $0x30] sm:$0xff]
  %v284 = vld [vmem:[%s276 + $0x38] sm:$0xff]
  %v285 = vld [vmem:[%s276 + $0x40] sm:$0xff]
  %v286 = vld [vmem:[%s276 + $0x48] sm:$0xff]
  %v287 = vld [vmem:[%s276 + $0x50] sm:$0xff]
  %v288 = vld [vmem:[%s276 + $0x58] sm:$0xff]
  %v289 = vld [vmem:[%s276 + $0x60] sm:$0xff]
  %v290 = vld [vmem:[%s276 + $0x68] sm:$0xff]
  %v291 = vld [vmem:[%s276 + $0x70] sm:$0xff]
  %v292 = vld [vmem:[%s276 + $0x78] sm:$0xff]
  %v293 = vld [vmem:[%s276 + $0x80] sm:$0xff]
  %v294 = vld [vmem:[%s276 + $0x88] sm:$0xff]
  %v295 = vld [vmem:[%s276 + $0x90] sm:$0xff]
  %v296 = vld [vmem:[%s276 + $0x98] sm:$0xff]
  %v297 = vld [vmem:[%s276 + $0xa0] sm:$0xff]
  %v298 = vld [vmem:[%s276 + $0xa8] sm:$0xff]
  %v299 = vld [vmem:[%s276 + $0xb0] sm:$0xff]
  %v300 = vld [vmem:[%s276 + $0xb8] sm:$0xff]
  %v302 = vsel %vm95, %v278, 0
  %v305 = vsel %vm95, %v280, 0
  %v308 = vsel %vm95, %v282, 0
  %v311 = vsel %vm95, %v284, 0
  %v314 = vsel %vm95, %v286, 0
  %v317 = vsel %vm95, %v288, 0
  %v320 = vsel %vm95, %v290, 0
  %v323 = vsel %vm95, %v292, 0
  %v326 = vsel %vm95, %v294, 0
  %v329 = vsel %vm95, %v296, 0
  %v332 = vsel %vm95, %v298, 0
  %v335 = vsel %vm95, %v300, 0
  %337 = vmatprep.subr.mxu0 %v60
  %338 = vmatpush1.msra.mxu0 %v59
  %339 = vmatprep.subr.mxu0 %v62
  %340 = vmatpush1.msra.mxu0 %v61
  %341 = vmatprep.subr.mxu0 %v64
  %342 = vmatpush1.msra.mxu0 %v63
  %343 = vmatprep.subr.mxu0 %v66
  %344 = vmatpush1.msra.mxu0 %v65
  %345 = vmatprep.subr.mxu0 %v68
  %346 = vmatpush1.msra.mxu0 %v67
  %347 = vmatprep.subr.mxu0 %v70
  %348 = vmatpush1.msra.mxu0 %v69
  %349 = vmatprep.subr.mxu0 %v72
  %350 = vmatpush1.msra.mxu0 %v71
  %351 = vmatprep.subr.mxu0 %v74
  %352 = vmatpush1.msra.mxu0 %v73
  %353 = vmatprep.subr.mxu0 %v76
  %354 = vmatpush1.msra.mxu0 %v75
  %355 = vmatprep.subr.mxu0 %v78
  %356 = vmatpush1.msra.mxu0 %v77
  %357 = vmatprep.subr.mxu0 %v80
  %358 = vmatpush1.msra.mxu0 %v79
  %359 = vmatprep.subr.mxu0 %v82
  %360 = vmatpush1.msra.mxu0 %v81
  %361 = vmatprep.subr.mxu0 %v84
  %362 = vmatpush1.msra.mxu0 %v83
  %363 = vmatprep.subr.mxu0 %v86
  %364 = vmatpush1.msra.mxu0 %v85
  %365 = vmatprep.subr.mxu0 %v88
  %366 = vmatpush1.msra.mxu0 %v87
  %367 = vmatprep.subr.mxu0 %v90
  %368 = vmatpush1.msra.mxu0 %v89
  %369 = vmatprep.subr.mxu0 %v92
  %370 = vmatpush1.msra.mxu0 %v91
  %371 = vmatprep.subr.mxu0 %v137
  %372 = vmatpush1.msra.mxu0 %v134
  %373 = vmatprep.subr.mxu0 0.0
  %374 = vmatpush1.msra.mxu0 0.0
  %375 = vmatprep.subr.mxu0 0.0
  %376 = vmatpush1.msra.mxu0 0.0
  %377 = vmatprep.subr.mxu0 0.0
  %378 = vmatpush1.msra.mxu0 0.0
  %379 = vmatprep.subr.mxu0 0.0
  %380 = vmatpush1.msra.mxu0 0.0
  %381 = vmatprep.subr.mxu0 0.0
  %382 = vmatpush1.msra.mxu0 0.0
  %383 = vmatprep.subr.mxu0 0.0
  %384 = vmatpush1.msra.mxu0 0.0
  %385 = vmatprep.subr.mxu0 0.0
  %386 = vmatpush1.msra.mxu0 0.0
  %387 = vmatprep.subr.mxu0 0.0
  %388 = vmatpush1.msra.mxu0 0.0
  %389 = vmatprep.subr.mxu0 0.0
  %390 = vmatpush1.msra.mxu0 0.0
  %391 = vmatprep.subr.mxu0 0.0
  %392 = vmatpush1.msra.mxu0 0.0
  %393 = vmatprep.subr.mxu0 0.0
  %394 = vmatpush1.msra.mxu0 0.0
  %395 = vmatprep.subr.mxu0 0.0
  %396 = vmatpush1.msra.mxu0 0.0
  %397 = vmatprep.subr.mxu0 0.0
  %398 = vmatpush1.msra.mxu0 0.0
  %399 = vmatprep.subr.mxu0 0.0
  %400 = vmatpush1.msra.mxu0 0.0
  %401 = vmatprep.mubr.f32.mxu0 %v302
  %402 = vmatmul.mubr.f32.gmra.mrb[0].mxu0 %v277
  %v403 = vpop.f32.mrb[0].mxu0
  %v404 = vadd.f32 0.0, %v403
  %v405 = vpop.f32.mrb[0].mxu0
  %v406 = vadd.f32 0.0, %v405
  %407 = vmatprep.mubr.f32.mxu0 %v305
  %408 = vmatmul.mubr.f32.gmra.mrb[0].mxu0 %v279
  %v409 = vpop.f32.mrb[0].mxu0
  %v410 = vadd.f32 0.0, %v409
  %v411 = vpop.f32.mrb[0].mxu0
  %v412 = vadd.f32 0.0, %v411
  %413 = vmatprep.mubr.f32.mxu0 %v308
  %414 = vmatmul.mubr.f32.gmra.mrb[0].mxu0 %v281
  %v415 = vpop.f32.mrb[0].mxu0
  %v416 = vadd.f32 0.0, %v415
  %v417 = vpop.f32.mrb[0].mxu0
  %v418 = vadd.f32 0.0, %v417
  %419 = vmatprep.mubr.f32.mxu0 %v311
  %420 = vmatmul.mubr.f32.gmra.mrb[0].mxu0 %v283
  %v421 = vpop.f32.mrb[0].mxu0
  %v422 = vadd.f32 0.0, %v421
  %v423 = vpop.f32.mrb[0].mxu0
  %v424 = vadd.f32 0.0, %v423
  %425 = vmatprep.mubr.f32.mxu0 %v314
  %426 = vmatmul.mubr.f32.gmra.mrb[0].mxu0 %v285
  %v427 = vpop.f32.mrb[0].mxu0
  %v428 = vadd.f32 0.0, %v427
  %v429 = vpop.f32.mrb[0].mxu0
  %v430 = vadd.f32 0.0, %v429
  %431 = vmatprep.mubr.f32.mxu0 %v317
  %432 = vmatmul.mubr.f32.gmra.mrb[0].mxu0 %v287
  %v433 = vpop.f32.mrb[0].mxu0
  %v434 = vadd.f32 0.0, %v433
  %v435 = vpop.f32.mrb[0].mxu0
  %v436 = vadd.f32 0.0, %v435
  %437 = vmatprep.mubr.f32.mxu0 %v320
  %438 = vmatmul.mubr.f32.gmra.mrb[0].mxu0 %v289
  %v439 = vpop.f32.mrb[0].mxu0
  %v440 = vadd.f32 0.0, %v439
  %v441 = vpop.f32.mrb[0].mxu0
  %v442 = vadd.f32 0.0, %v441
  %443 = vmatprep.mubr.f32.mxu0 %v323
  %444 = vmatmul.mubr.f32.gmra.mrb[0].mxu0 %v291
  %v445 = vpop.f32.mrb[0].mxu0
  %v446 = vadd.f32 0.0, %v445
  %v447 = vpop.f32.mrb[0].mxu0
  %v448 = vadd.f32 0.0, %v447
  %449 = vmatprep.mubr.f32.mxu0 %v326
  %450 = vmatmul.mubr.f32.gmra.mrb[0].mxu0 %v293
  %v451 = vpop.f32.mrb[0].mxu0
  %v452 = vadd.f32 0.0, %v451
  %v453 = vpop.f32.mrb[0].mxu0
  %v454 = vadd.f32 0.0, %v453
  %455 = vmatprep.mubr.f32.mxu0 %v329
  %456 = vmatmul.mubr.f32.gmra.mrb[0].mxu0 %v295
  %v457 = vpop.f32.mrb[0].mxu0
  %v458 = vadd.f32 0.0, %v457
  %v459 = vpop.f32.mrb[0].mxu0
  %v460 = vadd.f32 0.0, %v459
  %461 = vmatprep.mubr.f32.mxu0 %v332
  %462 = vmatmul.mubr.f32.gmra.mrb[0].mxu0 %v297
  %v463 = vpop.f32.mrb[0].mxu0
  %v464 = vadd.f32 0.0, %v463
  %v465 = vpop.f32.mrb[0].mxu0
  %v466 = vadd.f32 0.0, %v465
  %467 = vmatprep.mubr.f32.mxu0 %v335
  %468 = vmatmul.mubr.f32.gmra.mrb[0].mxu0 %v299
  %v469 = vpop.f32.mrb[0].mxu0
  %v470 = vadd.f32 0.0, %v469
  %v471 = vpop.f32.mrb[0].mxu0
  %v472 = vadd.f32 0.0, %v471
  %473 = vdwg.mxu0
  %v474 = vmax.f32 %v206, %v208
  %v475 = vmax.f32 %v212, %v214
  %v476 = vmax.f32 %v218, %v220
  %v477 = vmax.f32 %v224, %v226
  %v478 = vmax.f32 %v230, %v232
  %v479 = vmax.f32 %v236, %v238
  %v480 = vmax.f32 %v242, %v244
  %v481 = vmax.f32 %v248, %v250
  %v482 = vmax.f32 %v254, %v256
  %v483 = vmax.f32 %v260, %v262
  %v484 = vmax.f32 %v266, %v268
  %v485 = vmax.f32 %v272, %v274
  %v486 = vmax.f32 %v404, %v406
  %v487 = vmax.f32 %v410, %v412
  %v488 = vmax.f32 %v416, %v418
  %v489 = vmax.f32 %v422, %v424
  %v490 = vmax.f32 %v428, %v430
  %v491 = vmax.f32 %v434, %v436
  %v492 = vmax.f32 %v440, %v442
  %v493 = vmax.f32 %v446, %v448
  %v494 = vmax.f32 %v452, %v454
  %v495 = vmax.f32 %v458, %v460
  %v496 = vmax.f32 %v464, %v466
  %v497 = vmax.f32 %v470, %v472
  %v498 = vmax.f32 %v474, %v486
  %v499 = vmax.f32 %v475, %v487
  %v500 = vmax.f32 %v476, %v488
  %v501 = vmax.f32 %v477, %v489
  %v502 = vmax.f32 %v478, %v490
  %v503 = vmax.f32 %v479, %v491
  %v504 = vmax.f32 %v480, %v492
  %v505 = vmax.f32 %v481, %v493
  %v506 = vmax.f32 %v482, %v494
  %v507 = vmax.f32 %v483, %v495
  %v508 = vmax.f32 %v484, %v496
  %v509 = vmax.f32 %v485, %v497
  %v510 = vld [vmem:[%s2] sm:$0x1]
  %v512 = vlaneseq
  %v513 = vshrl.u32 %v512, 7
  %v514 = vsub.s32 0, %v513
  %v515 = vrot.slane %v510, %v514
  %v517 = vadd.f32 %v498, %v515
  %v518 = vadd.f32 %v499, %v515
  %v519 = vadd.f32 %v500, %v515
  %v520 = vadd.f32 %v501, %v515
  %v521 = vadd.f32 %v502, %v515
  %v522 = vadd.f32 %v503, %v515
  %v523 = vadd.f32 %v504, %v515
  %v524 = vadd.f32 %v505, %v515
  %v525 = vadd.f32 %v506, %v515
  %v526 = vadd.f32 %v507, %v515
  %v527 = vadd.f32 %v508, %v515
  %v528 = vadd.f32 %v509, %v515
  %v529 = vmax.f32 %v517, 0.0
  %v530 = vmax.f32 %v518, 0.0
  %v531 = vmax.f32 %v519, 0.0
  %v532 = vmax.f32 %v520, 0.0
  %v533 = vmax.f32 %v521, 0.0
  %v534 = vmax.f32 %v522, 0.0
  %v535 = vmax.f32 %v523, 0.0
  %v536 = vmax.f32 %v524, 0.0
  %v537 = vmax.f32 %v525, 0.0
  %v538 = vmax.f32 %v526, 0.0
  %v539 = vmax.f32 %v527, 0.0
  %v540 = vmax.f32 %v528, 0.0
  %v541 = vld [vmem:[%s3] sm:$0xff]
  %v542 = vld [vmem:[%s3 + $0x8] sm:$0xff]
  %v543 = vld [vmem:[%s3 + $0x10] sm:$0xff]
  %v544 = vld [vmem:[%s3 + $0x18] sm:$0xff]
  %v545 = vld [vmem:[%s3 + $0x20] sm:$0xff]
  %v546 = vld [vmem:[%s3 + $0x28] sm:$0xff]
  %v547 = vld [vmem:[%s3 + $0x30] sm:$0xff]
  %v548 = vld [vmem:[%s3 + $0x38] sm:$0xff]
  %v549 = vld [vmem:[%s3 + $0x40] sm:$0xff]
  %v550 = vld [vmem:[%s3 + $0x48] sm:$0xff]
  %v551 = vld [vmem:[%s3 + $0x50] sm:$0xff]
  %v552 = vld [vmem:[%s3 + $0x58] sm:$0xff]
  %v553 = vld [vmem:[%s3 + $0x60] sm:$0xff]
  %v554 = vld [vmem:[%s3 + $0x68] sm:$0xff]
  %v555 = vld [vmem:[%s3 + $0x70] sm:$0xff]
  %v556 = vld [vmem:[%s3 + $0x78] sm:$0xff]
  %v557 = vld [vmem:[%s3 + $0x80] sm:$0xff]
  %v558 = vld [vmem:[%s3 + $0x88] sm:$0xff]
  %v559 = vld [vmem:[%s3 + $0x90] sm:$0xff]
  %v560 = vld [vmem:[%s3 + $0x98] sm:$0xff]
  %v561 = vld [vmem:[%s3 + $0xa0] sm:$0xff]
  %v562 = vld [vmem:[%s3 + $0xa8] sm:$0xff]
  %v563 = vld [vmem:[%s3 + $0xb0] sm:$0xff]
  %v564 = vld [vmem:[%s3 + $0xb8] sm:$0xff]
  %v565 = vld [vmem:[%s3 + $0xc0] sm:$0xff]
  %v566 = vld [vmem:[%s3 + $0xc8] sm:$0xff]
  %v567 = vld [vmem:[%s3 + $0xd0] sm:$0xff]
  %v568 = vld [vmem:[%s3 + $0xd8] sm:$0xff]
  %v569 = vld [vmem:[%s3 + $0xe0] sm:$0xff]
  %v570 = vld [vmem:[%s3 + $0xe8] sm:$0xff]
  %v571 = vld [vmem:[%s3 + $0xf0] sm:$0xff]
  %v572 = vld [vmem:[%s3 + $0xf8] sm:$0xff]
  %s573 = scalar_lea.vmem %s3, 256
  %v574 = vld [vmem:[%s573] sm:$0xff]
  %v575 = vld [vmem:[%s573 + $0x8] sm:$0xff]
  %v576 = vld [vmem:[%s573 + $0x10] sm:$0xff]
  %v577 = vld [vmem:[%s573 + $0x18] sm:$0xff]
  %v578 = vld [vmem:[%s573 + $0x20] sm:$0xff]
  %v579 = vld [vmem:[%s573 + $0x28] sm:$0xff]
  %v580 = vld [vmem:[%s573 + $0x30] sm:$0xff]
  %v581 = vld [vmem:[%s573 + $0x38] sm:$0xff]
  %v582 = vld [vmem:[%s573 + $0x40] sm:$0xff]
  %v583 = vld [vmem:[%s573 + $0x48] sm:$0xff]
  %v584 = vld [vmem:[%s573 + $0x50] sm:$0xff]
  %v585 = vld [vmem:[%s573 + $0x58] sm:$0xff]
  %v586 = vld [vmem:[%s573 + $0x60] sm:$0xff]
  %v587 = vld [vmem:[%s573 + $0x68] sm:$0xff]
  %v588 = vld [vmem:[%s573 + $0x70] sm:$0xff]
  %v589 = vld [vmem:[%s573 + $0x78] sm:$0xff]
  %v590 = vld [vmem:[%s573 + $0x80] sm:$0xff]
  %v591 = vld [vmem:[%s573 + $0x88] sm:$0xff]
  %v592 = vld [vmem:[%s573 + $0x90] sm:$0xff]
  %v593 = vld [vmem:[%s573 + $0x98] sm:$0xff]
  %v594 = vld [vmem:[%s573 + $0xa0] sm:$0xff]
  %v595 = vld [vmem:[%s573 + $0xa8] sm:$0xff]
  %v596 = vld [vmem:[%s573 + $0xb0] sm:$0xff]
  %v597 = vld [vmem:[%s573 + $0xb8] sm:$0xff]
  %v598 = vld [vmem:[%s573 + $0xc0] sm:$0xff]
  %v599 = vld [vmem:[%s573 + $0xc8] sm:$0xff]
  %v600 = vld [vmem:[%s573 + $0xd0] sm:$0xff]
  %v601 = vld [vmem:[%s573 + $0xd8] sm:$0xff]
  %v602 = vld [vmem:[%s573 + $0xe0] sm:$0xff]
  %v603 = vld [vmem:[%s573 + $0xe8] sm:$0xff]
  %v604 = vld [vmem:[%s573 + $0xf0] sm:$0xff]
  %v605 = vld [vmem:[%s573 + $0xf8] sm:$0xff]
  %vm619 = vcmask 1046528
  %v620 = vrot.slane %v529, 1
  %v621 = vrot.slane %v530, 1
  %v622 = vsel %vm619, %v620, %v621
  %v623 = vrot.slane %v531, 1
  %v624 = vsel %vm619, %v621, %v623
  %v625 = vrot.slane %v532, 1
  %v626 = vsel %vm619, %v623, %v625
  %v627 = vrot.slane %v533, 1
  %v628 = vsel %vm619, %v625, %v627
  %v629 = vrot.slane %v534, 1
  %v630 = vsel %vm619, %v627, %v629
  %v631 = vrot.slane %v535, 1
  %v632 = vsel %vm619, %v629, %v631
  %v633 = vrot.slane %v536, 1
  %v634 = vsel %vm619, %v631, %v633
  %v635 = vrot.slane %v537, 1
  %v636 = vsel %vm619, %v633, %v635
  %v637 = vrot.slane %v538, 1
  %v638 = vsel %vm619, %v635, %v637
  %v639 = vrot.slane %v539, 1
  %v640 = vsel %vm619, %v637, %v639
  %v641 = vrot.slane %v540, 1
  %v642 = vsel %vm619, %v639, %v641
  %v643 = vrot.slane 0.0, 1
  %v644 = vsel %vm619, %v641, %v643
  %657 = vmatprep.subr.mxu0 %v575
  %658 = vmatpush1.msra.mxu0 %v574
  %659 = vmatprep.subr.mxu0 %v577
  %660 = vmatpush1.msra.mxu0 %v576
  %661 = vmatprep.subr.mxu0 %v579
  %662 = vmatpush1.msra.mxu0 %v578
  %663 = vmatprep.subr.mxu0 %v581
  %664 = vmatpush1.msra.mxu0 %v580
  %665 = vmatprep.subr.mxu0 %v583
  %666 = vmatpush1.msra.mxu0 %v582
  %667 = vmatprep.subr.mxu0 %v585
  %668 = vmatpush1.msra.mxu0 %v584
  %669 = vmatprep.subr.mxu0 %v587
  %670 = vmatpush1.msra.mxu0 %v586
  %671 = vmatprep.subr.mxu0 %v589
  %672 = vmatpush1.msra.mxu0 %v588
  %673 = vmatprep.subr.mxu0 %v591
  %674 = vmatpush1.msra.mxu0 %v590
  %675 = vmatprep.subr.mxu0 %v593
  %676 = vmatpush1.msra.mxu0 %v592
  %677 = vmatprep.subr.mxu0 %v595
  %678 = vmatpush1.msra.mxu0 %v594
  %679 = vmatprep.subr.mxu0 %v597
  %680 = vmatpush1.msra.mxu0 %v596
  %681 = vmatprep.subr.mxu0 %v599
  %682 = vmatpush1.msra.mxu0 %v598
  %683 = vmatprep.subr.mxu0 %v601
  %684 = vmatpush1.msra.mxu0 %v600
  %685 = vmatprep.subr.mxu0 %v603
  %686 = vmatpush1.msra.mxu0 %v602
  %687 = vmatprep.subr.mxu0 %v605
  %688 = vmatpush1.msra.mxu0 %v604
  %689 = vmatprep.subr.mxu0 0.0
  %690 = vmatpush1.msra.mxu0 0.0
  %691 = vmatprep.subr.mxu0 0.0
  %692 = vmatpush1.msra.mxu0 0.0
  %693 = vmatprep.subr.mxu0 0.0
  %694 = vmatpush1.msra.mxu0 0.0
  %695 = vmatprep.subr.mxu0 0.0
  %696 = vmatpush1.msra.mxu0 0.0
  %697 = vmatprep.subr.mxu0 0.0
  %698 = vmatpush1.msra.mxu0 0.0
  %699 = vmatprep.subr.mxu0 0.0
  %700 = vmatpush1.msra.mxu0 0.0
  %701 = vmatprep.subr.mxu0 0.0
  %702 = vmatpush1.msra.mxu0 0.0
  %703 = vmatprep.subr.mxu0 0.0
  %704 = vmatpush1.msra.mxu0 0.0
  %705 = vmatprep.subr.mxu0 0.0
  %706 = vmatpush1.msra.mxu0 0.0
  %707 = vmatprep.subr.mxu0 0.0
  %708 = vmatpush1.msra.mxu0 0.0
  %709 = vmatprep.subr.mxu0 0.0
  %710 = vmatpush1.msra.mxu0 0.0
  %711 = vmatprep.subr.mxu0 0.0
  %712 = vmatpush1.msra.mxu0 0.0
  %713 = vmatprep.subr.mxu0 0.0
  %714 = vmatpush1.msra.mxu0 0.0
  %715 = vmatprep.subr.mxu0 0.0
  %716 = vmatpush1.msra.mxu0 0.0
  %717 = vmatprep.subr.mxu0 0.0
  %718 = vmatpush1.msra.mxu0 0.0
  %719 = vmatprep.subr.mxu0 0.0
  %720 = vmatpush1.msra.mxu0 0.0
  %721 = vmatprep.mubr.f32.mxu0 0.0
  %722 = vmatmul.mubr.f32.gmra.mrb[0].mxu0 %v622
  %v723 = vpop.f32.mrb[0].mxu0
  %v724 = vadd.f32 0.0, %v723
  %v725 = vpop.f32.mrb[0].mxu0
  %v726 = vadd.f32 0.0, %v725
  %727 = vmatprep.mubr.f32.mxu0 0.0
  %728 = vmatmul.mubr.f32.gmra.mrb[0].mxu0 %v624
  %v729 = vpop.f32.mrb[0].mxu0
  %v730 = vadd.f32 0.0, %v729
  %v731 = vpop.f32.mrb[0].mxu0
  %v732 = vadd.f32 0.0, %v731
  %733 = vmatprep.mubr.f32.mxu0 0.0
  %734 = vmatmul.mubr.f32.gmra.mrb[0].mxu0 %v626
  %v735 = vpop.f32.mrb[0].mxu0
  %v736 = vadd.f32 0.0, %v735
  %v737 = vpop.f32.mrb[0].mxu0
  %v738 = vadd.f32 0.0, %v737
  %739 = vmatprep.mubr.f32.mxu0 0.0
  %740 = vmatmul.mubr.f32.gmra.mrb[0].mxu0 %v628
  %v741 = vpop.f32.mrb[0].mxu0
  %v742 = vadd.f32 0.0, %v741
  %v743 = vpop.f32.mrb[0].mxu0
  %v744 = vadd.f32 0.0, %v743
  %745 = vmatprep.mubr.f32.mxu0 0.0
  %746 = vmatmul.mubr.f32.gmra.mrb[0].mxu0 %v630
  %v747 = vpop.f32.mrb[0].mxu0
  %v748 = vadd.f32 0.0, %v747
  %v749 = vpop.f32.mrb[0].mxu0
  %v750 = vadd.f32 0.0, %v749
  %751 = vmatprep.mubr.f32.mxu0 0.0
  %752 = vmatmul.mubr.f32.gmra.mrb[0].mxu0 %v632
  %v753 = vpop.f32.mrb[0].mxu0
  %v754 = vadd.f32 0.0, %v753
  %v755 = vpop.f32.mrb[0].mxu0
  %v756 = vadd.f32 0.0, %v755
  %757 = vmatprep.mubr.f32.mxu0 0.0
  %758 = vmatmul.mubr.f32.gmra.mrb[0].mxu0 %v634
  %v759 = vpop.f32.mrb[0].mxu0
  %v760 = vadd.f32 0.0, %v759
  %v761 = vpop.f32.mrb[0].mxu0
  %v762 = vadd.f32 0.0, %v761
  %763 = vmatprep.mubr.f32.mxu0 0.0
  %764 = vmatmul.mubr.f32.gmra.mrb[0].mxu0 %v636
  %v765 = vpop.f32.mrb[0].mxu0
  %v766 = vadd.f32 0.0, %v765
  %v767 = vpop.f32.mrb[0].mxu0
  %v768 = vadd.f32 0.0, %v767
  %769 = vmatprep.mubr.f32.mxu0 0.0
  %770 = vmatmul.mubr.f32.gmra.mrb[0].mxu0 %v638
  %v771 = vpop.f32.mrb[0].mxu0
  %v772 = vadd.f32 0.0, %v771
  %v773 = vpop.f32.mrb[0].mxu0
  %v774 = vadd.f32 0.0, %v773
  %775 = vmatprep.mubr.f32.mxu0 0.0
  %776 = vmatmul.mubr.f32.gmra.mrb[0].mxu0 %v640
  %v777 = vpop.f32.mrb[0].mxu0
  %v778 = vadd.f32 0.0, %v777
  %v779 = vpop.f32.mrb[0].mxu0
  %v780 = vadd.f32 0.0, %v779
  %781 = vmatprep.mubr.f32.mxu0 0.0
  %782 = vmatmul.mubr.f32.gmra.mrb[0].mxu0 %v642
  %v783 = vpop.f32.mrb[0].mxu0
  %v784 = vadd.f32 0.0, %v783
  %v785 = vpop.f32.mrb[0].mxu0
  %v786 = vadd.f32 0.0, %v785
  %787 = vmatprep.mubr.f32.mxu0 0.0
  %788 = vmatmul.mubr.f32.gmra.mrb[0].mxu0 %v644
  %v789 = vpop.f32.mrb[0].mxu0
  %v790 = vadd.f32 0.0, %v789
  %v791 = vpop.f32.mrb[0].mxu0
  %v792 = vadd.f32 0.0, %v791
  %793 = vdwg.mxu0
  %794 = vmatprep.subr.mxu0 %v542
  %795 = vmatpush1.msra.mxu0 %v541
  %796 = vmatprep.subr.mxu0 %v544
  %797 = vmatpush1.msra.mxu0 %v543
  %798 = vmatprep.subr.mxu0 %v546
  %799 = vmatpush1.msra.mxu0 %v545
  %800 = vmatprep.subr.mxu0 %v548
  %801 = vmatpush1.msra.mxu0 %v547
  %802 = vmatprep.subr.mxu0 %v550
  %803 = vmatpush1.msra.mxu0 %v549
  %804 = vmatprep.subr.mxu0 %v552
  %805 = vmatpush1.msra.mxu0 %v551
  %806 = vmatprep.subr.mxu0 %v554
  %807 = vmatpush1.msra.mxu0 %v553
  %808 = vmatprep.subr.mxu0 %v556
  %809 = vmatpush1.msra.mxu0 %v555
  %810 = vmatprep.subr.mxu0 %v558
  %811 = vmatpush1.msra.mxu0 %v557
  %812 = vmatprep.subr.mxu0 %v560
  %813 = vmatpush1.msra.mxu0 %v559
  %814 = vmatprep.subr.mxu0 %v562
  %815 = vmatpush1.msra.mxu0 %v561
  %816 = vmatprep.subr.mxu0 %v564
  %817 = vmatpush1.msra.mxu0 %v563
  %818 = vmatprep.subr.mxu0 %v566
  %819 = vmatpush1.msra.mxu0 %v565
  %820 = vmatprep.subr.mxu0 %v568
  %821 = vmatpush1.msra.mxu0 %v567
  %822 = vmatprep.subr.mxu0 %v570
  %823 = vmatpush1.msra.mxu0 %v569
  %824 = vmatprep.subr.mxu0 %v572
  %825 = vmatpush1.msra.mxu0 %v571
  %826 = vmatprep.subr.mxu0 0.0
  %827 = vmatpush1.msra.mxu0 0.0
  %828 = vmatprep.subr.mxu0 0.0
  %829 = vmatpush1.msra.mxu0 0.0
  %830 = vmatprep.subr.mxu0 0.0
  %831 = vmatpush1.msra.mxu0 0.0
  %832 = vmatprep.subr.mxu0 0.0
  %833 = vmatpush1.msra.mxu0 0.0
  %834 = vmatprep.subr.mxu0 0.0
  %835 = vmatpush1.msra.mxu0 0.0
  %836 = vmatprep.subr.mxu0 0.0
  %837 = vmatpush1.msra.mxu0 0.0
  %838 = vmatprep.subr.mxu0 0.0
  %839 = vmatpush1.msra.mxu0 0.0
  %840 = vmatprep.subr.mxu0 0.0
  %841 = vmatpush1.msra.mxu0 0.0
  %842 = vmatprep.subr.mxu0 0.0
  %843 = vmatpush1.msra.mxu0 0.0
  %844 = vmatprep.subr.mxu0 0.0
  %845 = vmatpush1.msra.mxu0 0.0
  %846 = vmatprep.subr.mxu0 0.0
  %847 = vmatpush1.msra.mxu0 0.0
  %848 = vmatprep.subr.mxu0 0.0
  %849 = vmatpush1.msra.mxu0 0.0
  %850 = vmatprep.subr.mxu0 0.0
  %851 = vmatpush1.msra.mxu0 0.0
  %852 = vmatprep.subr.mxu0 0.0
  %853 = vmatpush1.msra.mxu0 0.0
  %854 = vmatprep.subr.mxu0 0.0
  %855 = vmatpush1.msra.mxu0 0.0
  %856 = vmatprep.subr.mxu0 0.0
  %857 = vmatpush1.msra.mxu0 0.0
  %858 = vmatprep.mubr.f32.mxu0 0.0
  %859 = vmatmul.mubr.f32.gmra.mrb[0].mxu0 %v529
  %v860 = vpop.f32.mrb[0].mxu0
  %v861 = vadd.f32 %v724, %v860
  %v862 = vpop.f32.mrb[0].mxu0
  %v863 = vadd.f32 %v726, %v862
  %864 = vmatprep.mubr.f32.mxu0 0.0
  %865 = vmatmul.mubr.f32.gmra.mrb[0].mxu0 %v530
  %v866 = vpop.f32.mrb[0].mxu0
  %v867 = vadd.f32 %v730, %v866
  %v868 = vpop.f32.mrb[0].mxu0
  %v869 = vadd.f32 %v732, %v868
  %870 = vmatprep.mubr.f32.mxu0 0.0
  %871 = vmatmul.mubr.f32.gmra.mrb[0].mxu0 %v531
  %v872 = vpop.f32.mrb[0].mxu0
  %v873 = vadd.f32 %v736, %v872
  %v874 = vpop.f32.mrb[0].mxu0
  %v875 = vadd.f32 %v738, %v874
  %876 = vmatprep.mubr.f32.mxu0 0.0
  %877 = vmatmul.mubr.f32.gmra.mrb[0].mxu0 %v532
  %v878 = vpop.f32.mrb[0].mxu0
  %v879 = vadd.f32 %v742, %v878
  %v880 = vpop.f32.mrb[0].mxu0
  %v881 = vadd.f32 %v744, %v880
  %882 = vmatprep.mubr.f32.mxu0 0.0
  %883 = vmatmul.mubr.f32.gmra.mrb[0].mxu0 %v533
  %v884 = vpop.f32.mrb[0].mxu0
  %v885 = vadd.f32 %v748, %v884
  %v886 = vpop.f32.mrb[0].mxu0
  %v887 = vadd.f32 %v750, %v886
  %888 = vmatprep.mubr.f32.mxu0 0.0
  %889 = vmatmul.mubr.f32.gmra.mrb[0].mxu0 %v534
  %v890 = vpop.f32.mrb[0].mxu0
  %v891 = vadd.f32 %v754, %v890
  %v892 = vpop.f32.mrb[0].mxu0
  %v893 = vadd.f32 %v756, %v892
  %894 = vmatprep.mubr.f32.mxu0 0.0
  %895 = vmatmul.mubr.f32.gmra.mrb[0].mxu0 %v535
  %v896 = vpop.f32.mrb[0].mxu0
  %v897 = vadd.f32 %v760, %v896
  %v898 = vpop.f32.mrb[0].mxu0
  %v899 = vadd.f32 %v762, %v898
  %900 = vmatprep.mubr.f32.mxu0 0.0
  %901 = vmatmul.mubr.f32.gmra.mrb[0].mxu0 %v536
  %v902 = vpop.f32.mrb[0].mxu0
  %v903 = vadd.f32 %v766, %v902
  %v904 = vpop.f32.mrb[0].mxu0
  %v905 = vadd.f32 %v768, %v904
  %906 = vmatprep.mubr.f32.mxu0 0.0
  %907 = vmatmul.mubr.f32.gmra.mrb[0].mxu0 %v537
  %v908 = vpop.f32.mrb[0].mxu0
  %v909 = vadd.f32 %v772, %v908
  %v910 = vpop.f32.mrb[0].mxu0
  %v911 = vadd.f32 %v774, %v910
  %912 = vmatprep.mubr.f32.mxu0 0.0
  %913 = vmatmul.mubr.f32.gmra.mrb[0].mxu0 %v538
  %v914 = vpop.f32.mrb[0].mxu0
  %v915 = vadd.f32 %v778, %v914
  %v916 = vpop.f32.mrb[0].mxu0
  %v917 = vadd.f32 %v780, %v916
  %918 = vmatprep.mubr.f32.mxu0 0.0
  %919 = vmatmul.mubr.f32.gmra.mrb[0].mxu0 %v539
  %v920 = vpop.f32.mrb[0].mxu0
  %v921 = vadd.f32 %v784, %v920
  %v922 = vpop.f32.mrb[0].mxu0
  %v923 = vadd.f32 %v786, %v922
  %924 = vmatprep.mubr.f32.mxu0 0.0
  %925 = vmatmul.mubr.f32.gmra.mrb[0].mxu0 %v540
  %v926 = vpop.f32.mrb[0].mxu0
  %v927 = vadd.f32 %v790, %v926
  %v928 = vpop.f32.mrb[0].mxu0
  %v929 = vadd.f32 %v792, %v928
  %930 = vdwg.mxu0
  %s931 = scalar_lea.vmem %s3, 512
  %v932 = vld [vmem:[%s931] sm:$0xff]
  %v933 = vld [vmem:[%s931 + $0x8] sm:$0xff]
  %v934 = vld [vmem:[%s931 + $0x10] sm:$0xff]
  %v935 = vld [vmem:[%s931 + $0x18] sm:$0xff]
  %v936 = vld [vmem:[%s931 + $0x20] sm:$0xff]
  %v937 = vld [vmem:[%s931 + $0x28] sm:$0xff]
  %v938 = vld [vmem:[%s931 + $0x30] sm:$0xff]
  %v939 = vld [vmem:[%s931 + $0x38] sm:$0xff]
  %v940 = vld [vmem:[%s931 + $0x40] sm:$0xff]
  %v941 = vld [vmem:[%s931 + $0x48] sm:$0xff]
  %v942 = vld [vmem:[%s931 + $0x50] sm:$0xff]
  %v943 = vld [vmem:[%s931 + $0x58] sm:$0xff]
  %v944 = vld [vmem:[%s931 + $0x60] sm:$0xff]
  %v945 = vld [vmem:[%s931 + $0x68] sm:$0xff]
  %v946 = vld [vmem:[%s931 + $0x70] sm:$0xff]
  %v947 = vld [vmem:[%s931 + $0x78] sm:$0xff]
  %v948 = vld [vmem:[%s931 + $0x80] sm:$0xff]
  %v949 = vld [vmem:[%s931 + $0x88] sm:$0xff]
  %v950 = vld [vmem:[%s931 + $0x90] sm:$0xff]
  %v951 = vld [vmem:[%s931 + $0x98] sm:$0xff]
  %v952 = vld [vmem:[%s931 + $0xa0] sm:$0xff]
  %v953 = vld [vmem:[%s931 + $0xa8] sm:$0xff]
  %v954 = vld [vmem:[%s931 + $0xb0] sm:$0xff]
  %v955 = vld [vmem:[%s931 + $0xb8] sm:$0xff]
  %v956 = vld [vmem:[%s931 + $0xc0] sm:$0xff]
  %v957 = vld [vmem:[%s931 + $0xc8] sm:$0xff]
  %v958 = vld [vmem:[%s931 + $0xd0] sm:$0xff]
  %v959 = vld [vmem:[%s931 + $0xd8] sm:$0xff]
  %v960 = vld [vmem:[%s931 + $0xe0] sm:$0xff]
  %v961 = vld [vmem:[%s931 + $0xe8] sm:$0xff]
  %v962 = vld [vmem:[%s931 + $0xf0] sm:$0xff]
  %v963 = vld [vmem:[%s931 + $0xf8] sm:$0xff]
  %vm964 = vcmask 1045504
  %v965 = vrot.slane %v529, 2
  %v966 = vrot.slane %v530, 2
  %v967 = vsel %vm964, %v965, %v966
  %v968 = vrot.slane %v531, 2
  %v969 = vsel %vm964, %v966, %v968
  %v970 = vrot.slane %v532, 2
  %v971 = vsel %vm964, %v968, %v970
  %v972 = vrot.slane %v533, 2
  %v973 = vsel %vm964, %v970, %v972
  %v974 = vrot.slane %v534, 2
  %v975 = vsel %vm964, %v972, %v974
  %v976 = vrot.slane %v535, 2
  %v977 = vsel %vm964, %v974, %v976
  %v978 = vrot.slane %v536, 2
  %v979 = vsel %vm964, %v976, %v978
  %v980 = vrot.slane %v537, 2
  %v981 = vsel %vm964, %v978, %v980
  %v982 = vrot.slane %v538, 2
  %v983 = vsel %vm964, %v980, %v982
  %v984 = vrot.slane %v539, 2
  %v985 = vsel %vm964, %v982, %v984
  %v986 = vrot.slane %v540, 2
  %v987 = vsel %vm964, %v984, %v986
  %v988 = vrot.slane 0.0, 2
  %v989 = vsel %vm964, %v986, %v988
  %1002 = vmatprep.subr.mxu0 %v933
  %1003 = vmatpush1.msra.mxu0 %v932
  %1004 = vmatprep.subr.mxu0 %v935
  %1005 = vmatpush1.msra.mxu0 %v934
  %1006 = vmatprep.subr.mxu0 %v937
  %1007 = vmatpush1.msra.mxu0 %v936
  %1008 = vmatprep.subr.mxu0 %v939
  %1009 = vmatpush1.msra.mxu0 %v938
  %1010 = vmatprep.subr.mxu0 %v941
  %1011 = vmatpush1.msra.mxu0 %v940
  %1012 = vmatprep.subr.mxu0 %v943
  %1013 = vmatpush1.msra.mxu0 %v942
  %1014 = vmatprep.subr.mxu0 %v945
  %1015 = vmatpush1.msra.mxu0 %v944
  %1016 = vmatprep.subr.mxu0 %v947
  %1017 = vmatpush1.msra.mxu0 %v946
  %1018 = vmatprep.subr.mxu0 %v949
  %1019 = vmatpush1.msra.mxu0 %v948
  %1020 = vmatprep.subr.mxu0 %v951
  %1021 = vmatpush1.msra.mxu0 %v950
  %1022 = vmatprep.subr.mxu0 %v953
  %1023 = vmatpush1.msra.mxu0 %v952
  %1024 = vmatprep.subr.mxu0 %v955
  %1025 = vmatpush1.msra.mxu0 %v954
  %1026 = vmatprep.subr.mxu0 %v957
  %1027 = vmatpush1.msra.mxu0 %v956
  %1028 = vmatprep.subr.mxu0 %v959
  %1029 = vmatpush1.msra.mxu0 %v958
  %1030 = vmatprep.subr.mxu0 %v961
  %1031 = vmatpush1.msra.mxu0 %v960
  %1032 = vmatprep.subr.mxu0 %v963
  %1033 = vmatpush1.msra.mxu0 %v962
  %1034 = vmatprep.subr.mxu0 0.0
  %1035 = vmatpush1.msra.mxu0 0.0
  %1036 = vmatprep.subr.mxu0 0.0
  %1037 = vmatpush1.msra.mxu0 0.0
  %1038 = vmatprep.subr.mxu0 0.0
  %1039 = vmatpush1.msra.mxu0 0.0
  %1040 = vmatprep.subr.mxu0 0.0
  %1041 = vmatpush1.msra.mxu0 0.0
  %1042 = vmatprep.subr.mxu0 0.0
  %1043 = vmatpush1.msra.mxu0 0.0
  %1044 = vmatprep.subr.mxu0 0.0
  %1045 = vmatpush1.msra.mxu0 0.0
  %1046 = vmatprep.subr.mxu0 0.0
  %1047 = vmatpush1.msra.mxu0 0.0
  %1048 = vmatprep.subr.mxu0 0.0
  %1049 = vmatpush1.msra.mxu0 0.0
  %1050 = vmatprep.subr.mxu0 0.0
  %1051 = vmatpush1.msra.mxu0 0.0
  %1052 = vmatprep.subr.mxu0 0.0
  %1053 = vmatpush1.msra.mxu0 0.0
  %1054 = vmatprep.subr.mxu0 0.0
  %1055 = vmatpush1.msra.mxu0 0.0
  %1056 = vmatprep.subr.mxu0 0.0
  %1057 = vmatpush1.msra.mxu0 0.0
  %1058 = vmatprep.subr.mxu0 0.0
  %1059 = vmatpush1.msra.mxu0 0.0
  %1060 = vmatprep.subr.mxu0 0.0
  %1061 = vmatpush1.msra.mxu0 0.0
  %1062 = vmatprep.subr.mxu0 0.0
  %1063 = vmatpush1.msra.mxu0 0.0
  %1064 = vmatprep.subr.mxu0 0.0
  %1065 = vmatpush1.msra.mxu0 0.0
  %1066 = vmatprep.mubr.f32.mxu0 0.0
  %1067 = vmatmul.mubr.f32.gmra.mrb[0].mxu0 %v967
  %v1068 = vpop.f32.mrb[0].mxu0
  %v1069 = vadd.f32 0.0, %v1068
  %v1070 = vpop.f32.mrb[0].mxu0
  %v1071 = vadd.f32 0.0, %v1070
  %1072 = vmatprep.mubr.f32.mxu0 0.0
  %1073 = vmatmul.mubr.f32.gmra.mrb[0].mxu0 %v969
  %v1074 = vpop.f32.mrb[0].mxu0
  %v1075 = vadd.f32 0.0, %v1074
  %v1076 = vpop.f32.mrb[0].mxu0
  %v1077 = vadd.f32 0.0, %v1076
  %1078 = vmatprep.mubr.f32.mxu0 0.0
  %1079 = vmatmul.mubr.f32.gmra.mrb[0].mxu0 %v971
  %v1080 = vpop.f32.mrb[0].mxu0
  %v1081 = vadd.f32 0.0, %v1080
  %v1082 = vpop.f32.mrb[0].mxu0
  %v1083 = vadd.f32 0.0, %v1082
  %1084 = vmatprep.mubr.f32.mxu0 0.0
  %1085 = vmatmul.mubr.f32.gmra.mrb[0].mxu0 %v973
  %v1086 = vpop.f32.mrb[0].mxu0
  %v1087 = vadd.f32 0.0, %v1086
  %v1088 = vpop.f32.mrb[0].mxu0
  %v1089 = vadd.f32 0.0, %v1088
  %1090 = vmatprep.mubr.f32.mxu0 0.0
  %1091 = vmatmul.mubr.f32.gmra.mrb[0].mxu0 %v975
  %v1092 = vpop.f32.mrb[0].mxu0
  %v1093 = vadd.f32 0.0, %v1092
  %v1094 = vpop.f32.mrb[0].mxu0
  %v1095 = vadd.f32 0.0, %v1094
  %1096 = vmatprep.mubr.f32.mxu0 0.0
  %1097 = vmatmul.mubr.f32.gmra.mrb[0].mxu0 %v977
  %v1098 = vpop.f32.mrb[0].mxu0
  %v1099 = vadd.f32 0.0, %v1098
  %v1100 = vpop.f32.mrb[0].mxu0
  %v1101 = vadd.f32 0.0, %v1100
  %1102 = vmatprep.mubr.f32.mxu0 0.0
  %1103 = vmatmul.mubr.f32.gmra.mrb[0].mxu0 %v979
  %v1104 = vpop.f32.mrb[0].mxu0
  %v1105 = vadd.f32 0.0, %v1104
  %v1106 = vpop.f32.mrb[0].mxu0
  %v1107 = vadd.f32 0.0, %v1106
  %1108 = vmatprep.mubr.f32.mxu0 0.0
  %1109 = vmatmul.mubr.f32.gmra.mrb[0].mxu0 %v981
  %v1110 = vpop.f32.mrb[0].mxu0
  %v1111 = vadd.f32 0.0, %v1110
  %v1112 = vpop.f32.mrb[0].mxu0
  %v1113 = vadd.f32 0.0, %v1112
  %1114 = vmatprep.mubr.f32.mxu0 0.0
  %1115 = vmatmul.mubr.f32.gmra.mrb[0].mxu0 %v983
  %v1116 = vpop.f32.mrb[0].mxu0
  %v1117 = vadd.f32 0.0, %v1116
  %v1118 = vpop.f32.mrb[0].mxu0
  %v1119 = vadd.f32 0.0, %v1118
  %1120 = vmatprep.mubr.f32.mxu0 0.0
  %1121 = vmatmul.mubr.f32.gmra.mrb[0].mxu0 %v985
  %v1122 = vpop.f32.mrb[0].mxu0
  %v1123 = vadd.f32 0.0, %v1122
  %v1124 = vpop.f32.mrb[0].mxu0
  %v1125 = vadd.f32 0.0, %v1124
  %1126 = vmatprep.mubr.f32.mxu0 0.0
  %1127 = vmatmul.mubr.f32.gmra.mrb[0].mxu0 %v987
  %v1128 = vpop.f32.mrb[0].mxu0
  %v1129 = vadd.f32 0.0, %v1128
  %v1130 = vpop.f32.mrb[0].mxu0
  %v1131 = vadd.f32 0.0, %v1130
  %1132 = vmatprep.mubr.f32.mxu0 0.0
  %1133 = vmatmul.mubr.f32.gmra.mrb[0].mxu0 %v989
  %v1134 = vpop.f32.mrb[0].mxu0
  %v1135 = vadd.f32 0.0, %v1134
  %v1136 = vpop.f32.mrb[0].mxu0
  %v1137 = vadd.f32 0.0, %v1136
  %1138 = vdwg.mxu0
  %v1139 = vadd.f32 %v861, %v1069
  %v1140 = vadd.f32 %v863, %v1071
  %v1141 = vadd.f32 %v867, %v1075
  %v1142 = vadd.f32 %v869, %v1077
  %v1143 = vadd.f32 %v873, %v1081
  %v1144 = vadd.f32 %v875, %v1083
  %v1145 = vadd.f32 %v879, %v1087
  %v1146 = vadd.f32 %v881, %v1089
  %v1147 = vadd.f32 %v885, %v1093
  %v1148 = vadd.f32 %v887, %v1095
  %v1149 = vadd.f32 %v891, %v1099
  %v1150 = vadd.f32 %v893, %v1101
  %v1151 = vadd.f32 %v897, %v1105
  %v1152 = vadd.f32 %v899, %v1107
  %v1153 = vadd.f32 %v903, %v1111
  %v1154 = vadd.f32 %v905, %v1113
  %v1155 = vadd.f32 %v909, %v1117
  %v1156 = vadd.f32 %v911, %v1119
  %v1157 = vadd.f32 %v915, %v1123
  %v1158 = vadd.f32 %v917, %v1125
  %v1159 = vadd.f32 %v921, %v1129
  %v1160 = vadd.f32 %v923, %v1131
  %v1161 = vadd.f32 %v927, %v1135
  %v1162 = vadd.f32 %v929, %v1137
  %s1163 = scalar_lea.vmem %s3, 768
  %v1164 = vld [vmem:[%s1163] sm:$0xff]
  %v1165 = vld [vmem:[%s1163 + $0x8] sm:$0xff]
  %v1166 = vld [vmem:[%s1163 + $0x10] sm:$0xff]
  %v1167 = vld [vmem:[%s1163 + $0x18] sm:$0xff]
  %v1168 = vld [vmem:[%s1163 + $0x20] sm:$0xff]
  %v1169 = vld [vmem:[%s1163 + $0x28] sm:$0xff]
  %v1170 = vld [vmem:[%s1163 + $0x30] sm:$0xff]
  %v1171 = vld [vmem:[%s1163 + $0x38] sm:$0xff]
  %v1172 = vld [vmem:[%s1163 + $0x40] sm:$0xff]
  %v1173 = vld [vmem:[%s1163 + $0x48] sm:$0xff]
  %v1174 = vld [vmem:[%s1163 + $0x50] sm:$0xff]
  %v1175 = vld [vmem:[%s1163 + $0x58] sm:$0xff]
  %v1176 = vld [vmem:[%s1163 + $0x60] sm:$0xff]
  %v1177 = vld [vmem:[%s1163 + $0x68] sm:$0xff]
  %v1178 = vld [vmem:[%s1163 + $0x70] sm:$0xff]
  %v1179 = vld [vmem:[%s1163 + $0x78] sm:$0xff]
  %v1180 = vld [vmem:[%s1163 + $0x80] sm:$0xff]
  %v1181 = vld [vmem:[%s1163 + $0x88] sm:$0xff]
  %v1182 = vld [vmem:[%s1163 + $0x90] sm:$0xff]
  %v1183 = vld [vmem:[%s1163 + $0x98] sm:$0xff]
  %v1184 = vld [vmem:[%s1163 + $0xa0] sm:$0xff]
  %v1185 = vld [vmem:[%s1163 + $0xa8] sm:$0xff]
  %v1186 = vld [vmem:[%s1163 + $0xb0] sm:$0xff]
  %v1187 = vld [vmem:[%s1163 + $0xb8] sm:$0xff]
  %v1188 = vld [vmem:[%s1163 + $0xc0] sm:$0xff]
  %v1189 = vld [vmem:[%s1163 + $0xc8] sm:$0xff]
  %v1190 = vld [vmem:[%s1163 + $0xd0] sm:$0xff]
  %v1191 = vld [vmem:[%s1163 + $0xd8] sm:$0xff]
  %v1192 = vld [vmem:[%s1163 + $0xe0] sm:$0xff]
  %v1193 = vld [vmem:[%s1163 + $0xe8] sm:$0xff]
  %v1194 = vld [vmem:[%s1163 + $0xf0] sm:$0xff]
  %v1195 = vld [vmem:[%s1163 + $0xf8] sm:$0xff]
  %vm1196 = vcmask 1044480
  %v1197 = vrot.slane %v529, 3
  %v1198 = vrot.slane %v530, 3
  %v1199 = vsel %vm1196, %v1197, %v1198
  %v1200 = vrot.slane %v531, 3
  %v1201 = vsel %vm1196, %v1198, %v1200
  %v1202 = vrot.slane %v532, 3
  %v1203 = vsel %vm1196, %v1200, %v1202
  %v1204 = vrot.slane %v533, 3
  %v1205 = vsel %vm1196, %v1202, %v1204
  %v1206 = vrot.slane %v534, 3
  %v1207 = vsel %vm1196, %v1204, %v1206
  %v1208 = vrot.slane %v535, 3
  %v1209 = vsel %vm1196, %v1206, %v1208
  %v1210 = vrot.slane %v536, 3
  %v1211 = vsel %vm1196, %v1208, %v1210
  %v1212 = vrot.slane %v537, 3
  %v1213 = vsel %vm1196, %v1210, %v1212
  %v1214 = vrot.slane %v538, 3
  %v1215 = vsel %vm1196, %v1212, %v1214
  %v1216 = vrot.slane %v539, 3
  %v1217 = vsel %vm1196, %v1214, %v1216
  %v1218 = vrot.slane %v540, 3
  %v1219 = vsel %vm1196, %v1216, %v1218
  %v1220 = vrot.slane 0.0, 3
  %v1221 = vsel %vm1196, %v1218, %v1220
  %1234 = vmatprep.subr.mxu0 %v1165
  %1235 = vmatpush1.msra.mxu0 %v1164
  %1236 = vmatprep.subr.mxu0 %v1167
  %1237 = vmatpush1.msra.mxu0 %v1166
  %1238 = vmatprep.subr.mxu0 %v1169
  %1239 = vmatpush1.msra.mxu0 %v1168
  %1240 = vmatprep.subr.mxu0 %v1171
  %1241 = vmatpush1.msra.mxu0 %v1170
  %1242 = vmatprep.subr.mxu0 %v1173
  %1243 = vmatpush1.msra.mxu0 %v1172
  %1244 = vmatprep.subr.mxu0 %v1175
  %1245 = vmatpush1.msra.mxu0 %v1174
  %1246 = vmatprep.subr.mxu0 %v1177
  %1247 = vmatpush1.msra.mxu0 %v1176
  %1248 = vmatprep.subr.mxu0 %v1179
  %1249 = vmatpush1.msra.mxu0 %v1178
  %1250 = vmatprep.subr.mxu0 %v1181
  %1251 = vmatpush1.msra.mxu0 %v1180
  %1252 = vmatprep.subr.mxu0 %v1183
  %1253 = vmatpush1.msra.mxu0 %v1182
  %1254 = vmatprep.subr.mxu0 %v1185
  %1255 = vmatpush1.msra.mxu0 %v1184
  %1256 = vmatprep.subr.mxu0 %v1187
  %1257 = vmatpush1.msra.mxu0 %v1186
  %1258 = vmatprep.subr.mxu0 %v1189
  %1259 = vmatpush1.msra.mxu0 %v1188
  %1260 = vmatprep.subr.mxu0 %v1191
  %1261 = vmatpush1.msra.mxu0 %v1190
  %1262 = vmatprep.subr.mxu0 %v1193
  %1263 = vmatpush1.msra.mxu0 %v1192
  %1264 = vmatprep.subr.mxu0 %v1195
  %1265 = vmatpush1.msra.mxu0 %v1194
  %1266 = vmatprep.subr.mxu0 0.0
  %1267 = vmatpush1.msra.mxu0 0.0
  %1268 = vmatprep.subr.mxu0 0.0
  %1269 = vmatpush1.msra.mxu0 0.0
  %1270 = vmatprep.subr.mxu0 0.0
  %1271 = vmatpush1.msra.mxu0 0.0
  %1272 = vmatprep.subr.mxu0 0.0
  %1273 = vmatpush1.msra.mxu0 0.0
  %1274 = vmatprep.subr.mxu0 0.0
  %1275 = vmatpush1.msra.mxu0 0.0
  %1276 = vmatprep.subr.mxu0 0.0
  %1277 = vmatpush1.msra.mxu0 0.0
  %1278 = vmatprep.subr.mxu0 0.0
  %1279 = vmatpush1.msra.mxu0 0.0
  %1280 = vmatprep.subr.mxu0 0.0
  %1281 = vmatpush1.msra.mxu0 0.0
  %1282 = vmatprep.subr.mxu0 0.0
  %1283 = vmatpush1.msra.mxu0 0.0
  %1284 = vmatprep.subr.mxu0 0.0
  %1285 = vmatpush1.msra.mxu0 0.0
  %1286 = vmatprep.subr.mxu0 0.0
  %1287 = vmatpush1.msra.mxu0 0.0
  %1288 = vmatprep.subr.mxu0 0.0
  %1289 = vmatpush1.msra.mxu0 0.0
  %1290 = vmatprep.subr.mxu0 0.0
  %1291 = vmatpush1.msra.mxu0 0.0
  %1292 = vmatprep.subr.mxu0 0.0
  %1293 = vmatpush1.msra.mxu0 0.0
  %1294 = vmatprep.subr.mxu0 0.0
  %1295 = vmatpush1.msra.mxu0 0.0
  %1296 = vmatprep.subr.mxu0 0.0
  %1297 = vmatpush1.msra.mxu0 0.0
  %1298 = vmatprep.mubr.f32.mxu0 0.0
  %1299 = vmatmul.mubr.f32.gmra.mrb[0].mxu0 %v1199
  %v1300 = vpop.f32.mrb[0].mxu0
  %v1301 = vadd.f32 0.0, %v1300
  %v1302 = vpop.f32.mrb[0].mxu0
  %v1303 = vadd.f32 0.0, %v1302
  %1304 = vmatprep.mubr.f32.mxu0 0.0
  %1305 = vmatmul.mubr.f32.gmra.mrb[0].mxu0 %v1201
  %v1306 = vpop.f32.mrb[0].mxu0
  %v1307 = vadd.f32 0.0, %v1306
  %v1308 = vpop.f32.mrb[0].mxu0
  %v1309 = vadd.f32 0.0, %v1308
  %1310 = vmatprep.mubr.f32.mxu0 0.0
  %1311 = vmatmul.mubr.f32.gmra.mrb[0].mxu0 %v1203
  %v1312 = vpop.f32.mrb[0].mxu0
  %v1313 = vadd.f32 0.0, %v1312
  %v1314 = vpop.f32.mrb[0].mxu0
  %v1315 = vadd.f32 0.0, %v1314
  %1316 = vmatprep.mubr.f32.mxu0 0.0
  %1317 = vmatmul.mubr.f32.gmra.mrb[0].mxu0 %v1205
  %v1318 = vpop.f32.mrb[0].mxu0
  %v1319 = vadd.f32 0.0, %v1318
  %v1320 = vpop.f32.mrb[0].mxu0
  %v1321 = vadd.f32 0.0, %v1320
  %1322 = vmatprep.mubr.f32.mxu0 0.0
  %1323 = vmatmul.mubr.f32.gmra.mrb[0].mxu0 %v1207
  %v1324 = vpop.f32.mrb[0].mxu0
  %v1325 = vadd.f32 0.0, %v1324
  %v1326 = vpop.f32.mrb[0].mxu0
  %v1327 = vadd.f32 0.0, %v1326
  %1328 = vmatprep.mubr.f32.mxu0 0.0
  %1329 = vmatmul.mubr.f32.gmra.mrb[0].mxu0 %v1209
  %v1330 = vpop.f32.mrb[0].mxu0
  %v1331 = vadd.f32 0.0, %v1330
  %v1332 = vpop.f32.mrb[0].mxu0
  %v1333 = vadd.f32 0.0, %v1332
  %1334 = vmatprep.mubr.f32.mxu0 0.0
  %1335 = vmatmul.mubr.f32.gmra.mrb[0].mxu0 %v1211
  %v1336 = vpop.f32.mrb[0].mxu0
  %v1337 = vadd.f32 0.0, %v1336
  %v1338 = vpop.f32.mrb[0].mxu0
  %v1339 = vadd.f32 0.0, %v1338
  %1340 = vmatprep.mubr.f32.mxu0 0.0
  %1341 = vmatmul.mubr.f32.gmra.mrb[0].mxu0 %v1213
  %v1342 = vpop.f32.mrb[0].mxu0
  %v1343 = vadd.f32 0.0, %v1342
  %v1344 = vpop.f32.mrb[0].mxu0
  %v1345 = vadd.f32 0.0, %v1344
  %1346 = vmatprep.mubr.f32.mxu0 0.0
  %1347 = vmatmul.mubr.f32.gmra.mrb[0].mxu0 %v1215
  %v1348 = vpop.f32.mrb[0].mxu0
  %v1349 = vadd.f32 0.0, %v1348
  %v1350 = vpop.f32.mrb[0].mxu0
  %v1351 = vadd.f32 0.0, %v1350
  %1352 = vmatprep.mubr.f32.mxu0 0.0
  %1353 = vmatmul.mubr.f32.gmra.mrb[0].mxu0 %v1217
  %v1354 = vpop.f32.mrb[0].mxu0
  %v1355 = vadd.f32 0.0, %v1354
  %v1356 = vpop.f32.mrb[0].mxu0
  %v1357 = vadd.f32 0.0, %v1356
  %1358 = vmatprep.mubr.f32.mxu0 0.0
  %1359 = vmatmul.mubr.f32.gmra.mrb[0].mxu0 %v1219
  %v1360 = vpop.f32.mrb[0].mxu0
  %v1361 = vadd.f32 0.0, %v1360
  %v1362 = vpop.f32.mrb[0].mxu0
  %v1363 = vadd.f32 0.0, %v1362
  %1364 = vmatprep.mubr.f32.mxu0 0.0
  %1365 = vmatmul.mubr.f32.gmra.mrb[0].mxu0 %v1221
  %v1366 = vpop.f32.mrb[0].mxu0
  %v1367 = vadd.f32 0.0, %v1366
  %v1368 = vpop.f32.mrb[0].mxu0
  %v1369 = vadd.f32 0.0, %v1368
  %1370 = vdwg.mxu0
  %v1371 = vadd.f32 %v1139, %v1301
  %v1372 = vadd.f32 %v1140, %v1303
  %v1373 = vadd.f32 %v1141, %v1307
  %v1374 = vadd.f32 %v1142, %v1309
  %v1375 = vadd.f32 %v1143, %v1313
  %v1376 = vadd.f32 %v1144, %v1315
  %v1377 = vadd.f32 %v1145, %v1319
  %v1378 = vadd.f32 %v1146, %v1321
  %v1379 = vadd.f32 %v1147, %v1325
  %v1380 = vadd.f32 %v1148, %v1327
  %v1381 = vadd.f32 %v1149, %v1331
  %v1382 = vadd.f32 %v1150, %v1333
  %v1383 = vadd.f32 %v1151, %v1337
  %v1384 = vadd.f32 %v1152, %v1339
  %v1385 = vadd.f32 %v1153, %v1343
  %v1386 = vadd.f32 %v1154, %v1345
  %v1387 = vadd.f32 %v1155, %v1349
  %v1388 = vadd.f32 %v1156, %v1351
  %v1389 = vadd.f32 %v1157, %v1355
  %v1390 = vadd.f32 %v1158, %v1357
  %v1391 = vadd.f32 %v1159, %v1361
  %v1392 = vadd.f32 %v1160, %v1363
  %v1393 = vadd.f32 %v1161, %v1367
  %v1394 = vadd.f32 %v1162, %v1369
  %s1395 = scalar_lea.vmem %s3, 1024
  %v1396 = vld [vmem:[%s1395] sm:$0xff]
  %v1397 = vld [vmem:[%s1395 + $0x8] sm:$0xff]
  %v1398 = vld [vmem:[%s1395 + $0x10] sm:$0xff]
  %v1399 = vld [vmem:[%s1395 + $0x18] sm:$0xff]
  %v1400 = vld [vmem:[%s1395 + $0x20] sm:$0xff]
  %v1401 = vld [vmem:[%s1395 + $0x28] sm:$0xff]
  %v1402 = vld [vmem:[%s1395 + $0x30] sm:$0xff]
  %v1403 = vld [vmem:[%s1395 + $0x38] sm:$0xff]
  %v1404 = vld [vmem:[%s1395 + $0x40] sm:$0xff]
  %v1405 = vld [vmem:[%s1395 + $0x48] sm:$0xff]
  %v1406 = vld [vmem:[%s1395 + $0x50] sm:$0xff]
  %v1407 = vld [vmem:[%s1395 + $0x58] sm:$0xff]
  %v1408 = vld [vmem:[%s1395 + $0x60] sm:$0xff]
  %v1409 = vld [vmem:[%s1395 + $0x68] sm:$0xff]
  %v1410 = vld [vmem:[%s1395 + $0x70] sm:$0xff]
  %v1411 = vld [vmem:[%s1395 + $0x78] sm:$0xff]
  %v1412 = vld [vmem:[%s1395 + $0x80] sm:$0xff]
  %v1413 = vld [vmem:[%s1395 + $0x88] sm:$0xff]
  %v1414 = vld [vmem:[%s1395 + $0x90] sm:$0xff]
  %v1415 = vld [vmem:[%s1395 + $0x98] sm:$0xff]
  %v1416 = vld [vmem:[%s1395 + $0xa0] sm:$0xff]
  %v1417 = vld [vmem:[%s1395 + $0xa8] sm:$0xff]
  %v1418 = vld [vmem:[%s1395 + $0xb0] sm:$0xff]
  %v1419 = vld [vmem:[%s1395 + $0xb8] sm:$0xff]
  %v1420 = vld [vmem:[%s1395 + $0xc0] sm:$0xff]
  %v1421 = vld [vmem:[%s1395 + $0xc8] sm:$0xff]
  %v1422 = vld [vmem:[%s1395 + $0xd0] sm:$0xff]
  %v1423 = vld [vmem:[%s1395 + $0xd8] sm:$0xff]
  %v1424 = vld [vmem:[%s1395 + $0xe0] sm:$0xff]
  %v1425 = vld [vmem:[%s1395 + $0xe8] sm:$0xff]
  %v1426 = vld [vmem:[%s1395 + $0xf0] sm:$0xff]
  %v1427 = vld [vmem:[%s1395 + $0xf8] sm:$0xff]
  %v1428 = vrot.slane %v529, 4
  %v1429 = vrot.slane %v530, 4
  %v1430 = vsel %vm132, %v1428, %v1429
  %v1431 = vrot.slane %v531, 4
  %v1432 = vsel %vm132, %v1429, %v1431
  %v1433 = vrot.slane %v532, 4
  %v1434 = vsel %vm132, %v1431, %v1433
  %v1435 = vrot.slane %v533, 4
  %v1436 = vsel %vm132, %v1433, %v1435
  %v1437 = vrot.slane %v534, 4
  %v1438 = vsel %vm132, %v1435, %v1437
  %v1439 = vrot.slane %v535, 4
  %v1440 = vsel %vm132, %v1437, %v1439
  %v1441 = vrot.slane %v536, 4
  %v1442 = vsel %vm132, %v1439, %v1441
  %v1443 = vrot.slane %v537, 4
  %v1444 = vsel %vm132, %v1441, %v1443
  %v1445 = vrot.slane %v538, 4
  %v1446 = vsel %vm132, %v1443, %v1445
  %v1447 = vrot.slane %v539, 4
  %v1448 = vsel %vm132, %v1445, %v1447
  %v1449 = vrot.slane %v540, 4
  %v1450 = vsel %vm132, %v1447, %v1449
  %v1451 = vrot.slane 0.0, 4
  %v1452 = vsel %vm132, %v1449, %v1451
  %1465 = vmatprep.subr.mxu0 %v1397
  %1466 = vmatpush1.msra.mxu0 %v1396
  %1467 = vmatprep.subr.mxu0 %v1399
  %1468 = vmatpush1.msra.mxu0 %v1398
  %1469 = vmatprep.subr.mxu0 %v1401
  %1470 = vmatpush1.msra.mxu0 %v1400
  %1471 = vmatprep.subr.mxu0 %v1403
  %1472 = vmatpush1.msra.mxu0 %v1402
  %1473 = vmatprep.subr.mxu0 %v1405
  %1474 = vmatpush1.msra.mxu0 %v1404
  %1475 = vmatprep.subr.mxu0 %v1407
  %1476 = vmatpush1.msra.mxu0 %v1406
  %1477 = vmatprep.subr.mxu0 %v1409
  %1478 = vmatpush1.msra.mxu0 %v1408
  %1479 = vmatprep.subr.mxu0 %v1411
  %1480 = vmatpush1.msra.mxu0 %v1410
  %1481 = vmatprep.subr.mxu0 %v1413
  %1482 = vmatpush1.msra.mxu0 %v1412
  %1483 = vmatprep.subr.mxu0 %v1415
  %1484 = vmatpush1.msra.mxu0 %v1414
  %1485 = vmatprep.subr.mxu0 %v1417
  %1486 = vmatpush1.msra.mxu0 %v1416
  %1487 = vmatprep.subr.mxu0 %v1419
  %1488 = vmatpush1.msra.mxu0 %v1418
  %1489 = vmatprep.subr.mxu0 %v1421
  %1490 = vmatpush1.msra.mxu0 %v1420
  %1491 = vmatprep.subr.mxu0 %v1423
  %1492 = vmatpush1.msra.mxu0 %v1422
  %1493 = vmatprep.subr.mxu0 %v1425
  %1494 = vmatpush1.msra.mxu0 %v1424
  %1495 = vmatprep.subr.mxu0 %v1427
  %1496 = vmatpush1.msra.mxu0 %v1426
  %1497 = vmatprep.subr.mxu0 0.0
  %1498 = vmatpush1.msra.mxu0 0.0
  %1499 = vmatprep.subr.mxu0 0.0
  %1500 = vmatpush1.msra.mxu0 0.0
  %1501 = vmatprep.subr.mxu0 0.0
  %1502 = vmatpush1.msra.mxu0 0.0
  %1503 = vmatprep.subr.mxu0 0.0
  %1504 = vmatpush1.msra.mxu0 0.0
  %1505 = vmatprep.subr.mxu0 0.0
  %1506 = vmatpush1.msra.mxu0 0.0
  %1507 = vmatprep.subr.mxu0 0.0
  %1508 = vmatpush1.msra.mxu0 0.0
  %1509 = vmatprep.subr.mxu0 0.0
  %1510 = vmatpush1.msra.mxu0 0.0
  %1511 = vmatprep.subr.mxu0 0.0
  %1512 = vmatpush1.msra.mxu0 0.0
  %1513 = vmatprep.subr.mxu0 0.0
  %1514 = vmatpush1.msra.mxu0 0.0
  %1515 = vmatprep.subr.mxu0 0.0
  %1516 = vmatpush1.msra.mxu0 0.0
  %1517 = vmatprep.subr.mxu0 0.0
  %1518 = vmatpush1.msra.mxu0 0.0
  %1519 = vmatprep.subr.mxu0 0.0
  %1520 = vmatpush1.msra.mxu0 0.0
  %1521 = vmatprep.subr.mxu0 0.0
  %1522 = vmatpush1.msra.mxu0 0.0
  %1523 = vmatprep.subr.mxu0 0.0
  %1524 = vmatpush1.msra.mxu0 0.0
  %1525 = vmatprep.subr.mxu0 0.0
  %1526 = vmatpush1.msra.mxu0 0.0
  %1527 = vmatprep.subr.mxu0 0.0
  %1528 = vmatpush1.msra.mxu0 0.0
  %1529 = vmatprep.mubr.f32.mxu0 0.0
  %1530 = vmatmul.mubr.f32.gmra.mrb[0].mxu0 %v1430
  %v1531 = vpop.f32.mrb[0].mxu0
  %v1532 = vadd.f32 0.0, %v1531
  %v1533 = vpop.f32.mrb[0].mxu0
  %v1534 = vadd.f32 0.0, %v1533
  %1535 = vmatprep.mubr.f32.mxu0 0.0
  %1536 = vmatmul.mubr.f32.gmra.mrb[0].mxu0 %v1432
  %v1537 = vpop.f32.mrb[0].mxu0
  %v1538 = vadd.f32 0.0, %v1537
  %v1539 = vpop.f32.mrb[0].mxu0
  %v1540 = vadd.f32 0.0, %v1539
  %1541 = vmatprep.mubr.f32.mxu0 0.0
  %1542 = vmatmul.mubr.f32.gmra.mrb[0].mxu0 %v1434
  %v1543 = vpop.f32.mrb[0].mxu0
  %v1544 = vadd.f32 0.0, %v1543
  %v1545 = vpop.f32.mrb[0].mxu0
  %v1546 = vadd.f32 0.0, %v1545
  %1547 = vmatprep.mubr.f32.mxu0 0.0
  %1548 = vmatmul.mubr.f32.gmra.mrb[0].mxu0 %v1436
  %v1549 = vpop.f32.mrb[0].mxu0
  %v1550 = vadd.f32 0.0, %v1549
  %v1551 = vpop.f32.mrb[0].mxu0
  %v1552 = vadd.f32 0.0, %v1551
  %1553 = vmatprep.mubr.f32.mxu0 0.0
  %1554 = vmatmul.mubr.f32.gmra.mrb[0].mxu0 %v1438
  %v1555 = vpop.f32.mrb[0].mxu0
  %v1556 = vadd.f32 0.0, %v1555
  %v1557 = vpop.f32.mrb[0].mxu0
  %v1558 = vadd.f32 0.0, %v1557
  %1559 = vmatprep.mubr.f32.mxu0 0.0
  %1560 = vmatmul.mubr.f32.gmra.mrb[0].mxu0 %v1440
  %v1561 = vpop.f32.mrb[0].mxu0
  %v1562 = vadd.f32 0.0, %v1561
  %v1563 = vpop.f32.mrb[0].mxu0
  %v1564 = vadd.f32 0.0, %v1563
  %1565 = vmatprep.mubr.f32.mxu0 0.0
  %1566 = vmatmul.mubr.f32.gmra.mrb[0].mxu0 %v1442
  %v1567 = vpop.f32.mrb[0].mxu0
  %v1568 = vadd.f32 0.0, %v1567
  %v1569 = vpop.f32.mrb[0].mxu0
  %v1570 = vadd.f32 0.0, %v1569
  %1571 = vmatprep.mubr.f32.mxu0 0.0
  %1572 = vmatmul.mubr.f32.gmra.mrb[0].mxu0 %v1444
  %v1573 = vpop.f32.mrb[0].mxu0
  %v1574 = vadd.f32 0.0, %v1573
  %v1575 = vpop.f32.mrb[0].mxu0
  %v1576 = vadd.f32 0.0, %v1575
  %1577 = vmatprep.mubr.f32.mxu0 0.0
  %1578 = vmatmul.mubr.f32.gmra.mrb[0].mxu0 %v1446
  %v1579 = vpop.f32.mrb[0].mxu0
  %v1580 = vadd.f32 0.0, %v1579
  %v1581 = vpop.f32.mrb[0].mxu0
  %v1582 = vadd.f32 0.0, %v1581
  %1583 = vmatprep.mubr.f32.mxu0 0.0
  %1584 = vmatmul.mubr.f32.gmra.mrb[0].mxu0 %v1448
  %v1585 = vpop.f32.mrb[0].mxu0
  %v1586 = vadd.f32 0.0, %v1585
  %v1587 = vpop.f32.mrb[0].mxu0
  %v1588 = vadd.f32 0.0, %v1587
  %1589 = vmatprep.mubr.f32.mxu0 0.0
  %1590 = vmatmul.mubr.f32.gmra.mrb[0].mxu0 %v1450
  %v1591 = vpop.f32.mrb[0].mxu0
  %v1592 = vadd.f32 0.0, %v1591
  %v1593 = vpop.f32.mrb[0].mxu0
  %v1594 = vadd.f32 0.0, %v1593
  %1595 = vmatprep.mubr.f32.mxu0 0.0
  %1596 = vmatmul.mubr.f32.gmra.mrb[0].mxu0 %v1452
  %v1597 = vpop.f32.mrb[0].mxu0
  %v1598 = vadd.f32 0.0, %v1597
  %v1599 = vpop.f32.mrb[0].mxu0
  %v1600 = vadd.f32 0.0, %v1599
  %1601 = vdwg.mxu0
  %v1602 = vadd.f32 %v1371, %v1532
  %v1603 = vadd.f32 %v1372, %v1534
  %v1604 = vadd.f32 %v1373, %v1538
  %v1605 = vadd.f32 %v1374, %v1540
  %v1606 = vadd.f32 %v1375, %v1544
  %v1607 = vadd.f32 %v1376, %v1546
  %v1608 = vadd.f32 %v1377, %v1550
  %v1609 = vadd.f32 %v1378, %v1552
  %v1610 = vadd.f32 %v1379, %v1556
  %v1611 = vadd.f32 %v1380, %v1558
  %v1612 = vadd.f32 %v1381, %v1562
  %v1613 = vadd.f32 %v1382, %v1564
  %v1614 = vadd.f32 %v1383, %v1568
  %v1615 = vadd.f32 %v1384, %v1570
  %v1616 = vadd.f32 %v1385, %v1574
  %v1617 = vadd.f32 %v1386, %v1576
  %v1618 = vadd.f32 %v1387, %v1580
  %v1619 = vadd.f32 %v1388, %v1582
  %v1620 = vadd.f32 %v1389, %v1586
  %v1621 = vadd.f32 %v1390, %v1588
  %v1622 = vadd.f32 %v1391, %v1592
  %v1623 = vadd.f32 %v1392, %v1594
  %v1624 = vadd.f32 %v1393, %v1598
  %v1625 = vadd.f32 %v1394, %v1600
  %1626 = vmatprep.subr.mxu0 %v575
  %1627 = vmatpush1.msra.mxu0 %v574
  %1628 = vmatprep.subr.mxu0 %v577
  %1629 = vmatpush1.msra.mxu0 %v576
  %1630 = vmatprep.subr.mxu0 %v579
  %1631 = vmatpush1.msra.mxu0 %v578
  %1632 = vmatprep.subr.mxu0 %v581
  %1633 = vmatpush1.msra.mxu0 %v580
  %1634 = vmatprep.subr.mxu0 %v583
  %1635 = vmatpush1.msra.mxu0 %v582
  %1636 = vmatprep.subr.mxu0 %v585
  %1637 = vmatpush1.msra.mxu0 %v584
  %1638 = vmatprep.subr.mxu0 %v587
  %1639 = vmatpush1.msra.mxu0 %v586
  %1640 = vmatprep.subr.mxu0 %v589
  %1641 = vmatpush1.msra.mxu0 %v588
  %1642 = vmatprep.subr.mxu0 %v591
  %1643 = vmatpush1.msra.mxu0 %v590
  %1644 = vmatprep.subr.mxu0 %v593
  %1645 = vmatpush1.msra.mxu0 %v592
  %1646 = vmatprep.subr.mxu0 %v595
  %1647 = vmatpush1.msra.mxu0 %v594
  %1648 = vmatprep.subr.mxu0 %v597
  %1649 = vmatpush1.msra.mxu0 %v596
  %1650 = vmatprep.subr.mxu0 %v599
  %1651 = vmatpush1.msra.mxu0 %v598
  %1652 = vmatprep.subr.mxu0 %v601
  %1653 = vmatpush1.msra.mxu0 %v600
  %1654 = vmatprep.subr.mxu0 %v603
  %1655 = vmatpush1.msra.mxu0 %v602
  %1656 = vmatprep.subr.mxu0 %v605
  %1657 = vmatpush1.msra.mxu0 %v604
  %1658 = vmatprep.subr.mxu0 0.0
  %1659 = vmatpush1.msra.mxu0 0.0
  %1660 = vmatprep.subr.mxu0 0.0
  %1661 = vmatpush1.msra.mxu0 0.0
  %1662 = vmatprep.subr.mxu0 0.0
  %1663 = vmatpush1.msra.mxu0 0.0
  %1664 = vmatprep.subr.mxu0 0.0
  %1665 = vmatpush1.msra.mxu0 0.0
  %1666 = vmatprep.subr.mxu0 0.0
  %1667 = vmatpush1.msra.mxu0 0.0
  %1668 = vmatprep.subr.mxu0 0.0
  %1669 = vmatpush1.msra.mxu0 0.0
  %1670 = vmatprep.subr.mxu0 0.0
  %1671 = vmatpush1.msra.mxu0 0.0
  %1672 = vmatprep.subr.mxu0 0.0
  %1673 = vmatpush1.msra.mxu0 0.0
  %1674 = vmatprep.subr.mxu0 0.0
  %1675 = vmatpush1.msra.mxu0 0.0
  %1676 = vmatprep.subr.mxu0 0.0
  %1677 = vmatpush1.msra.mxu0 0.0
  %1678 = vmatprep.subr.mxu0 0.0
  %1679 = vmatpush1.msra.mxu0 0.0
  %1680 = vmatprep.subr.mxu0 0.0
  %1681 = vmatpush1.msra.mxu0 0.0
  %1682 = vmatprep.subr.mxu0 0.0
  %1683 = vmatpush1.msra.mxu0 0.0
  %1684 = vmatprep.subr.mxu0 0.0
  %1685 = vmatpush1.msra.mxu0 0.0
  %1686 = vmatprep.subr.mxu0 0.0
  %1687 = vmatpush1.msra.mxu0 0.0
  %1688 = vmatprep.subr.mxu0 0.0
  %1689 = vmatpush1.msra.mxu0 0.0
  %1690 = vmatprep.mubr.f32.mxu0 0.0
  %1691 = vmatmul.mubr.f32.gmra.mrb[0].mxu0 %v967
  %v1692 = vpop.f32.mrb[0].mxu0
  %v1693 = vadd.f32 0.0, %v1692
  %v1694 = vpop.f32.mrb[0].mxu0
  %v1695 = vadd.f32 0.0, %v1694
  %1696 = vmatprep.mubr.f32.mxu0 0.0
  %1697 = vmatmul.mubr.f32.gmra.mrb[0].mxu0 %v969
  %v1698 = vpop.f32.mrb[0].mxu0
  %v1699 = vadd.f32 0.0, %v1698
  %v1700 = vpop.f32.mrb[0].mxu0
  %v1701 = vadd.f32 0.0, %v1700
  %1702 = vmatprep.mubr.f32.mxu0 0.0
  %1703 = vmatmul.mubr.f32.gmra.mrb[0].mxu0 %v971
  %v1704 = vpop.f32.mrb[0].mxu0
  %v1705 = vadd.f32 0.0, %v1704
  %v1706 = vpop.f32.mrb[0].mxu0
  %v1707 = vadd.f32 0.0, %v1706
  %1708 = vmatprep.mubr.f32.mxu0 0.0
  %1709 = vmatmul.mubr.f32.gmra.mrb[0].mxu0 %v973
  %v1710 = vpop.f32.mrb[0].mxu0
  %v1711 = vadd.f32 0.0, %v1710
  %v1712 = vpop.f32.mrb[0].mxu0
  %v1713 = vadd.f32 0.0, %v1712
  %1714 = vmatprep.mubr.f32.mxu0 0.0
  %1715 = vmatmul.mubr.f32.gmra.mrb[0].mxu0 %v975
  %v1716 = vpop.f32.mrb[0].mxu0
  %v1717 = vadd.f32 0.0, %v1716
  %v1718 = vpop.f32.mrb[0].mxu0
  %v1719 = vadd.f32 0.0, %v1718
  %1720 = vmatprep.mubr.f32.mxu0 0.0
  %1721 = vmatmul.mubr.f32.gmra.mrb[0].mxu0 %v977
  %v1722 = vpop.f32.mrb[0].mxu0
  %v1723 = vadd.f32 0.0, %v1722
  %v1724 = vpop.f32.mrb[0].mxu0
  %v1725 = vadd.f32 0.0, %v1724
  %1726 = vmatprep.mubr.f32.mxu0 0.0
  %1727 = vmatmul.mubr.f32.gmra.mrb[0].mxu0 %v979
  %v1728 = vpop.f32.mrb[0].mxu0
  %v1729 = vadd.f32 0.0, %v1728
  %v1730 = vpop.f32.mrb[0].mxu0
  %v1731 = vadd.f32 0.0, %v1730
  %1732 = vmatprep.mubr.f32.mxu0 0.0
  %1733 = vmatmul.mubr.f32.gmra.mrb[0].mxu0 %v981
  %v1734 = vpop.f32.mrb[0].mxu0
  %v1735 = vadd.f32 0.0, %v1734
  %v1736 = vpop.f32.mrb[0].mxu0
  %v1737 = vadd.f32 0.0, %v1736
  %1738 = vmatprep.mubr.f32.mxu0 0.0
  %1739 = vmatmul.mubr.f32.gmra.mrb[0].mxu0 %v983
  %v1740 = vpop.f32.mrb[0].mxu0
  %v1741 = vadd.f32 0.0, %v1740
  %v1742 = vpop.f32.mrb[0].mxu0
  %v1743 = vadd.f32 0.0, %v1742
  %1744 = vmatprep.mubr.f32.mxu0 0.0
  %1745 = vmatmul.mubr.f32.gmra.mrb[0].mxu0 %v985
  %v1746 = vpop.f32.mrb[0].mxu0
  %v1747 = vadd.f32 0.0, %v1746
  %v1748 = vpop.f32.mrb[0].mxu0
  %v1749 = vadd.f32 0.0, %v1748
  %1750 = vmatprep.mubr.f32.mxu0 0.0
  %1751 = vmatmul.mubr.f32.gmra.mrb[0].mxu0 %v987
  %v1752 = vpop.f32.mrb[0].mxu0
  %v1753 = vadd.f32 0.0, %v1752
  %v1754 = vpop.f32.mrb[0].mxu0
  %v1755 = vadd.f32 0.0, %v1754
  %1756 = vmatprep.mubr.f32.mxu0 0.0
  %1757 = vmatmul.mubr.f32.gmra.mrb[0].mxu0 %v989
  %v1758 = vpop.f32.mrb[0].mxu0
  %v1759 = vadd.f32 0.0, %v1758
  %v1760 = vpop.f32.mrb[0].mxu0
  %v1761 = vadd.f32 0.0, %v1760
  %1762 = vdwg.mxu0
  %1763 = vmatprep.subr.mxu0 %v542
  %1764 = vmatpush1.msra.mxu0 %v541
  %1765 = vmatprep.subr.mxu0 %v544
  %1766 = vmatpush1.msra.mxu0 %v543
  %1767 = vmatprep.subr.mxu0 %v546
  %1768 = vmatpush1.msra.mxu0 %v545
  %1769 = vmatprep.subr.mxu0 %v548
  %1770 = vmatpush1.msra.mxu0 %v547
  %1771 = vmatprep.subr.mxu0 %v550
  %1772 = vmatpush1.msra.mxu0 %v549
  %1773 = vmatprep.subr.mxu0 %v552
  %1774 = vmatpush1.msra.mxu0 %v551
  %1775 = vmatprep.subr.mxu0 %v554
  %1776 = vmatpush1.msra.mxu0 %v553
  %1777 = vmatprep.subr.mxu0 %v556
  %1778 = vmatpush1.msra.mxu0 %v555
  %1779 = vmatprep.subr.mxu0 %v558
  %1780 = vmatpush1.msra.mxu0 %v557
  %1781 = vmatprep.subr.mxu0 %v560
  %1782 = vmatpush1.msra.mxu0 %v559
  %1783 = vmatprep.subr.mxu0 %v562
  %1784 = vmatpush1.msra.mxu0 %v561
  %1785 = vmatprep.subr.mxu0 %v564
  %1786 = vmatpush1.msra.mxu0 %v563
  %1787 = vmatprep.subr.mxu0 %v566
  %1788 = vmatpush1.msra.mxu0 %v565
  %1789 = vmatprep.subr.mxu0 %v568
  %1790 = vmatpush1.msra.mxu0 %v567
  %1791 = vmatprep.subr.mxu0 %v570
  %1792 = vmatpush1.msra.mxu0 %v569
  %1793 = vmatprep.subr.mxu0 %v572
  %1794 = vmatpush1.msra.mxu0 %v571
  %1795 = vmatprep.subr.mxu0 0.0
  %1796 = vmatpush1.msra.mxu0 0.0
  %1797 = vmatprep.subr.mxu0 0.0
  %1798 = vmatpush1.msra.mxu0 0.0
  %1799 = vmatprep.subr.mxu0 0.0
  %1800 = vmatpush1.msra.mxu0 0.0
  %1801 = vmatprep.subr.mxu0 0.0
  %1802 = vmatpush1.msra.mxu0 0.0
  %1803 = vmatprep.subr.mxu0 0.0
  %1804 = vmatpush1.msra.mxu0 0.0
  %1805 = vmatprep.subr.mxu0 0.0
  %1806 = vmatpush1.msra.mxu0 0.0
  %1807 = vmatprep.subr.mxu0 0.0
  %1808 = vmatpush1.msra.mxu0 0.0
  %1809 = vmatprep.subr.mxu0 0.0
  %1810 = vmatpush1.msra.mxu0 0.0
  %1811 = vmatprep.subr.mxu0 0.0
  %1812 = vmatpush1.msra.mxu0 0.0
  %1813 = vmatprep.subr.mxu0 0.0
  %1814 = vmatpush1.msra.mxu0 0.0
  %1815 = vmatprep.subr.mxu0 0.0
  %1816 = vmatpush1.msra.mxu0 0.0
  %1817 = vmatprep.subr.mxu0 0.0
  %1818 = vmatpush1.msra.mxu0 0.0
  %1819 = vmatprep.subr.mxu0 0.0
  %1820 = vmatpush1.msra.mxu0 0.0
  %1821 = vmatprep.subr.mxu0 0.0
  %1822 = vmatpush1.msra.mxu0 0.0
  %1823 = vmatprep.subr.mxu0 0.0
  %1824 = vmatpush1.msra.mxu0 0.0
  %1825 = vmatprep.subr.mxu0 0.0
  %1826 = vmatpush1.msra.mxu0 0.0
  %1827 = vmatprep.mubr.f32.mxu0 0.0
  %1828 = vmatmul.mubr.f32.gmra.mrb[0].mxu0 %v622
  %v1829 = vpop.f32.mrb[0].mxu0
  %v1830 = vadd.f32 %v1693, %v1829
  %v1831 = vpop.f32.mrb[0].mxu0
  %v1832 = vadd.f32 %v1695, %v1831
  %1833 = vmatprep.mubr.f32.mxu0 0.0
  %1834 = vmatmul.mubr.f32.gmra.mrb[0].mxu0 %v624
  %v1835 = vpop.f32.mrb[0].mxu0
  %v1836 = vadd.f32 %v1699, %v1835
  %v1837 = vpop.f32.mrb[0].mxu0
  %v1838 = vadd.f32 %v1701, %v1837
  %1839 = vmatprep.mubr.f32.mxu0 0.0
  %1840 = vmatmul.mubr.f32.gmra.mrb[0].mxu0 %v626
  %v1841 = vpop.f32.mrb[0].mxu0
  %v1842 = vadd.f32 %v1705, %v1841
  %v1843 = vpop.f32.mrb[0].mxu0
  %v1844 = vadd.f32 %v1707, %v1843
  %1845 = vmatprep.mubr.f32.mxu0 0.0
  %1846 = vmatmul.mubr.f32.gmra.mrb[0].mxu0 %v628
  %v1847 = vpop.f32.mrb[0].mxu0
  %v1848 = vadd.f32 %v1711, %v1847
  %v1849 = vpop.f32.mrb[0].mxu0
  %v1850 = vadd.f32 %v1713, %v1849
  %1851 = vmatprep.mubr.f32.mxu0 0.0
  %1852 = vmatmul.mubr.f32.gmra.mrb[0].mxu0 %v630
  %v1853 = vpop.f32.mrb[0].mxu0
  %v1854 = vadd.f32 %v1717, %v1853
  %v1855 = vpop.f32.mrb[0].mxu0
  %v1856 = vadd.f32 %v1719, %v1855
  %1857 = vmatprep.mubr.f32.mxu0 0.0
  %1858 = vmatmul.mubr.f32.gmra.mrb[0].mxu0 %v632
  %v1859 = vpop.f32.mrb[0].mxu0
  %v1860 = vadd.f32 %v1723, %v1859
  %v1861 = vpop.f32.mrb[0].mxu0
  %v1862 = vadd.f32 %v1725, %v1861
  %1863 = vmatprep.mubr.f32.mxu0 0.0
  %1864 = vmatmul.mubr.f32.gmra.mrb[0].mxu0 %v634
  %v1865 = vpop.f32.mrb[0].mxu0
  %v1866 = vadd.f32 %v1729, %v1865
  %v1867 = vpop.f32.mrb[0].mxu0
  %v1868 = vadd.f32 %v1731, %v1867
  %1869 = vmatprep.mubr.f32.mxu0 0.0
  %1870 = vmatmul.mubr.f32.gmra.mrb[0].mxu0 %v636
  %v1871 = vpop.f32.mrb[0].mxu0
  %v1872 = vadd.f32 %v1735, %v1871
  %v1873 = vpop.f32.mrb[0].mxu0
  %v1874 = vadd.f32 %v1737, %v1873
  %1875 = vmatprep.mubr.f32.mxu0 0.0
  %1876 = vmatmul.mubr.f32.gmra.mrb[0].mxu0 %v638
  %v1877 = vpop.f32.mrb[0].mxu0
  %v1878 = vadd.f32 %v1741, %v1877
  %v1879 = vpop.f32.mrb[0].mxu0
  %v1880 = vadd.f32 %v1743, %v1879
  %1881 = vmatprep.mubr.f32.mxu0 0.0
  %1882 = vmatmul.mubr.f32.gmra.mrb[0].mxu0 %v640
  %v1883 = vpop.f32.mrb[0].mxu0
  %v1884 = vadd.f32 %v1747, %v1883
  %v1885 = vpop.f32.mrb[0].mxu0
  %v1886 = vadd.f32 %v1749, %v1885
  %1887 = vmatprep.mubr.f32.mxu0 0.0
  %1888 = vmatmul.mubr.f32.gmra.mrb[0].mxu0 %v642
  %v1889 = vpop.f32.mrb[0].mxu0
  %v1890 = vadd.f32 %v1753, %v1889
  %v1891 = vpop.f32.mrb[0].mxu0
  %v1892 = vadd.f32 %v1755, %v1891
  %1893 = vmatprep.mubr.f32.mxu0 0.0
  %1894 = vmatmul.mubr.f32.gmra.mrb[0].mxu0 %v644
  %v1895 = vpop.f32.mrb[0].mxu0
  %v1896 = vadd.f32 %v1759, %v1895
  %v1897 = vpop.f32.mrb[0].mxu0
  %v1898 = vadd.f32 %v1761, %v1897
  %1899 = vdwg.mxu0
  %1900 = vmatprep.subr.mxu0 %v933
  %1901 = vmatpush1.msra.mxu0 %v932
  %1902 = vmatprep.subr.mxu0 %v935
  %1903 = vmatpush1.msra.mxu0 %v934
  %1904 = vmatprep.subr.mxu0 %v937
  %1905 = vmatpush1.msra.mxu0 %v936
  %1906 = vmatprep.subr.mxu0 %v939
  %1907 = vmatpush1.msra.mxu0 %v938
  %1908 = vmatprep.subr.mxu0 %v941
  %1909 = vmatpush1.msra.mxu0 %v940
  %1910 = vmatprep.subr.mxu0 %v943
  %1911 = vmatpush1.msra.mxu0 %v942
  %1912 = vmatprep.subr.mxu0 %v945
  %1913 = vmatpush1.msra.mxu0 %v944
  %1914 = vmatprep.subr.mxu0 %v947
  %1915 = vmatpush1.msra.mxu0 %v946
  %1916 = vmatprep.subr.mxu0 %v949
  %1917 = vmatpush1.msra.mxu0 %v948
  %1918 = vmatprep.subr.mxu0 %v951
  %1919 = vmatpush1.msra.mxu0 %v950
  %1920 = vmatprep.subr.mxu0 %v953
  %1921 = vmatpush1.msra.mxu0 %v952
  %1922 = vmatprep.subr.mxu0 %v955
  %1923 = vmatpush1.msra.mxu0 %v954
  %1924 = vmatprep.subr.mxu0 %v957
  %1925 = vmatpush1.msra.mxu0 %v956
  %1926 = vmatprep.subr.mxu0 %v959
  %1927 = vmatpush1.msra.mxu0 %v958
  %1928 = vmatprep.subr.mxu0 %v961
  %1929 = vmatpush1.msra.mxu0 %v960
  %1930 = vmatprep.subr.mxu0 %v963
  %1931 = vmatpush1.msra.mxu0 %v962
  %1932 = vmatprep.subr.mxu0 0.0
  %1933 = vmatpush1.msra.mxu0 0.0
  %1934 = vmatprep.subr.mxu0 0.0
  %1935 = vmatpush1.msra.mxu0 0.0
  %1936 = vmatprep.subr.mxu0 0.0
  %1937 = vmatpush1.msra.mxu0 0.0
  %1938 = vmatprep.subr.mxu0 0.0
  %1939 = vmatpush1.msra.mxu0 0.0
  %1940 = vmatprep.subr.mxu0 0.0
  %1941 = vmatpush1.msra.mxu0 0.0
  %1942 = vmatprep.subr.mxu0 0.0
  %1943 = vmatpush1.msra.mxu0 0.0
  %1944 = vmatprep.subr.mxu0 0.0
  %1945 = vmatpush1.msra.mxu0 0.0
  %1946 = vmatprep.subr.mxu0 0.0
  %1947 = vmatpush1.msra.mxu0 0.0
  %1948 = vmatprep.subr.mxu0 0.0
  %1949 = vmatpush1.msra.mxu0 0.0
  %1950 = vmatprep.subr.mxu0 0.0
  %1951 = vmatpush1.msra.mxu0 0.0
  %1952 = vmatprep.subr.mxu0 0.0
  %1953 = vmatpush1.msra.mxu0 0.0
  %1954 = vmatprep.subr.mxu0 0.0
  %1955 = vmatpush1.msra.mxu0 0.0
  %1956 = vmatprep.subr.mxu0 0.0
  %1957 = vmatpush1.msra.mxu0 0.0
  %1958 = vmatprep.subr.mxu0 0.0
  %1959 = vmatpush1.msra.mxu0 0.0
  %1960 = vmatprep.subr.mxu0 0.0
  %1961 = vmatpush1.msra.mxu0 0.0
  %1962 = vmatprep.subr.mxu0 0.0
  %1963 = vmatpush1.msra.mxu0 0.0
  %1964 = vmatprep.mubr.f32.mxu0 0.0
  %1965 = vmatmul.mubr.f32.gmra.mrb[0].mxu0 %v1199
  %v1966 = vpop.f32.mrb[0].mxu0
  %v1967 = vadd.f32 0.0, %v1966
  %v1968 = vpop.f32.mrb[0].mxu0
  %v1969 = vadd.f32 0.0, %v1968
  %1970 = vmatprep.mubr.f32.mxu0 0.0
  %1971 = vmatmul.mubr.f32.gmra.mrb[0].mxu0 %v1201
  %v1972 = vpop.f32.mrb[0].mxu0
  %v1973 = vadd.f32 0.0, %v1972
  %v1974 = vpop.f32.mrb[0].mxu0
  %v1975 = vadd.f32 0.0, %v1974
  %1976 = vmatprep.mubr.f32.mxu0 0.0
  %1977 = vmatmul.mubr.f32.gmra.mrb[0].mxu0 %v1203
  %v1978 = vpop.f32.mrb[0].mxu0
  %v1979 = vadd.f32 0.0, %v1978
  %v1980 = vpop.f32.mrb[0].mxu0
  %v1981 = vadd.f32 0.0, %v1980
  %1982 = vmatprep.mubr.f32.mxu0 0.0
  %1983 = vmatmul.mubr.f32.gmra.mrb[0].mxu0 %v1205
  %v1984 = vpop.f32.mrb[0].mxu0
  %v1985 = vadd.f32 0.0, %v1984
  %v1986 = vpop.f32.mrb[0].mxu0
  %v1987 = vadd.f32 0.0, %v1986
  %1988 = vmatprep.mubr.f32.mxu0 0.0
  %1989 = vmatmul.mubr.f32.gmra.mrb[0].mxu0 %v1207
  %v1990 = vpop.f32.mrb[0].mxu0
  %v1991 = vadd.f32 0.0, %v1990
  %v1992 = vpop.f32.mrb[0].mxu0
  %v1993 = vadd.f32 0.0, %v1992
  %1994 = vmatprep.mubr.f32.mxu0 0.0
  %1995 = vmatmul.mubr.f32.gmra.mrb[0].mxu0 %v1209
  %v1996 = vpop.f32.mrb[0].mxu0
  %v1997 = vadd.f32 0.0, %v1996
  %v1998 = vpop.f32.mrb[0].mxu0
  %v1999 = vadd.f32 0.0, %v1998
  %2000 = vmatprep.mubr.f32.mxu0 0.0
  %2001 = vmatmul.mubr.f32.gmra.mrb[0].mxu0 %v1211
  %v2002 = vpop.f32.mrb[0].mxu0
  %v2003 = vadd.f32 0.0, %v2002
  %v2004 = vpop.f32.mrb[0].mxu0
  %v2005 = vadd.f32 0.0, %v2004
  %2006 = vmatprep.mubr.f32.mxu0 0.0
  %2007 = vmatmul.mubr.f32.gmra.mrb[0].mxu0 %v1213
  %v2008 = vpop.f32.mrb[0].mxu0
  %v2009 = vadd.f32 0.0, %v2008
  %v2010 = vpop.f32.mrb[0].mxu0
  %v2011 = vadd.f32 0.0, %v2010
  %2012 = vmatprep.mubr.f32.mxu0 0.0
  %2013 = vmatmul.mubr.f32.gmra.mrb[0].mxu0 %v1215
  %v2014 = vpop.f32.mrb[0].mxu0
  %v2015 = vadd.f32 0.0, %v2014
  %v2016 = vpop.f32.mrb[0].mxu0
  %v2017 = vadd.f32 0.0, %v2016
  %2018 = vmatprep.mubr.f32.mxu0 0.0
  %2019 = vmatmul.mubr.f32.gmra.mrb[0].mxu0 %v1217
  %v2020 = vpop.f32.mrb[0].mxu0
  %v2021 = vadd.f32 0.0, %v2020
  %v2022 = vpop.f32.mrb[0].mxu0
  %v2023 = vadd.f32 0.0, %v2022
  %2024 = vmatprep.mubr.f32.mxu0 0.0
  %2025 = vmatmul.mubr.f32.gmra.mrb[0].mxu0 %v1219
  %v2026 = vpop.f32.mrb[0].mxu0
  %v2027 = vadd.f32 0.0, %v2026
  %v2028 = vpop.f32.mrb[0].mxu0
  %v2029 = vadd.f32 0.0, %v2028
  %2030 = vmatprep.mubr.f32.mxu0 0.0
  %2031 = vmatmul.mubr.f32.gmra.mrb[0].mxu0 %v1221
  %v2032 = vpop.f32.mrb[0].mxu0
  %v2033 = vadd.f32 0.0, %v2032
  %v2034 = vpop.f32.mrb[0].mxu0
  %v2035 = vadd.f32 0.0, %v2034
  %2036 = vdwg.mxu0
  %v2037 = vadd.f32 %v1830, %v1967
  %v2038 = vadd.f32 %v1832, %v1969
  %v2039 = vadd.f32 %v1836, %v1973
  %v2040 = vadd.f32 %v1838, %v1975
  %v2041 = vadd.f32 %v1842, %v1979
  %v2042 = vadd.f32 %v1844, %v1981
  %v2043 = vadd.f32 %v1848, %v1985
  %v2044 = vadd.f32 %v1850, %v1987
  %v2045 = vadd.f32 %v1854, %v1991
  %v2046 = vadd.f32 %v1856, %v1993
  %v2047 = vadd.f32 %v1860, %v1997
  %v2048 = vadd.f32 %v1862, %v1999
  %v2049 = vadd.f32 %v1866, %v2003
  %v2050 = vadd.f32 %v1868, %v2005
  %v2051 = vadd.f32 %v1872, %v2009
  %v2052 = vadd.f32 %v1874, %v2011
  %v2053 = vadd.f32 %v1878, %v2015
  %v2054 = vadd.f32 %v1880, %v2017
  %v2055 = vadd.f32 %v1884, %v2021
  %v2056 = vadd.f32 %v1886, %v2023
  %v2057 = vadd.f32 %v1890, %v2027
  %v2058 = vadd.f32 %v1892, %v2029
  %v2059 = vadd.f32 %v1896, %v2033
  %v2060 = vadd.f32 %v1898, %v2035
  %2061 = vmatprep.subr.mxu0 %v1165
  %2062 = vmatpush1.msra.mxu0 %v1164
  %2063 = vmatprep.subr.mxu0 %v1167
  %2064 = vmatpush1.msra.mxu0 %v1166
  %2065 = vmatprep.subr.mxu0 %v1169
  %2066 = vmatpush1.msra.mxu0 %v1168
  %2067 = vmatprep.subr.mxu0 %v1171
  %2068 = vmatpush1.msra.mxu0 %v1170
  %2069 = vmatprep.subr.mxu0 %v1173
  %2070 = vmatpush1.msra.mxu0 %v1172
  %2071 = vmatprep.subr.mxu0 %v1175
  %2072 = vmatpush1.msra.mxu0 %v1174
  %2073 = vmatprep.subr.mxu0 %v1177
  %2074 = vmatpush1.msra.mxu0 %v1176
  %2075 = vmatprep.subr.mxu0 %v1179
  %2076 = vmatpush1.msra.mxu0 %v1178
  %2077 = vmatprep.subr.mxu0 %v1181
  %2078 = vmatpush1.msra.mxu0 %v1180
  %2079 = vmatprep.subr.mxu0 %v1183
  %2080 = vmatpush1.msra.mxu0 %v1182
  %2081 = vmatprep.subr.mxu0 %v1185
  %2082 = vmatpush1.msra.mxu0 %v1184
  %2083 = vmatprep.subr.mxu0 %v1187
  %2084 = vmatpush1.msra.mxu0 %v1186
  %2085 = vmatprep.subr.mxu0 %v1189
  %2086 = vmatpush1.msra.mxu0 %v1188
  %2087 = vmatprep.subr.mxu0 %v1191
  %2088 = vmatpush1.msra.mxu0 %v1190
  %2089 = vmatprep.subr.mxu0 %v1193
  %2090 = vmatpush1.msra.mxu0 %v1192
  %2091 = vmatprep.subr.mxu0 %v1195
  %2092 = vmatpush1.msra.mxu0 %v1194
  %2093 = vmatprep.subr.mxu0 0.0
  %2094 = vmatpush1.msra.mxu0 0.0
  %2095 = vmatprep.subr.mxu0 0.0
  %2096 = vmatpush1.msra.mxu0 0.0
  %2097 = vmatprep.subr.mxu0 0.0
  %2098 = vmatpush1.msra.mxu0 0.0
  %2099 = vmatprep.subr.mxu0 0.0
  %2100 = vmatpush1.msra.mxu0 0.0
  %2101 = vmatprep.subr.mxu0 0.0
  %2102 = vmatpush1.msra.mxu0 0.0
  %2103 = vmatprep.subr.mxu0 0.0
  %2104 = vmatpush1.msra.mxu0 0.0
  %2105 = vmatprep.subr.mxu0 0.0
  %2106 = vmatpush1.msra.mxu0 0.0
  %2107 = vmatprep.subr.mxu0 0.0
  %2108 = vmatpush1.msra.mxu0 0.0
  %2109 = vmatprep.subr.mxu0 0.0
  %2110 = vmatpush1.msra.mxu0 0.0
  %2111 = vmatprep.subr.mxu0 0.0
  %2112 = vmatpush1.msra.mxu0 0.0
  %2113 = vmatprep.subr.mxu0 0.0
  %2114 = vmatpush1.msra.mxu0 0.0
  %2115 = vmatprep.subr.mxu0 0.0
  %2116 = vmatpush1.msra.mxu0 0.0
  %2117 = vmatprep.subr.mxu0 0.0
  %2118 = vmatpush1.msra.mxu0 0.0
  %2119 = vmatprep.subr.mxu0 0.0
  %2120 = vmatpush1.msra.mxu0 0.0
  %2121 = vmatprep.subr.mxu0 0.0
  %2122 = vmatpush1.msra.mxu0 0.0
  %2123 = vmatprep.subr.mxu0 0.0
  %2124 = vmatpush1.msra.mxu0 0.0
  %2125 = vmatprep.mubr.f32.mxu0 0.0
  %2126 = vmatmul.mubr.f32.gmra.mrb[0].mxu0 %v1430
  %v2127 = vpop.f32.mrb[0].mxu0
  %v2128 = vadd.f32 0.0, %v2127
  %v2129 = vpop.f32.mrb[0].mxu0
  %v2130 = vadd.f32 0.0, %v2129
  %2131 = vmatprep.mubr.f32.mxu0 0.0
  %2132 = vmatmul.mubr.f32.gmra.mrb[0].mxu0 %v1432
  %v2133 = vpop.f32.mrb[0].mxu0
  %v2134 = vadd.f32 0.0, %v2133
  %v2135 = vpop.f32.mrb[0].mxu0
  %v2136 = vadd.f32 0.0, %v2135
  %2137 = vmatprep.mubr.f32.mxu0 0.0
  %2138 = vmatmul.mubr.f32.gmra.mrb[0].mxu0 %v1434
  %v2139 = vpop.f32.mrb[0].mxu0
  %v2140 = vadd.f32 0.0, %v2139
  %v2141 = vpop.f32.mrb[0].mxu0
  %v2142 = vadd.f32 0.0, %v2141
  %2143 = vmatprep.mubr.f32.mxu0 0.0
  %2144 = vmatmul.mubr.f32.gmra.mrb[0].mxu0 %v1436
  %v2145 = vpop.f32.mrb[0].mxu0
  %v2146 = vadd.f32 0.0, %v2145
  %v2147 = vpop.f32.mrb[0].mxu0
  %v2148 = vadd.f32 0.0, %v2147
  %2149 = vmatprep.mubr.f32.mxu0 0.0
  %2150 = vmatmul.mubr.f32.gmra.mrb[0].mxu0 %v1438
  %v2151 = vpop.f32.mrb[0].mxu0
  %v2152 = vadd.f32 0.0, %v2151
  %v2153 = vpop.f32.mrb[0].mxu0
  %v2154 = vadd.f32 0.0, %v2153
  %2155 = vmatprep.mubr.f32.mxu0 0.0
  %2156 = vmatmul.mubr.f32.gmra.mrb[0].mxu0 %v1440
  %v2157 = vpop.f32.mrb[0].mxu0
  %v2158 = vadd.f32 0.0, %v2157
  %v2159 = vpop.f32.mrb[0].mxu0
  %v2160 = vadd.f32 0.0, %v2159
  %2161 = vmatprep.mubr.f32.mxu0 0.0
  %2162 = vmatmul.mubr.f32.gmra.mrb[0].mxu0 %v1442
  %v2163 = vpop.f32.mrb[0].mxu0
  %v2164 = vadd.f32 0.0, %v2163
  %v2165 = vpop.f32.mrb[0].mxu0
  %v2166 = vadd.f32 0.0, %v2165
  %2167 = vmatprep.mubr.f32.mxu0 0.0
  %2168 = vmatmul.mubr.f32.gmra.mrb[0].mxu0 %v1444
  %v2169 = vpop.f32.mrb[0].mxu0
  %v2170 = vadd.f32 0.0, %v2169
  %v2171 = vpop.f32.mrb[0].mxu0
  %v2172 = vadd.f32 0.0, %v2171
  %2173 = vmatprep.mubr.f32.mxu0 0.0
  %2174 = vmatmul.mubr.f32.gmra.mrb[0].mxu0 %v1446
  %v2175 = vpop.f32.mrb[0].mxu0
  %v2176 = vadd.f32 0.0, %v2175
  %v2177 = vpop.f32.mrb[0].mxu0
  %v2178 = vadd.f32 0.0, %v2177
  %2179 = vmatprep.mubr.f32.mxu0 0.0
  %2180 = vmatmul.mubr.f32.gmra.mrb[0].mxu0 %v1448
  %v2181 = vpop.f32.mrb[0].mxu0
  %v2182 = vadd.f32 0.0, %v2181
  %v2183 = vpop.f32.mrb[0].mxu0
  %v2184 = vadd.f32 0.0, %v2183
  %2185 = vmatprep.mubr.f32.mxu0 0.0
  %2186 = vmatmul.mubr.f32.gmra.mrb[0].mxu0 %v1450
  %v2187 = vpop.f32.mrb[0].mxu0
  %v2188 = vadd.f32 0.0, %v2187
  %v2189 = vpop.f32.mrb[0].mxu0
  %v2190 = vadd.f32 0.0, %v2189
  %2191 = vmatprep.mubr.f32.mxu0 0.0
  %2192 = vmatmul.mubr.f32.gmra.mrb[0].mxu0 %v1452
  %v2193 = vpop.f32.mrb[0].mxu0
  %v2194 = vadd.f32 0.0, %v2193
  %v2195 = vpop.f32.mrb[0].mxu0
  %v2196 = vadd.f32 0.0, %v2195
  %2197 = vdwg.mxu0
  %v2198 = vadd.f32 %v2037, %v2128
  %v2199 = vadd.f32 %v2038, %v2130
  %v2200 = vadd.f32 %v2039, %v2134
  %v2201 = vadd.f32 %v2040, %v2136
  %v2202 = vadd.f32 %v2041, %v2140
  %v2203 = vadd.f32 %v2042, %v2142
  %v2204 = vadd.f32 %v2043, %v2146
  %v2205 = vadd.f32 %v2044, %v2148
  %v2206 = vadd.f32 %v2045, %v2152
  %v2207 = vadd.f32 %v2046, %v2154
  %v2208 = vadd.f32 %v2047, %v2158
  %v2209 = vadd.f32 %v2048, %v2160
  %v2210 = vadd.f32 %v2049, %v2164
  %v2211 = vadd.f32 %v2050, %v2166
  %v2212 = vadd.f32 %v2051, %v2170
  %v2213 = vadd.f32 %v2052, %v2172
  %v2214 = vadd.f32 %v2053, %v2176
  %v2215 = vadd.f32 %v2054, %v2178
  %v2216 = vadd.f32 %v2055, %v2182
  %v2217 = vadd.f32 %v2056, %v2184
  %v2218 = vadd.f32 %v2057, %v2188
  %v2219 = vadd.f32 %v2058, %v2190
  %v2220 = vadd.f32 %v2059, %v2194
  %v2221 = vadd.f32 %v2060, %v2196
  %vm2222 = vcmask 1042432
  %v2223 = vrot.slane %v529, 5
  %v2224 = vrot.slane %v530, 5
  %v2225 = vsel %vm2222, %v2223, %v2224
  %v2226 = vrot.slane %v531, 5
  %v2227 = vsel %vm2222, %v2224, %v2226
  %v2228 = vrot.slane %v532, 5
  %v2229 = vsel %vm2222, %v2226, %v2228
  %v2230 = vrot.slane %v533, 5
  %v2231 = vsel %vm2222, %v2228, %v2230
  %v2232 = vrot.slane %v534, 5
  %v2233 = vsel %vm2222, %v2230, %v2232
  %v2234 = vrot.slane %v535, 5
  %v2235 = vsel %vm2222, %v2232, %v2234
  %v2236 = vrot.slane %v536, 5
  %v2237 = vsel %vm2222, %v2234, %v2236
  %v2238 = vrot.slane %v537, 5
  %v2239 = vsel %vm2222, %v2236, %v2238
  %v2240 = vrot.slane %v538, 5
  %v2241 = vsel %vm2222, %v2238, %v2240
  %v2242 = vrot.slane %v539, 5
  %v2243 = vsel %vm2222, %v2240, %v2242
  %v2244 = vrot.slane %v540, 5
  %v2245 = vsel %vm2222, %v2242, %v2244
  %v2246 = vrot.slane 0.0, 5
  %v2247 = vsel %vm2222, %v2244, %v2246
  %2260 = vmatprep.subr.mxu0 %v1397
  %2261 = vmatpush1.msra.mxu0 %v1396
  %2262 = vmatprep.subr.mxu0 %v1399
  %2263 = vmatpush1.msra.mxu0 %v1398
  %2264 = vmatprep.subr.mxu0 %v1401
  %2265 = vmatpush1.msra.mxu0 %v1400
  %2266 = vmatprep.subr.mxu0 %v1403
  %2267 = vmatpush1.msra.mxu0 %v1402
  %2268 = vmatprep.subr.mxu0 %v1405
  %2269 = vmatpush1.msra.mxu0 %v1404
  %2270 = vmatprep.subr.mxu0 %v1407
  %2271 = vmatpush1.msra.mxu0 %v1406
  %2272 = vmatprep.subr.mxu0 %v1409
  %2273 = vmatpush1.msra.mxu0 %v1408
  %2274 = vmatprep.subr.mxu0 %v1411
  %2275 = vmatpush1.msra.mxu0 %v1410
  %2276 = vmatprep.subr.mxu0 %v1413
  %2277 = vmatpush1.msra.mxu0 %v1412
  %2278 = vmatprep.subr.mxu0 %v1415
  %2279 = vmatpush1.msra.mxu0 %v1414
  %2280 = vmatprep.subr.mxu0 %v1417
  %2281 = vmatpush1.msra.mxu0 %v1416
  %2282 = vmatprep.subr.mxu0 %v1419
  %2283 = vmatpush1.msra.mxu0 %v1418
  %2284 = vmatprep.subr.mxu0 %v1421
  %2285 = vmatpush1.msra.mxu0 %v1420
  %2286 = vmatprep.subr.mxu0 %v1423
  %2287 = vmatpush1.msra.mxu0 %v1422
  %2288 = vmatprep.subr.mxu0 %v1425
  %2289 = vmatpush1.msra.mxu0 %v1424
  %2290 = vmatprep.subr.mxu0 %v1427
  %2291 = vmatpush1.msra.mxu0 %v1426
  %2292 = vmatprep.subr.mxu0 0.0
  %2293 = vmatpush1.msra.mxu0 0.0
  %2294 = vmatprep.subr.mxu0 0.0
  %2295 = vmatpush1.msra.mxu0 0.0
  %2296 = vmatprep.subr.mxu0 0.0
  %2297 = vmatpush1.msra.mxu0 0.0
  %2298 = vmatprep.subr.mxu0 0.0
  %2299 = vmatpush1.msra.mxu0 0.0
  %2300 = vmatprep.subr.mxu0 0.0
  %2301 = vmatpush1.msra.mxu0 0.0
  %2302 = vmatprep.subr.mxu0 0.0
  %2303 = vmatpush1.msra.mxu0 0.0
  %2304 = vmatprep.subr.mxu0 0.0
  %2305 = vmatpush1.msra.mxu0 0.0
  %2306 = vmatprep.subr.mxu0 0.0
  %2307 = vmatpush1.msra.mxu0 0.0
  %2308 = vmatprep.subr.mxu0 0.0
  %2309 = vmatpush1.msra.mxu0 0.0
  %2310 = vmatprep.subr.mxu0 0.0
  %2311 = vmatpush1.msra.mxu0 0.0
  %2312 = vmatprep.subr.mxu0 0.0
  %2313 = vmatpush1.msra.mxu0 0.0
  %2314 = vmatprep.subr.mxu0 0.0
  %2315 = vmatpush1.msra.mxu0 0.0
  %2316 = vmatprep.subr.mxu0 0.0
  %2317 = vmatpush1.msra.mxu0 0.0
  %2318 = vmatprep.subr.mxu0 0.0
  %2319 = vmatpush1.msra.mxu0 0.0
  %2320 = vmatprep.subr.mxu0 0.0
  %2321 = vmatpush1.msra.mxu0 0.0
  %2322 = vmatprep.subr.mxu0 0.0
  %2323 = vmatpush1.msra.mxu0 0.0
  %2324 = vmatprep.mubr.f32.mxu0 0.0
  %2325 = vmatmul.mubr.f32.gmra.mrb[0].mxu0 %v2225
  %v2326 = vpop.f32.mrb[0].mxu0
  %v2327 = vadd.f32 0.0, %v2326
  %v2328 = vpop.f32.mrb[0].mxu0
  %v2329 = vadd.f32 0.0, %v2328
  %2330 = vmatprep.mubr.f32.mxu0 0.0
  %2331 = vmatmul.mubr.f32.gmra.mrb[0].mxu0 %v2227
  %v2332 = vpop.f32.mrb[0].mxu0
  %v2333 = vadd.f32 0.0, %v2332
  %v2334 = vpop.f32.mrb[0].mxu0
  %v2335 = vadd.f32 0.0, %v2334
  %2336 = vmatprep.mubr.f32.mxu0 0.0
  %2337 = vmatmul.mubr.f32.gmra.mrb[0].mxu0 %v2229
  %v2338 = vpop.f32.mrb[0].mxu0
  %v2339 = vadd.f32 0.0, %v2338
  %v2340 = vpop.f32.mrb[0].mxu0
  %v2341 = vadd.f32 0.0, %v2340
  %2342 = vmatprep.mubr.f32.mxu0 0.0
  %2343 = vmatmul.mubr.f32.gmra.mrb[0].mxu0 %v2231
  %v2344 = vpop.f32.mrb[0].mxu0
  %v2345 = vadd.f32 0.0, %v2344
  %v2346 = vpop.f32.mrb[0].mxu0
  %v2347 = vadd.f32 0.0, %v2346
  %2348 = vmatprep.mubr.f32.mxu0 0.0
  %2349 = vmatmul.mubr.f32.gmra.mrb[0].mxu0 %v2233
  %v2350 = vpop.f32.mrb[0].mxu0
  %v2351 = vadd.f32 0.0, %v2350
  %v2352 = vpop.f32.mrb[0].mxu0
  %v2353 = vadd.f32 0.0, %v2352
  %2354 = vmatprep.mubr.f32.mxu0 0.0
  %2355 = vmatmul.mubr.f32.gmra.mrb[0].mxu0 %v2235
  %v2356 = vpop.f32.mrb[0].mxu0
  %v2357 = vadd.f32 0.0, %v2356
  %v2358 = vpop.f32.mrb[0].mxu0
  %v2359 = vadd.f32 0.0, %v2358
  %2360 = vmatprep.mubr.f32.mxu0 0.0
  %2361 = vmatmul.mubr.f32.gmra.mrb[0].mxu0 %v2237
  %v2362 = vpop.f32.mrb[0].mxu0
  %v2363 = vadd.f32 0.0, %v2362
  %v2364 = vpop.f32.mrb[0].mxu0
  %v2365 = vadd.f32 0.0, %v2364
  %2366 = vmatprep.mubr.f32.mxu0 0.0
  %2367 = vmatmul.mubr.f32.gmra.mrb[0].mxu0 %v2239
  %v2368 = vpop.f32.mrb[0].mxu0
  %v2369 = vadd.f32 0.0, %v2368
  %v2370 = vpop.f32.mrb[0].mxu0
  %v2371 = vadd.f32 0.0, %v2370
  %2372 = vmatprep.mubr.f32.mxu0 0.0
  %2373 = vmatmul.mubr.f32.gmra.mrb[0].mxu0 %v2241
  %v2374 = vpop.f32.mrb[0].mxu0
  %v2375 = vadd.f32 0.0, %v2374
  %v2376 = vpop.f32.mrb[0].mxu0
  %v2377 = vadd.f32 0.0, %v2376
  %2378 = vmatprep.mubr.f32.mxu0 0.0
  %2379 = vmatmul.mubr.f32.gmra.mrb[0].mxu0 %v2243
  %v2380 = vpop.f32.mrb[0].mxu0
  %v2381 = vadd.f32 0.0, %v2380
  %v2382 = vpop.f32.mrb[0].mxu0
  %v2383 = vadd.f32 0.0, %v2382
  %2384 = vmatprep.mubr.f32.mxu0 0.0
  %2385 = vmatmul.mubr.f32.gmra.mrb[0].mxu0 %v2245
  %v2386 = vpop.f32.mrb[0].mxu0
  %v2387 = vadd.f32 0.0, %v2386
  %v2388 = vpop.f32.mrb[0].mxu0
  %v2389 = vadd.f32 0.0, %v2388
  %2390 = vmatprep.mubr.f32.mxu0 0.0
  %2391 = vmatmul.mubr.f32.gmra.mrb[0].mxu0 %v2247
  %v2392 = vpop.f32.mrb[0].mxu0
  %v2393 = vadd.f32 0.0, %v2392
  %v2394 = vpop.f32.mrb[0].mxu0
  %v2395 = vadd.f32 0.0, %v2394
  %2396 = vdwg.mxu0
  %v2397 = vadd.f32 %v2198, %v2327
  %v2398 = vadd.f32 %v2199, %v2329
  %v2399 = vadd.f32 %v2200, %v2333
  %v2400 = vadd.f32 %v2201, %v2335
  %v2401 = vadd.f32 %v2202, %v2339
  %v2402 = vadd.f32 %v2203, %v2341
  %v2403 = vadd.f32 %v2204, %v2345
  %v2404 = vadd.f32 %v2205, %v2347
  %v2405 = vadd.f32 %v2206, %v2351
  %v2406 = vadd.f32 %v2207, %v2353
  %v2407 = vadd.f32 %v2208, %v2357
  %v2408 = vadd.f32 %v2209, %v2359
  %v2409 = vadd.f32 %v2210, %v2363
  %v2410 = vadd.f32 %v2211, %v2365
  %v2411 = vadd.f32 %v2212, %v2369
  %v2412 = vadd.f32 %v2213, %v2371
  %v2413 = vadd.f32 %v2214, %v2375
  %v2414 = vadd.f32 %v2215, %v2377
  %v2415 = vadd.f32 %v2216, %v2381
  %v2416 = vadd.f32 %v2217, %v2383
  %v2417 = vadd.f32 %v2218, %v2387
  %v2418 = vadd.f32 %v2219, %v2389
  %v2419 = vadd.f32 %v2220, %v2393
  %v2420 = vadd.f32 %v2221, %v2395
  %v2421 = vmax.f32 %v1602, %v1603
  %v2422 = vmax.f32 %v1604, %v1605
  %v2423 = vmax.f32 %v1606, %v1607
  %v2424 = vmax.f32 %v1608, %v1609
  %v2425 = vmax.f32 %v1610, %v1611
  %v2426 = vmax.f32 %v1612, %v1613
  %v2427 = vmax.f32 %v1614, %v1615
  %v2428 = vmax.f32 %v1616, %v1617
  %v2429 = vmax.f32 %v1618, %v1619
  %v2430 = vmax.f32 %v1620, %v1621
  %v2431 = vmax.f32 %v1622, %v1623
  %v2432 = vmax.f32 %v1624, %v1625
  %v2433 = vmax.f32 %v2397, %v2398
  %v2434 = vmax.f32 %v2399, %v2400
  %v2435 = vmax.f32 %v2401, %v2402
  %v2436 = vmax.f32 %v2403, %v2404
  %v2437 = vmax.f32 %v2405, %v2406
  %v2438 = vmax.f32 %v2407, %v2408
  %v2439 = vmax.f32 %v2409, %v2410
  %v2440 = vmax.f32 %v2411, %v2412
  %v2441 = vmax.f32 %v2413, %v2414
  %v2442 = vmax.f32 %v2415, %v2416
  %v2443 = vmax.f32 %v2417, %v2418
  %v2444 = vmax.f32 %v2419, %v2420
  %v2445 = vmax.f32 %v2421, %v2433
  %v2446 = vmax.f32 %v2422, %v2434
  %v2447 = vmax.f32 %v2423, %v2435
  %v2448 = vmax.f32 %v2424, %v2436
  %v2449 = vmax.f32 %v2425, %v2437
  %v2450 = vmax.f32 %v2426, %v2438
  %v2451 = vmax.f32 %v2427, %v2439
  %v2452 = vmax.f32 %v2428, %v2440
  %v2453 = vmax.f32 %v2429, %v2441
  %v2454 = vmax.f32 %v2430, %v2442
  %v2455 = vmax.f32 %v2431, %v2443
  %v2456 = vmax.f32 %v2432, %v2444
  %v2457 = vld [vmem:[%s4] sm:$0x1]
  %v2459 = vlaneseq
  %v2460 = vshrl.u32 %v2459, 7
  %v2461 = vsub.s32 0, %v2460
  %v2462 = vrot.slane %v2457, %v2461
  %v2464 = vadd.f32 %v2445, %v2462
  %v2465 = vadd.f32 %v2446, %v2462
  %v2466 = vadd.f32 %v2447, %v2462
  %v2467 = vadd.f32 %v2448, %v2462
  %v2468 = vadd.f32 %v2449, %v2462
  %v2469 = vadd.f32 %v2450, %v2462
  %v2470 = vadd.f32 %v2451, %v2462
  %v2471 = vadd.f32 %v2452, %v2462
  %v2472 = vadd.f32 %v2453, %v2462
  %v2473 = vadd.f32 %v2454, %v2462
  %v2474 = vadd.f32 %v2455, %v2462
  %v2475 = vadd.f32 %v2456, %v2462
  %v2476 = vmax.f32 %v2464, 0.0
  %v2477 = vmax.f32 %v2465, 0.0
  %v2478 = vmax.f32 %v2466, 0.0
  %v2479 = vmax.f32 %v2467, 0.0
  %v2480 = vmax.f32 %v2468, 0.0
  %v2481 = vmax.f32 %v2469, 0.0
  %v2482 = vmax.f32 %v2470, 0.0
  %v2483 = vmax.f32 %v2471, 0.0
  %v2484 = vmax.f32 %v2472, 0.0
  %v2485 = vmax.f32 %v2473, 0.0
  %v2486 = vmax.f32 %v2474, 0.0
  %v2487 = vmax.f32 %v2475, 0.0
  %v2488 = vld [vmem:[%s5] sm:$0xff]
  %v2489 = vld [vmem:[%s5 + $0x8] sm:$0xff]
  %v2490 = vld [vmem:[%s5 + $0x10] sm:$0xff]
  %v2491 = vld [vmem:[%s5 + $0x18] sm:$0xff]
  %v2492 = vld [vmem:[%s5 + $0x20] sm:$0xff]
  %v2493 = vld [vmem:[%s5 + $0x28] sm:$0xff]
  %v2494 = vld [vmem:[%s5 + $0x30] sm:$0xff]
  %v2495 = vld [vmem:[%s5 + $0x38] sm:$0xff]
  %v2496 = vld [vmem:[%s5 + $0x40] sm:$0xff]
  %v2497 = vld [vmem:[%s5 + $0x48] sm:$0xff]
  %v2498 = vld [vmem:[%s5 + $0x50] sm:$0xff]
  %v2499 = vld [vmem:[%s5 + $0x58] sm:$0xff]
  %v2500 = vld [vmem:[%s5 + $0x60] sm:$0xff]
  %v2501 = vld [vmem:[%s5 + $0x68] sm:$0xff]
  %v2502 = vld [vmem:[%s5 + $0x70] sm:$0xff]
  %v2503 = vld [vmem:[%s5 + $0x78] sm:$0xff]
  %s2504 = scalar_lea.vmem %s5, 128
  %v2505 = vld [vmem:[%s2504] sm:$0xff]
  %v2506 = vld [vmem:[%s2504 + $0x8] sm:$0xff]
  %v2507 = vld [vmem:[%s2504 + $0x10] sm:$0xff]
  %v2508 = vld [vmem:[%s2504 + $0x18] sm:$0xff]
  %v2509 = vld [vmem:[%s2504 + $0x20] sm:$0xff]
  %v2510 = vld [vmem:[%s2504 + $0x28] sm:$0xff]
  %v2511 = vld [vmem:[%s2504 + $0x30] sm:$0xff]
  %v2512 = vld [vmem:[%s2504 + $0x38] sm:$0xff]
  %v2513 = vld [vmem:[%s2504 + $0x40] sm:$0xff]
  %v2514 = vld [vmem:[%s2504 + $0x48] sm:$0xff]
  %v2515 = vld [vmem:[%s2504 + $0x50] sm:$0xff]
  %v2516 = vld [vmem:[%s2504 + $0x58] sm:$0xff]
  %v2517 = vld [vmem:[%s2504 + $0x60] sm:$0xff]
  %v2518 = vld [vmem:[%s2504 + $0x68] sm:$0xff]
  %v2519 = vld [vmem:[%s2504 + $0x70] sm:$0xff]
  %v2520 = vld [vmem:[%s2504 + $0x78] sm:$0xff]
  %v2533 = vrot.slane %v2476, 2
  %v2534 = vrot.slane %v2477, 2
  %v2535 = vsel %vm964, %v2533, %v2534
  %v2536 = vrot.slane %v2478, 2
  %v2537 = vsel %vm964, %v2534, %v2536
  %v2538 = vrot.slane %v2479, 2
  %v2539 = vsel %vm964, %v2536, %v2538
  %v2540 = vrot.slane %v2480, 2
  %v2541 = vsel %vm964, %v2538, %v2540
  %v2542 = vrot.slane %v2481, 2
  %v2543 = vsel %vm964, %v2540, %v2542
  %v2544 = vrot.slane %v2482, 2
  %v2545 = vsel %vm964, %v2542, %v2544
  %v2546 = vrot.slane %v2483, 2
  %v2547 = vsel %vm964, %v2544, %v2546
  %v2548 = vrot.slane %v2484, 2
  %v2549 = vsel %vm964, %v2546, %v2548
  %v2550 = vrot.slane %v2485, 2
  %v2551 = vsel %vm964, %v2548, %v2550
  %v2552 = vrot.slane %v2486, 2
  %v2553 = vsel %vm964, %v2550, %v2552
  %v2554 = vrot.slane %v2487, 2
  %v2555 = vsel %vm964, %v2552, %v2554
  %v2556 = vsel %vm964, %v2554, %v988
  %2569 = vmatprep.subr.mxu0 0.0
  %2570 = vmatpush1.msra.mxu0 %v2505
  %2571 = vmatprep.subr.mxu0 0.0
  %2572 = vmatpush1.msra.mxu0 %v2506
  %2573 = vmatprep.subr.mxu0 0.0
  %2574 = vmatpush1.msra.mxu0 %v2507
  %2575 = vmatprep.subr.mxu0 0.0
  %2576 = vmatpush1.msra.mxu0 %v2508
  %2577 = vmatprep.subr.mxu0 0.0
  %2578 = vmatpush1.msra.mxu0 %v2509
  %2579 = vmatprep.subr.mxu0 0.0
  %2580 = vmatpush1.msra.mxu0 %v2510
  %2581 = vmatprep.subr.mxu0 0.0
  %2582 = vmatpush1.msra.mxu0 %v2511
  %2583 = vmatprep.subr.mxu0 0.0
  %2584 = vmatpush1.msra.mxu0 %v2512
  %2585 = vmatprep.subr.mxu0 0.0
  %2586 = vmatpush1.msra.mxu0 %v2513
  %2587 = vmatprep.subr.mxu0 0.0
  %2588 = vmatpush1.msra.mxu0 %v2514
  %2589 = vmatprep.subr.mxu0 0.0
  %2590 = vmatpush1.msra.mxu0 %v2515
  %2591 = vmatprep.subr.mxu0 0.0
  %2592 = vmatpush1.msra.mxu0 %v2516
  %2593 = vmatprep.subr.mxu0 0.0
  %2594 = vmatpush1.msra.mxu0 %v2517
  %2595 = vmatprep.subr.mxu0 0.0
  %2596 = vmatpush1.msra.mxu0 %v2518
  %2597 = vmatprep.subr.mxu0 0.0
  %2598 = vmatpush1.msra.mxu0 %v2519
  %2599 = vmatprep.subr.mxu0 0.0
  %2600 = vmatpush1.msra.mxu0 %v2520
  %2601 = vmatprep.subr.mxu0 0.0
  %2602 = vmatpush1.msra.mxu0 0.0
  %2603 = vmatprep.subr.mxu0 0.0
  %2604 = vmatpush1.msra.mxu0 0.0
  %2605 = vmatprep.subr.mxu0 0.0
  %2606 = vmatpush1.msra.mxu0 0.0
  %2607 = vmatprep.subr.mxu0 0.0
  %2608 = vmatpush1.msra.mxu0 0.0
  %2609 = vmatprep.subr.mxu0 0.0
  %2610 = vmatpush1.msra.mxu0 0.0
  %2611 = vmatprep.subr.mxu0 0.0
  %2612 = vmatpush1.msra.mxu0 0.0
  %2613 = vmatprep.subr.mxu0 0.0
  %2614 = vmatpush1.msra.mxu0 0.0
  %2615 = vmatprep.subr.mxu0 0.0
  %2616 = vmatpush1.msra.mxu0 0.0
  %2617 = vmatprep.subr.mxu0 0.0
  %2618 = vmatpush1.msra.mxu0 0.0
  %2619 = vmatprep.subr.mxu0 0.0
  %2620 = vmatpush1.msra.mxu0 0.0
  %2621 = vmatprep.subr.mxu0 0.0
  %2622 = vmatpush1.msra.mxu0 0.0
  %2623 = vmatprep.subr.mxu0 0.0
  %2624 = vmatpush1.msra.mxu0 0.0
  %2625 = vmatprep.subr.mxu0 0.0
  %2626 = vmatpush1.msra.mxu0 0.0
  %2627 = vmatprep.subr.mxu0 0.0
  %2628 = vmatpush1.msra.mxu0 0.0
  %2629 = vmatprep.subr.mxu0 0.0
  %2630 = vmatpush1.msra.mxu0 0.0
  %2631 = vmatprep.subr.mxu0 0.0
  %2632 = vmatpush1.msra.mxu0 0.0
  %2633 = vmatprep.mubr.f32.mxu0 0.0
  %2634 = vmatmul.mubr.f32.gmra.mrb[0].mxu0 %v2535
  %v2635 = vpop.f32.mrb[0].mxu0
  %v2636 = vadd.f32 0.0, %v2635
  %v2637 = vpop.f32.mrb[0].mxu0
  %2638 = vmatprep.mubr.f32.mxu0 0.0
  %2639 = vmatmul.mubr.f32.gmra.mrb[0].mxu0 %v2537
  %v2640 = vpop.f32.mrb[0].mxu0
  %v2641 = vadd.f32 0.0, %v2640
  %v2642 = vpop.f32.mrb[0].mxu0
  %2643 = vmatprep.mubr.f32.mxu0 0.0
  %2644 = vmatmul.mubr.f32.gmra.mrb[0].mxu0 %v2539
  %v2645 = vpop.f32.mrb[0].mxu0
  %v2646 = vadd.f32 0.0, %v2645
  %v2647 = vpop.f32.mrb[0].mxu0
  %2648 = vmatprep.mubr.f32.mxu0 0.0
  %2649 = vmatmul.mubr.f32.gmra.mrb[0].mxu0 %v2541
  %v2650 = vpop.f32.mrb[0].mxu0
  %v2651 = vadd.f32 0.0, %v2650
  %v2652 = vpop.f32.mrb[0].mxu0
  %2653 = vmatprep.mubr.f32.mxu0 0.0
  %2654 = vmatmul.mubr.f32.gmra.mrb[0].mxu0 %v2543
  %v2655 = vpop.f32.mrb[0].mxu0
  %v2656 = vadd.f32 0.0, %v2655
  %v2657 = vpop.f32.mrb[0].mxu0
  %2658 = vmatprep.mubr.f32.mxu0 0.0
  %2659 = vmatmul.mubr.f32.gmra.mrb[0].mxu0 %v2545
  %v2660 = vpop.f32.mrb[0].mxu0
  %v2661 = vadd.f32 0.0, %v2660
  %v2662 = vpop.f32.mrb[0].mxu0
  %2663 = vmatprep.mubr.f32.mxu0 0.0
  %2664 = vmatmul.mubr.f32.gmra.mrb[0].mxu0 %v2547
  %v2665 = vpop.f32.mrb[0].mxu0
  %v2666 = vadd.f32 0.0, %v2665
  %v2667 = vpop.f32.mrb[0].mxu0
  %2668 = vmatprep.mubr.f32.mxu0 0.0
  %2669 = vmatmul.mubr.f32.gmra.mrb[0].mxu0 %v2549
  %v2670 = vpop.f32.mrb[0].mxu0
  %v2671 = vadd.f32 0.0, %v2670
  %v2672 = vpop.f32.mrb[0].mxu0
  %2673 = vmatprep.mubr.f32.mxu0 0.0
  %2674 = vmatmul.mubr.f32.gmra.mrb[0].mxu0 %v2551
  %v2675 = vpop.f32.mrb[0].mxu0
  %v2676 = vadd.f32 0.0, %v2675
  %v2677 = vpop.f32.mrb[0].mxu0
  %2678 = vmatprep.mubr.f32.mxu0 0.0
  %2679 = vmatmul.mubr.f32.gmra.mrb[0].mxu0 %v2553
  %v2680 = vpop.f32.mrb[0].mxu0
  %v2681 = vadd.f32 0.0, %v2680
  %v2682 = vpop.f32.mrb[0].mxu0
  %2683 = vmatprep.mubr.f32.mxu0 0.0
  %2684 = vmatmul.mubr.f32.gmra.mrb[0].mxu0 %v2555
  %v2685 = vpop.f32.mrb[0].mxu0
  %v2686 = vadd.f32 0.0, %v2685
  %v2687 = vpop.f32.mrb[0].mxu0
  %2688 = vmatprep.mubr.f32.mxu0 0.0
  %2689 = vmatmul.mubr.f32.gmra.mrb[0].mxu0 %v2556
  %v2690 = vpop.f32.mrb[0].mxu0
  %v2691 = vadd.f32 0.0, %v2690
  %v2692 = vpop.f32.mrb[0].mxu0
  %2693 = vdwg.mxu0
  %2694 = vmatprep.subr.mxu0 0.0
  %2695 = vmatpush1.msra.mxu0 %v2488
  %2696 = vmatprep.subr.mxu0 0.0
  %2697 = vmatpush1.msra.mxu0 %v2489
  %2698 = vmatprep.subr.mxu0 0.0
  %2699 = vmatpush1.msra.mxu0 %v2490
  %2700 = vmatprep.subr.mxu0 0.0
  %2701 = vmatpush1.msra.mxu0 %v2491
  %2702 = vmatprep.subr.mxu0 0.0
  %2703 = vmatpush1.msra.mxu0 %v2492
  %2704 = vmatprep.subr.mxu0 0.0
  %2705 = vmatpush1.msra.mxu0 %v2493
  %2706 = vmatprep.subr.mxu0 0.0
  %2707 = vmatpush1.msra.mxu0 %v2494
  %2708 = vmatprep.subr.mxu0 0.0
  %2709 = vmatpush1.msra.mxu0 %v2495
  %2710 = vmatprep.subr.mxu0 0.0
  %2711 = vmatpush1.msra.mxu0 %v2496
  %2712 = vmatprep.subr.mxu0 0.0
  %2713 = vmatpush1.msra.mxu0 %v2497
  %2714 = vmatprep.subr.mxu0 0.0
  %2715 = vmatpush1.msra.mxu0 %v2498
  %2716 = vmatprep.subr.mxu0 0.0
  %2717 = vmatpush1.msra.mxu0 %v2499
  %2718 = vmatprep.subr.mxu0 0.0
  %2719 = vmatpush1.msra.mxu0 %v2500
  %2720 = vmatprep.subr.mxu0 0.0
  %2721 = vmatpush1.msra.mxu0 %v2501
  %2722 = vmatprep.subr.mxu0 0.0
  %2723 = vmatpush1.msra.mxu0 %v2502
  %2724 = vmatprep.subr.mxu0 0.0
  %2725 = vmatpush1.msra.mxu0 %v2503
  %2726 = vmatprep.subr.mxu0 0.0
  %2727 = vmatpush1.msra.mxu0 0.0
  %2728 = vmatprep.subr.mxu0 0.0
  %2729 = vmatpush1.msra.mxu0 0.0
  %2730 = vmatprep.subr.mxu0 0.0
  %2731 = vmatpush1.msra.mxu0 0.0
  %2732 = vmatprep.subr.mxu0 0.0
  %2733 = vmatpush1.msra.mxu0 0.0
  %2734 = vmatprep.subr.mxu0 0.0
  %2735 = vmatpush1.msra.mxu0 0.0
  %2736 = vmatprep.subr.mxu0 0.0
  %2737 = vmatpush1.msra.mxu0 0.0
  %2738 = vmatprep.subr.mxu0 0.0
  %2739 = vmatpush1.msra.mxu0 0.0
  %2740 = vmatprep.subr.mxu0 0.0
  %2741 = vmatpush1.msra.mxu0 0.0
  %2742 = vmatprep.subr.mxu0 0.0
  %2743 = vmatpush1.msra.mxu0 0.0
  %2744 = vmatprep.subr.mxu0 0.0
  %2745 = vmatpush1.msra.mxu0 0.0
  %2746 = vmatprep.subr.mxu0 0.0
  %2747 = vmatpush1.msra.mxu0 0.0
  %2748 = vmatprep.subr.mxu0 0.0
  %2749 = vmatpush1.msra.mxu0 0.0
  %2750 = vmatprep.subr.mxu0 0.0
  %2751 = vmatpush1.msra.mxu0 0.0
  %2752 = vmatprep.subr.mxu0 0.0
  %2753 = vmatpush1.msra.mxu0 0.0
  %2754 = vmatprep.subr.mxu0 0.0
  %2755 = vmatpush1.msra.mxu0 0.0
  %2756 = vmatprep.subr.mxu0 0.0
  %2757 = vmatpush1.msra.mxu0 0.0
  %2758 = vmatprep.mubr.f32.mxu0 0.0
  %2759 = vmatmul.mubr.f32.gmra.mrb[0].mxu0 %v2476
  %v2760 = vpop.f32.mrb[0].mxu0
  %v2761 = vadd.f32 %v2636, %v2760
  %v2762 = vpop.f32.mrb[0].mxu0
  %2763 = vmatprep.mubr.f32.mxu0 0.0
  %2764 = vmatmul.mubr.f32.gmra.mrb[0].mxu0 %v2477
  %v2765 = vpop.f32.mrb[0].mxu0
  %v2766 = vadd.f32 %v2641, %v2765
  %v2767 = vpop.f32.mrb[0].mxu0
  %2768 = vmatprep.mubr.f32.mxu0 0.0
  %2769 = vmatmul.mubr.f32.gmra.mrb[0].mxu0 %v2478
  %v2770 = vpop.f32.mrb[0].mxu0
  %v2771 = vadd.f32 %v2646, %v2770
  %v2772 = vpop.f32.mrb[0].mxu0
  %2773 = vmatprep.mubr.f32.mxu0 0.0
  %2774 = vmatmul.mubr.f32.gmra.mrb[0].mxu0 %v2479
  %v2775 = vpop.f32.mrb[0].mxu0
  %v2776 = vadd.f32 %v2651, %v2775
  %v2777 = vpop.f32.mrb[0].mxu0
  %2778 = vmatprep.mubr.f32.mxu0 0.0
  %2779 = vmatmul.mubr.f32.gmra.mrb[0].mxu0 %v2480
  %v2780 = vpop.f32.mrb[0].mxu0
  %v2781 = vadd.f32 %v2656, %v2780
  %v2782 = vpop.f32.mrb[0].mxu0
  %2783 = vmatprep.mubr.f32.mxu0 0.0
  %2784 = vmatmul.mubr.f32.gmra.mrb[0].mxu0 %v2481
  %v2785 = vpop.f32.mrb[0].mxu0
  %v2786 = vadd.f32 %v2661, %v2785
  %v2787 = vpop.f32.mrb[0].mxu0
  %2788 = vmatprep.mubr.f32.mxu0 0.0
  %2789 = vmatmul.mubr.f32.gmra.mrb[0].mxu0 %v2482
  %v2790 = vpop.f32.mrb[0].mxu0
  %v2791 = vadd.f32 %v2666, %v2790
  %v2792 = vpop.f32.mrb[0].mxu0
  %2793 = vmatprep.mubr.f32.mxu0 0.0
  %2794 = vmatmul.mubr.f32.gmra.mrb[0].mxu0 %v2483
  %v2795 = vpop.f32.mrb[0].mxu0
  %v2796 = vadd.f32 %v2671, %v2795
  %v2797 = vpop.f32.mrb[0].mxu0
  %2798 = vmatprep.mubr.f32.mxu0 0.0
  %2799 = vmatmul.mubr.f32.gmra.mrb[0].mxu0 %v2484
  %v2800 = vpop.f32.mrb[0].mxu0
  %v2801 = vadd.f32 %v2676, %v2800
  %v2802 = vpop.f32.mrb[0].mxu0
  %2803 = vmatprep.mubr.f32.mxu0 0.0
  %2804 = vmatmul.mubr.f32.gmra.mrb[0].mxu0 %v2485
  %v2805 = vpop.f32.mrb[0].mxu0
  %v2806 = vadd.f32 %v2681, %v2805
  %v2807 = vpop.f32.mrb[0].mxu0
  %2808 = vmatprep.mubr.f32.mxu0 0.0
  %2809 = vmatmul.mubr.f32.gmra.mrb[0].mxu0 %v2486
  %v2810 = vpop.f32.mrb[0].mxu0
  %v2811 = vadd.f32 %v2686, %v2810
  %v2812 = vpop.f32.mrb[0].mxu0
  %2813 = vmatprep.mubr.f32.mxu0 0.0
  %2814 = vmatmul.mubr.f32.gmra.mrb[0].mxu0 %v2487
  %v2815 = vpop.f32.mrb[0].mxu0
  %v2816 = vadd.f32 %v2691, %v2815
  %v2817 = vpop.f32.mrb[0].mxu0
  %2818 = vdwg.mxu0
  %s2819 = scalar_lea.vmem %s5, 256
  %v2820 = vld [vmem:[%s2819] sm:$0xff]
  %v2821 = vld [vmem:[%s2819 + $0x8] sm:$0xff]
  %v2822 = vld [vmem:[%s2819 + $0x10] sm:$0xff]
  %v2823 = vld [vmem:[%s2819 + $0x18] sm:$0xff]
  %v2824 = vld [vmem:[%s2819 + $0x20] sm:$0xff]
  %v2825 = vld [vmem:[%s2819 + $0x28] sm:$0xff]
  %v2826 = vld [vmem:[%s2819 + $0x30] sm:$0xff]
  %v2827 = vld [vmem:[%s2819 + $0x38] sm:$0xff]
  %v2828 = vld [vmem:[%s2819 + $0x40] sm:$0xff]
  %v2829 = vld [vmem:[%s2819 + $0x48] sm:$0xff]
  %v2830 = vld [vmem:[%s2819 + $0x50] sm:$0xff]
  %v2831 = vld [vmem:[%s2819 + $0x58] sm:$0xff]
  %v2832 = vld [vmem:[%s2819 + $0x60] sm:$0xff]
  %v2833 = vld [vmem:[%s2819 + $0x68] sm:$0xff]
  %v2834 = vld [vmem:[%s2819 + $0x70] sm:$0xff]
  %v2835 = vld [vmem:[%s2819 + $0x78] sm:$0xff]
  %v2836 = vrot.slane %v2476, 4
  %v2837 = vrot.slane %v2477, 4
  %v2838 = vsel %vm132, %v2836, %v2837
  %v2839 = vrot.slane %v2478, 4
  %v2840 = vsel %vm132, %v2837, %v2839
  %v2841 = vrot.slane %v2479, 4
  %v2842 = vsel %vm132, %v2839, %v2841
  %v2843 = vrot.slane %v2480, 4
  %v2844 = vsel %vm132, %v2841, %v2843
  %v2845 = vrot.slane %v2481, 4
  %v2846 = vsel %vm132, %v2843, %v2845
  %v2847 = vrot.slane %v2482, 4
  %v2848 = vsel %vm132, %v2845, %v2847
  %v2849 = vrot.slane %v2483, 4
  %v2850 = vsel %vm132, %v2847, %v2849
  %v2851 = vrot.slane %v2484, 4
  %v2852 = vsel %vm132, %v2849, %v2851
  %v2853 = vrot.slane %v2485, 4
  %v2854 = vsel %vm132, %v2851, %v2853
  %v2855 = vrot.slane %v2486, 4
  %v2856 = vsel %vm132, %v2853, %v2855
  %v2857 = vrot.slane %v2487, 4
  %v2858 = vsel %vm132, %v2855, %v2857
  %v2859 = vsel %vm132, %v2857, %v1451
  %2872 = vmatprep.subr.mxu0 0.0
  %2873 = vmatpush1.msra.mxu0 %v2820
  %2874 = vmatprep.subr.mxu0 0.0
  %2875 = vmatpush1.msra.mxu0 %v2821
  %2876 = vmatprep.subr.mxu0 0.0
  %2877 = vmatpush1.msra.mxu0 %v2822
  %2878 = vmatprep.subr.mxu0 0.0
  %2879 = vmatpush1.msra.mxu0 %v2823
  %2880 = vmatprep.subr.mxu0 0.0
  %2881 = vmatpush1.msra.mxu0 %v2824
  %2882 = vmatprep.subr.mxu0 0.0
  %2883 = vmatpush1.msra.mxu0 %v2825
  %2884 = vmatprep.subr.mxu0 0.0
  %2885 = vmatpush1.msra.mxu0 %v2826
  %2886 = vmatprep.subr.mxu0 0.0
  %2887 = vmatpush1.msra.mxu0 %v2827
  %2888 = vmatprep.subr.mxu0 0.0
  %2889 = vmatpush1.msra.mxu0 %v2828
  %2890 = vmatprep.subr.mxu0 0.0
  %2891 = vmatpush1.msra.mxu0 %v2829
  %2892 = vmatprep.subr.mxu0 0.0
  %2893 = vmatpush1.msra.mxu0 %v2830
  %2894 = vmatprep.subr.mxu0 0.0
  %2895 = vmatpush1.msra.mxu0 %v2831
  %2896 = vmatprep.subr.mxu0 0.0
  %2897 = vmatpush1.msra.mxu0 %v2832
  %2898 = vmatprep.subr.mxu0 0.0
  %2899 = vmatpush1.msra.mxu0 %v2833
  %2900 = vmatprep.subr.mxu0 0.0
  %2901 = vmatpush1.msra.mxu0 %v2834
  %2902 = vmatprep.subr.mxu0 0.0
  %2903 = vmatpush1.msra.mxu0 %v2835
  %2904 = vmatprep.subr.mxu0 0.0
  %2905 = vmatpush1.msra.mxu0 0.0
  %2906 = vmatprep.subr.mxu0 0.0
  %2907 = vmatpush1.msra.mxu0 0.0
  %2908 = vmatprep.subr.mxu0 0.0
  %2909 = vmatpush1.msra.mxu0 0.0
  %2910 = vmatprep.subr.mxu0 0.0
  %2911 = vmatpush1.msra.mxu0 0.0
  %2912 = vmatprep.subr.mxu0 0.0
  %2913 = vmatpush1.msra.mxu0 0.0
  %2914 = vmatprep.subr.mxu0 0.0
  %2915 = vmatpush1.msra.mxu0 0.0
  %2916 = vmatprep.subr.mxu0 0.0
  %2917 = vmatpush1.msra.mxu0 0.0
  %2918 = vmatprep.subr.mxu0 0.0
  %2919 = vmatpush1.msra.mxu0 0.0
  %2920 = vmatprep.subr.mxu0 0.0
  %2921 = vmatpush1.msra.mxu0 0.0
  %2922 = vmatprep.subr.mxu0 0.0
  %2923 = vmatpush1.msra.mxu0 0.0
  %2924 = vmatprep.subr.mxu0 0.0
  %2925 = vmatpush1.msra.mxu0 0.0
  %2926 = vmatprep.subr.mxu0 0.0
  %2927 = vmatpush1.msra.mxu0 0.0
  %2928 = vmatprep.subr.mxu0 0.0
  %2929 = vmatpush1.msra.mxu0 0.0
  %2930 = vmatprep.subr.mxu0 0.0
  %2931 = vmatpush1.msra.mxu0 0.0
  %2932 = vmatprep.subr.mxu0 0.0
  %2933 = vmatpush1.msra.mxu0 0.0
  %2934 = vmatprep.subr.mxu0 0.0
  %2935 = vmatpush1.msra.mxu0 0.0
  %2936 = vmatprep.mubr.f32.mxu0 0.0
  %2937 = vmatmul.mubr.f32.gmra.mrb[0].mxu0 %v2838
  %v2938 = vpop.f32.mrb[0].mxu0
  %v2939 = vadd.f32 0.0, %v2938
  %v2940 = vpop.f32.mrb[0].mxu0
  %2941 = vmatprep.mubr.f32.mxu0 0.0
  %2942 = vmatmul.mubr.f32.gmra.mrb[0].mxu0 %v2840
  %v2943 = vpop.f32.mrb[0].mxu0
  %v2944 = vadd.f32 0.0, %v2943
  %v2945 = vpop.f32.mrb[0].mxu0
  %2946 = vmatprep.mubr.f32.mxu0 0.0
  %2947 = vmatmul.mubr.f32.gmra.mrb[0].mxu0 %v2842
  %v2948 = vpop.f32.mrb[0].mxu0
  %v2949 = vadd.f32 0.0, %v2948
  %v2950 = vpop.f32.mrb[0].mxu0
  %2951 = vmatprep.mubr.f32.mxu0 0.0
  %2952 = vmatmul.mubr.f32.gmra.mrb[0].mxu0 %v2844
  %v2953 = vpop.f32.mrb[0].mxu0
  %v2954 = vadd.f32 0.0, %v2953
  %v2955 = vpop.f32.mrb[0].mxu0
  %2956 = vmatprep.mubr.f32.mxu0 0.0
  %2957 = vmatmul.mubr.f32.gmra.mrb[0].mxu0 %v2846
  %v2958 = vpop.f32.mrb[0].mxu0
  %v2959 = vadd.f32 0.0, %v2958
  %v2960 = vpop.f32.mrb[0].mxu0
  %2961 = vmatprep.mubr.f32.mxu0 0.0
  %2962 = vmatmul.mubr.f32.gmra.mrb[0].mxu0 %v2848
  %v2963 = vpop.f32.mrb[0].mxu0
  %v2964 = vadd.f32 0.0, %v2963
  %v2965 = vpop.f32.mrb[0].mxu0
  %2966 = vmatprep.mubr.f32.mxu0 0.0
  %2967 = vmatmul.mubr.f32.gmra.mrb[0].mxu0 %v2850
  %v2968 = vpop.f32.mrb[0].mxu0
  %v2969 = vadd.f32 0.0, %v2968
  %v2970 = vpop.f32.mrb[0].mxu0
  %2971 = vmatprep.mubr.f32.mxu0 0.0
  %2972 = vmatmul.mubr.f32.gmra.mrb[0].mxu0 %v2852
  %v2973 = vpop.f32.mrb[0].mxu0
  %v2974 = vadd.f32 0.0, %v2973
  %v2975 = vpop.f32.mrb[0].mxu0
  %2976 = vmatprep.mubr.f32.mxu0 0.0
  %2977 = vmatmul.mubr.f32.gmra.mrb[0].mxu0 %v2854
  %v2978 = vpop.f32.mrb[0].mxu0
  %v2979 = vadd.f32 0.0, %v2978
  %v2980 = vpop.f32.mrb[0].mxu0
  %2981 = vmatprep.mubr.f32.mxu0 0.0
  %2982 = vmatmul.mubr.f32.gmra.mrb[0].mxu0 %v2856
  %v2983 = vpop.f32.mrb[0].mxu0
  %v2984 = vadd.f32 0.0, %v2983
  %v2985 = vpop.f32.mrb[0].mxu0
  %2986 = vmatprep.mubr.f32.mxu0 0.0
  %2987 = vmatmul.mubr.f32.gmra.mrb[0].mxu0 %v2858
  %v2988 = vpop.f32.mrb[0].mxu0
  %v2989 = vadd.f32 0.0, %v2988
  %v2990 = vpop.f32.mrb[0].mxu0
  %2991 = vmatprep.mubr.f32.mxu0 0.0
  %2992 = vmatmul.mubr.f32.gmra.mrb[0].mxu0 %v2859
  %v2993 = vpop.f32.mrb[0].mxu0
  %v2994 = vadd.f32 0.0, %v2993
  %v2995 = vpop.f32.mrb[0].mxu0
  %2996 = vdwg.mxu0
  %v2997 = vadd.f32 %v2761, %v2939
  %v2998 = vadd.f32 %v2766, %v2944
  %v2999 = vadd.f32 %v2771, %v2949
  %v3000 = vadd.f32 %v2776, %v2954
  %v3001 = vadd.f32 %v2781, %v2959
  %v3002 = vadd.f32 %v2786, %v2964
  %v3003 = vadd.f32 %v2791, %v2969
  %v3004 = vadd.f32 %v2796, %v2974
  %v3005 = vadd.f32 %v2801, %v2979
  %v3006 = vadd.f32 %v2806, %v2984
  %v3007 = vadd.f32 %v2811, %v2989
  %v3008 = vadd.f32 %v2816, %v2994
  %s3009 = scalar_lea.vmem %s5, 384
  %v3010 = vld [vmem:[%s3009] sm:$0xff]
  %v3011 = vld [vmem:[%s3009 + $0x8] sm:$0xff]
  %v3012 = vld [vmem:[%s3009 + $0x10] sm:$0xff]
  %v3013 = vld [vmem:[%s3009 + $0x18] sm:$0xff]
  %v3014 = vld [vmem:[%s3009 + $0x20] sm:$0xff]
  %v3015 = vld [vmem:[%s3009 + $0x28] sm:$0xff]
  %v3016 = vld [vmem:[%s3009 + $0x30] sm:$0xff]
  %v3017 = vld [vmem:[%s3009 + $0x38] sm:$0xff]
  %v3018 = vld [vmem:[%s3009 + $0x40] sm:$0xff]
  %v3019 = vld [vmem:[%s3009 + $0x48] sm:$0xff]
  %v3020 = vld [vmem:[%s3009 + $0x50] sm:$0xff]
  %v3021 = vld [vmem:[%s3009 + $0x58] sm:$0xff]
  %v3022 = vld [vmem:[%s3009 + $0x60] sm:$0xff]
  %v3023 = vld [vmem:[%s3009 + $0x68] sm:$0xff]
  %v3024 = vld [vmem:[%s3009 + $0x70] sm:$0xff]
  %v3025 = vld [vmem:[%s3009 + $0x78] sm:$0xff]
  %vm3026 = vcmask 1041408
  %v3027 = vrot.slane %v2476, 6
  %v3028 = vrot.slane %v2477, 6
  %v3029 = vsel %vm3026, %v3027, %v3028
  %v3030 = vrot.slane %v2478, 6
  %v3031 = vsel %vm3026, %v3028, %v3030
  %v3032 = vrot.slane %v2479, 6
  %v3033 = vsel %vm3026, %v3030, %v3032
  %v3034 = vrot.slane %v2480, 6
  %v3035 = vsel %vm3026, %v3032, %v3034
  %v3036 = vrot.slane %v2481, 6
  %v3037 = vsel %vm3026, %v3034, %v3036
  %v3038 = vrot.slane %v2482, 6
  %v3039 = vsel %vm3026, %v3036, %v3038
  %v3040 = vrot.slane %v2483, 6
  %v3041 = vsel %vm3026, %v3038, %v3040
  %v3042 = vrot.slane %v2484, 6
  %v3043 = vsel %vm3026, %v3040, %v3042
  %v3044 = vrot.slane %v2485, 6
  %v3045 = vsel %vm3026, %v3042, %v3044
  %v3046 = vrot.slane %v2486, 6
  %v3047 = vsel %vm3026, %v3044, %v3046
  %v3048 = vrot.slane %v2487, 6
  %v3049 = vsel %vm3026, %v3046, %v3048
  %v3050 = vrot.slane 0.0, 6
  %v3051 = vsel %vm3026, %v3048, %v3050
  %3064 = vmatprep.subr.mxu0 0.0
  %3065 = vmatpush1.msra.mxu0 %v3010
  %3066 = vmatprep.subr.mxu0 0.0
  %3067 = vmatpush1.msra.mxu0 %v3011
  %3068 = vmatprep.subr.mxu0 0.0
  %3069 = vmatpush1.msra.mxu0 %v3012
  %3070 = vmatprep.subr.mxu0 0.0
  %3071 = vmatpush1.msra.mxu0 %v3013
  %3072 = vmatprep.subr.mxu0 0.0
  %3073 = vmatpush1.msra.mxu0 %v3014
  %3074 = vmatprep.subr.mxu0 0.0
  %3075 = vmatpush1.msra.mxu0 %v3015
  %3076 = vmatprep.subr.mxu0 0.0
  %3077 = vmatpush1.msra.mxu0 %v3016
  %3078 = vmatprep.subr.mxu0 0.0
  %3079 = vmatpush1.msra.mxu0 %v3017
  %3080 = vmatprep.subr.mxu0 0.0
  %3081 = vmatpush1.msra.mxu0 %v3018
  %3082 = vmatprep.subr.mxu0 0.0
  %3083 = vmatpush1.msra.mxu0 %v3019
  %3084 = vmatprep.subr.mxu0 0.0
  %3085 = vmatpush1.msra.mxu0 %v3020
  %3086 = vmatprep.subr.mxu0 0.0
  %3087 = vmatpush1.msra.mxu0 %v3021
  %3088 = vmatprep.subr.mxu0 0.0
  %3089 = vmatpush1.msra.mxu0 %v3022
  %3090 = vmatprep.subr.mxu0 0.0
  %3091 = vmatpush1.msra.mxu0 %v3023
  %3092 = vmatprep.subr.mxu0 0.0
  %3093 = vmatpush1.msra.mxu0 %v3024
  %3094 = vmatprep.subr.mxu0 0.0
  %3095 = vmatpush1.msra.mxu0 %v3025
  %3096 = vmatprep.subr.mxu0 0.0
  %3097 = vmatpush1.msra.mxu0 0.0
  %3098 = vmatprep.subr.mxu0 0.0
  %3099 = vmatpush1.msra.mxu0 0.0
  %3100 = vmatprep.subr.mxu0 0.0
  %3101 = vmatpush1.msra.mxu0 0.0
  %3102 = vmatprep.subr.mxu0 0.0
  %3103 = vmatpush1.msra.mxu0 0.0
  %3104 = vmatprep.subr.mxu0 0.0
  %3105 = vmatpush1.msra.mxu0 0.0
  %3106 = vmatprep.subr.mxu0 0.0
  %3107 = vmatpush1.msra.mxu0 0.0
  %3108 = vmatprep.subr.mxu0 0.0
  %3109 = vmatpush1.msra.mxu0 0.0
  %3110 = vmatprep.subr.mxu0 0.0
  %3111 = vmatpush1.msra.mxu0 0.0
  %3112 = vmatprep.subr.mxu0 0.0
  %3113 = vmatpush1.msra.mxu0 0.0
  %3114 = vmatprep.subr.mxu0 0.0
  %3115 = vmatpush1.msra.mxu0 0.0
  %3116 = vmatprep.subr.mxu0 0.0
  %3117 = vmatpush1.msra.mxu0 0.0
  %3118 = vmatprep.subr.mxu0 0.0
  %3119 = vmatpush1.msra.mxu0 0.0
  %3120 = vmatprep.subr.mxu0 0.0
  %3121 = vmatpush1.msra.mxu0 0.0
  %3122 = vmatprep.subr.mxu0 0.0
  %3123 = vmatpush1.msra.mxu0 0.0
  %3124 = vmatprep.subr.mxu0 0.0
  %3125 = vmatpush1.msra.mxu0 0.0
  %3126 = vmatprep.subr.mxu0 0.0
  %3127 = vmatpush1.msra.mxu0 0.0
  %3128 = vmatprep.mubr.f32.mxu0 0.0
  %3129 = vmatmul.mubr.f32.gmra.mrb[0].mxu0 %v3029
  %v3130 = vpop.f32.mrb[0].mxu0
  %v3131 = vadd.f32 0.0, %v3130
  %v3132 = vpop.f32.mrb[0].mxu0
  %3133 = vmatprep.mubr.f32.mxu0 0.0
  %3134 = vmatmul.mubr.f32.gmra.mrb[0].mxu0 %v3031
  %v3135 = vpop.f32.mrb[0].mxu0
  %v3136 = vadd.f32 0.0, %v3135
  %v3137 = vpop.f32.mrb[0].mxu0
  %3138 = vmatprep.mubr.f32.mxu0 0.0
  %3139 = vmatmul.mubr.f32.gmra.mrb[0].mxu0 %v3033
  %v3140 = vpop.f32.mrb[0].mxu0
  %v3141 = vadd.f32 0.0, %v3140
  %v3142 = vpop.f32.mrb[0].mxu0
  %3143 = vmatprep.mubr.f32.mxu0 0.0
  %3144 = vmatmul.mubr.f32.gmra.mrb[0].mxu0 %v3035
  %v3145 = vpop.f32.mrb[0].mxu0
  %v3146 = vadd.f32 0.0, %v3145
  %v3147 = vpop.f32.mrb[0].mxu0
  %3148 = vmatprep.mubr.f32.mxu0 0.0
  %3149 = vmatmul.mubr.f32.gmra.mrb[0].mxu0 %v3037
  %v3150 = vpop.f32.mrb[0].mxu0
  %v3151 = vadd.f32 0.0, %v3150
  %v3152 = vpop.f32.mrb[0].mxu0
  %3153 = vmatprep.mubr.f32.mxu0 0.0
  %3154 = vmatmul.mubr.f32.gmra.mrb[0].mxu0 %v3039
  %v3155 = vpop.f32.mrb[0].mxu0
  %v3156 = vadd.f32 0.0, %v3155
  %v3157 = vpop.f32.mrb[0].mxu0
  %3158 = vmatprep.mubr.f32.mxu0 0.0
  %3159 = vmatmul.mubr.f32.gmra.mrb[0].mxu0 %v3041
  %v3160 = vpop.f32.mrb[0].mxu0
  %v3161 = vadd.f32 0.0, %v3160
  %v3162 = vpop.f32.mrb[0].mxu0
  %3163 = vmatprep.mubr.f32.mxu0 0.0
  %3164 = vmatmul.mubr.f32.gmra.mrb[0].mxu0 %v3043
  %v3165 = vpop.f32.mrb[0].mxu0
  %v3166 = vadd.f32 0.0, %v3165
  %v3167 = vpop.f32.mrb[0].mxu0
  %3168 = vmatprep.mubr.f32.mxu0 0.0
  %3169 = vmatmul.mubr.f32.gmra.mrb[0].mxu0 %v3045
  %v3170 = vpop.f32.mrb[0].mxu0
  %v3171 = vadd.f32 0.0, %v3170
  %v3172 = vpop.f32.mrb[0].mxu0
  %3173 = vmatprep.mubr.f32.mxu0 0.0
  %3174 = vmatmul.mubr.f32.gmra.mrb[0].mxu0 %v3047
  %v3175 = vpop.f32.mrb[0].mxu0
  %v3176 = vadd.f32 0.0, %v3175
  %v3177 = vpop.f32.mrb[0].mxu0
  %3178 = vmatprep.mubr.f32.mxu0 0.0
  %3179 = vmatmul.mubr.f32.gmra.mrb[0].mxu0 %v3049
  %v3180 = vpop.f32.mrb[0].mxu0
  %v3181 = vadd.f32 0.0, %v3180
  %v3182 = vpop.f32.mrb[0].mxu0
  %3183 = vmatprep.mubr.f32.mxu0 0.0
  %3184 = vmatmul.mubr.f32.gmra.mrb[0].mxu0 %v3051
  %v3185 = vpop.f32.mrb[0].mxu0
  %v3186 = vadd.f32 0.0, %v3185
  %v3187 = vpop.f32.mrb[0].mxu0
  %3188 = vdwg.mxu0
  %v3189 = vadd.f32 %v2997, %v3131
  %v3190 = vadd.f32 %v2998, %v3136
  %v3191 = vadd.f32 %v2999, %v3141
  %v3192 = vadd.f32 %v3000, %v3146
  %v3193 = vadd.f32 %v3001, %v3151
  %v3194 = vadd.f32 %v3002, %v3156
  %v3195 = vadd.f32 %v3003, %v3161
  %v3196 = vadd.f32 %v3004, %v3166
  %v3197 = vadd.f32 %v3005, %v3171
  %v3198 = vadd.f32 %v3006, %v3176
  %v3199 = vadd.f32 %v3007, %v3181
  %v3200 = vadd.f32 %v3008, %v3186
  %v3201 = vld [vmem:[%s6] sm:$0x1]
  %v3203 = vlaneseq
  %v3204 = vshrl.u32 %v3203, 7
  %v3205 = vsub.s32 0, %v3204
  %v3206 = vrot.slane %v3201, %v3205
  %v3208 = vadd.f32 %v3189, %v3206
  %v3209 = vadd.f32 %v3190, %v3206
  %v3210 = vadd.f32 %v3191, %v3206
  %v3211 = vadd.f32 %v3192, %v3206
  %v3212 = vadd.f32 %v3193, %v3206
  %v3213 = vadd.f32 %v3194, %v3206
  %v3214 = vadd.f32 %v3195, %v3206
  %v3215 = vadd.f32 %v3196, %v3206
  %v3216 = vadd.f32 %v3197, %v3206
  %v3217 = vadd.f32 %v3198, %v3206
  %v3218 = vadd.f32 %v3199, %v3206
  %v3219 = vadd.f32 %v3200, %v3206
  %v3220 = vmax.f32 %v3208, 0.0
  %v3221 = vmax.f32 %v3209, 0.0
  %v3222 = vmax.f32 %v3210, 0.0
  %v3223 = vmax.f32 %v3211, 0.0
  %v3224 = vmax.f32 %v3212, 0.0
  %v3225 = vmax.f32 %v3213, 0.0
  %v3226 = vmax.f32 %v3214, 0.0
  %v3227 = vmax.f32 %v3215, 0.0
  %v3228 = vmax.f32 %v3216, 0.0
  %v3229 = vmax.f32 %v3217, 0.0
  %v3230 = vmax.f32 %v3218, 0.0
  %v3231 = vmax.f32 %v3219, 0.0
  %v3232 = vld [vmem:[%s7] sm:$0xff]
  %v3233 = vld [vmem:[%s7 + $0x8] sm:$0xff]
  %v3234 = vld [vmem:[%s7 + $0x10] sm:$0xff]
  %v3235 = vld [vmem:[%s7 + $0x18] sm:$0xff]
  %v3236 = vld [vmem:[%s7 + $0x20] sm:$0xff]
  %v3237 = vld [vmem:[%s7 + $0x28] sm:$0xff]
  %v3238 = vld [vmem:[%s7 + $0x30] sm:$0x3]
  %v3239 = vld [vmem:[%s8] sm:$0x1]
  %v3241 = vlaneseq
  %v3242 = vshrl.u32 %v3241, 7
  %v3243 = vsub.s32 0, %v3242
  %v3244 = vrot.slane %v3239, %v3243
  %vm3246 = vcmask 408576
  %v3248 = vsel %vm3246, %v3220, 0
  %v3251 = vsel %vm3246, %v3221, 0
  %v3254 = vsel %vm3246, %v3222, 0
  %v3257 = vsel %vm3246, %v3223, 0
  %v3260 = vsel %vm3246, %v3224, 0
  %v3263 = vsel %vm3246, %v3225, 0
  %v3266 = vsel %vm3246, %v3226, 0
  %v3269 = vsel %vm3246, %v3227, 0
  %v3272 = vsel %vm3246, %v3228, 0
  %v3275 = vsel %vm3246, %v3229, 0
  %v3278 = vsel %vm3246, %v3230, 0
  %v3281 = vsel %vm3246, %v3231, 0
  %v3284 = vsel %vm3026, %v3238, 0
  %3286 = vmatprep.subr.mxu0 0.0
  %3287 = vmatpush1.msra.mxu0 %v3232
  %3288 = vmatprep.subr.mxu0 0.0
  %3289 = vmatpush1.msra.mxu0 %v3233
  %3290 = vmatprep.subr.mxu0 0.0
  %3291 = vmatpush1.msra.mxu0 %v3234
  %3292 = vmatprep.subr.mxu0 0.0
  %3293 = vmatpush1.msra.mxu0 %v3235
  %3294 = vmatprep.subr.mxu0 0.0
  %3295 = vmatpush1.msra.mxu0 %v3236
  %3296 = vmatprep.subr.mxu0 0.0
  %3297 = vmatpush1.msra.mxu0 %v3237
  %3298 = vmatprep.subr.mxu0 0.0
  %3299 = vmatpush1.msra.mxu0 %v3284
  %3300 = vmatprep.subr.mxu0 0.0
  %3301 = vmatpush1.msra.mxu0 0.0
  %3302 = vmatprep.subr.mxu0 0.0
  %3303 = vmatpush1.msra.mxu0 0.0
  %3304 = vmatprep.subr.mxu0 0.0
  %3305 = vmatpush1.msra.mxu0 0.0
  %3306 = vmatprep.subr.mxu0 0.0
  %3307 = vmatpush1.msra.mxu0 0.0
  %3308 = vmatprep.subr.mxu0 0.0
  %3309 = vmatpush1.msra.mxu0 0.0
  %3310 = vmatprep.subr.mxu0 0.0
  %3311 = vmatpush1.msra.mxu0 0.0
  %3312 = vmatprep.subr.mxu0 0.0
  %3313 = vmatpush1.msra.mxu0 0.0
  %3314 = vmatprep.subr.mxu0 0.0
  %3315 = vmatpush1.msra.mxu0 0.0
  %3316 = vmatprep.subr.mxu0 0.0
  %3317 = vmatpush1.msra.mxu0 0.0
  %3318 = vmatprep.subr.mxu0 0.0
  %3319 = vmatpush1.msra.mxu0 0.0
  %3320 = vmatprep.subr.mxu0 0.0
  %3321 = vmatpush1.msra.mxu0 0.0
  %3322 = vmatprep.subr.mxu0 0.0
  %3323 = vmatpush1.msra.mxu0 0.0
  %3324 = vmatprep.subr.mxu0 0.0
  %3325 = vmatpush1.msra.mxu0 0.0
  %3326 = vmatprep.subr.mxu0 0.0
  %3327 = vmatpush1.msra.mxu0 0.0
  %3328 = vmatprep.subr.mxu0 0.0
  %3329 = vmatpush1.msra.mxu0 0.0
  %3330 = vmatprep.subr.mxu0 0.0
  %3331 = vmatpush1.msra.mxu0 0.0
  %3332 = vmatprep.subr.mxu0 0.0
  %3333 = vmatpush1.msra.mxu0 0.0
  %3334 = vmatprep.subr.mxu0 0.0
  %3335 = vmatpush1.msra.mxu0 0.0
  %3336 = vmatprep.subr.mxu0 0.0
  %3337 = vmatpush1.msra.mxu0 0.0
  %3338 = vmatprep.subr.mxu0 0.0
  %3339 = vmatpush1.msra.mxu0 0.0
  %3340 = vmatprep.subr.mxu0 0.0
  %3341 = vmatpush1.msra.mxu0 0.0
  %3342 = vmatprep.subr.mxu0 0.0
  %3343 = vmatpush1.msra.mxu0 0.0
  %3344 = vmatprep.subr.mxu0 0.0
  %3345 = vmatpush1.msra.mxu0 0.0
  %3346 = vmatprep.subr.mxu0 0.0
  %3347 = vmatpush1.msra.mxu0 0.0
  %3348 = vmatprep.subr.mxu0 0.0
  %3349 = vmatpush1.msra.mxu0 0.0
  %3350 = vmatprep.mubr.f32.mxu0 0.0
  %3351 = vmatmul.mubr.f32.gmra.mrb[0].mxu0 %v3248
  %v3352 = vpop.f32.mrb[0].mxu0
  %v3353 = vadd.f32 %v3244, %v3352
  %v3354 = vpop.f32.mrb[0].mxu0
  %3355 = vmatprep.mubr.f32.mxu0 0.0
  %3356 = vmatmul.mubr.f32.gmra.mrb[0].mxu0 %v3251
  %v3357 = vpop.f32.mrb[0].mxu0
  %v3358 = vadd.f32 %v3244, %v3357
  %v3359 = vpop.f32.mrb[0].mxu0
  %3360 = vmatprep.mubr.f32.mxu0 0.0
  %3361 = vmatmul.mubr.f32.gmra.mrb[0].mxu0 %v3254
  %v3362 = vpop.f32.mrb[0].mxu0
  %v3363 = vadd.f32 %v3244, %v3362
  %v3364 = vpop.f32.mrb[0].mxu0
  %3365 = vmatprep.mubr.f32.mxu0 0.0
  %3366 = vmatmul.mubr.f32.gmra.mrb[0].mxu0 %v3257
  %v3367 = vpop.f32.mrb[0].mxu0
  %v3368 = vadd.f32 %v3244, %v3367
  %v3369 = vpop.f32.mrb[0].mxu0
  %3370 = vmatprep.mubr.f32.mxu0 0.0
  %3371 = vmatmul.mubr.f32.gmra.mrb[0].mxu0 %v3260
  %v3372 = vpop.f32.mrb[0].mxu0
  %v3373 = vadd.f32 %v3244, %v3372
  %v3374 = vpop.f32.mrb[0].mxu0
  %3375 = vmatprep.mubr.f32.mxu0 0.0
  %3376 = vmatmul.mubr.f32.gmra.mrb[0].mxu0 %v3263
  %v3377 = vpop.f32.mrb[0].mxu0
  %v3378 = vadd.f32 %v3244, %v3377
  %v3379 = vpop.f32.mrb[0].mxu0
  %3380 = vmatprep.mubr.f32.mxu0 0.0
  %3381 = vmatmul.mubr.f32.gmra.mrb[0].mxu0 %v3266
  %v3382 = vpop.f32.mrb[0].mxu0
  %v3383 = vadd.f32 %v3244, %v3382
  %v3384 = vpop.f32.mrb[0].mxu0
  %3385 = vmatprep.mubr.f32.mxu0 0.0
  %3386 = vmatmul.mubr.f32.gmra.mrb[0].mxu0 %v3269
  %v3387 = vpop.f32.mrb[0].mxu0
  %v3388 = vadd.f32 %v3244, %v3387
  %v3389 = vpop.f32.mrb[0].mxu0
  %3390 = vmatprep.mubr.f32.mxu0 0.0
  %3391 = vmatmul.mubr.f32.gmra.mrb[0].mxu0 %v3272
  %v3392 = vpop.f32.mrb[0].mxu0
  %v3393 = vadd.f32 %v3244, %v3392
  %v3394 = vpop.f32.mrb[0].mxu0
  %3395 = vmatprep.mubr.f32.mxu0 0.0
  %3396 = vmatmul.mubr.f32.gmra.mrb[0].mxu0 %v3275
  %v3397 = vpop.f32.mrb[0].mxu0
  %v3398 = vadd.f32 %v3244, %v3397
  %v3399 = vpop.f32.mrb[0].mxu0
  %3400 = vmatprep.mubr.f32.mxu0 0.0
  %3401 = vmatmul.mubr.f32.gmra.mrb[0].mxu0 %v3278
  %v3402 = vpop.f32.mrb[0].mxu0
  %v3403 = vadd.f32 %v3244, %v3402
  %v3404 = vpop.f32.mrb[0].mxu0
  %3405 = vmatprep.mubr.f32.mxu0 0.0
  %3406 = vmatmul.mubr.f32.gmra.mrb[0].mxu0 %v3281
  %v3407 = vpop.f32.mrb[0].mxu0
  %v3408 = vadd.f32 %v3244, %v3407
  %v3409 = vpop.f32.mrb[0].mxu0
  %3410 = vdwg.mxu0
  %v3411 = vld [vmem:[%s9] sm:$0xff]
  %vm3412 = vcmask 785408
  %v3414 = vsel %vm3412, %v3411, 0
  %3416 = vmatprep.subr.mxu0 0.0
  %3417 = vmatpush1.msra.mxu0 %v3353
  %3418 = vmatprep.subr.mxu0 0.0
  %3419 = vmatpush1.msra.mxu0 %v3358
  %3420 = vmatprep.subr.mxu0 0.0
  %3421 = vmatpush1.msra.mxu0 %v3363
  %3422 = vmatprep.subr.mxu0 0.0
  %3423 = vmatpush1.msra.mxu0 %v3368
  %3424 = vmatprep.subr.mxu0 0.0
  %3425 = vmatpush1.msra.mxu0 %v3373
  %3426 = vmatprep.subr.mxu0 0.0
  %3427 = vmatpush1.msra.mxu0 %v3378
  %3428 = vmatprep.subr.mxu0 0.0
  %3429 = vmatpush1.msra.mxu0 %v3383
  %3430 = vmatprep.subr.mxu0 0.0
  %3431 = vmatpush1.msra.mxu0 %v3388
  %3432 = vmatprep.subr.mxu0 0.0
  %3433 = vmatpush1.msra.mxu0 %v3393
  %3434 = vmatprep.subr.mxu0 0.0
  %3435 = vmatpush1.msra.mxu0 %v3398
  %3436 = vmatprep.subr.mxu0 0.0
  %3437 = vmatpush1.msra.mxu0 %v3403
  %3438 = vmatprep.subr.mxu0 0.0
  %3439 = vmatpush1.msra.mxu0 %v3408
  %3440 = vmatprep.subr.mxu0 0.0
  %3441 = vmatpush1.msra.mxu0 0.0
  %3442 = vmatprep.subr.mxu0 0.0
  %3443 = vmatpush1.msra.mxu0 0.0
  %3444 = vmatprep.subr.mxu0 0.0
  %3445 = vmatpush1.msra.mxu0 0.0
  %3446 = vmatprep.subr.mxu0 0.0
  %3447 = vmatpush1.msra.mxu0 0.0
  %3448 = vmatprep.subr.mxu0 0.0
  %3449 = vmatpush1.msra.mxu0 0.0
  %3450 = vmatprep.subr.mxu0 0.0
  %3451 = vmatpush1.msra.mxu0 0.0
  %3452 = vmatprep.subr.mxu0 0.0
  %3453 = vmatpush1.msra.mxu0 0.0
  %3454 = vmatprep.subr.mxu0 0.0
  %3455 = vmatpush1.msra.mxu0 0.0
  %3456 = vmatprep.subr.mxu0 0.0
  %3457 = vmatpush1.msra.mxu0 0.0
  %3458 = vmatprep.subr.mxu0 0.0
  %3459 = vmatpush1.msra.mxu0 0.0
  %3460 = vmatprep.subr.mxu0 0.0
  %3461 = vmatpush1.msra.mxu0 0.0
  %3462 = vmatprep.subr.mxu0 0.0
  %3463 = vmatpush1.msra.mxu0 0.0
  %3464 = vmatprep.subr.mxu0 0.0
  %3465 = vmatpush1.msra.mxu0 0.0
  %3466 = vmatprep.subr.mxu0 0.0
  %3467 = vmatpush1.msra.mxu0 0.0
  %3468 = vmatprep.subr.mxu0 0.0
  %3469 = vmatpush1.msra.mxu0 0.0
  %3470 = vmatprep.subr.mxu0 0.0
  %3471 = vmatpush1.msra.mxu0 0.0
  %3472 = vmatprep.subr.mxu0 0.0
  %3473 = vmatpush1.msra.mxu0 0.0
  %3474 = vmatprep.subr.mxu0 0.0
  %3475 = vmatpush1.msra.mxu0 0.0
  %3476 = vmatprep.subr.mxu0 0.0
  %3477 = vmatpush1.msra.mxu0 0.0
  %3478 = vmatprep.subr.mxu0 0.0
  %3479 = vmatpush1.msra.mxu0 0.0
  %3480 = vmatprep.mubr.f32.mxu0 0.0
  %3481 = vmatmul.mubr.f32.gmra.mrb[0].mxu0 %v3414
  %v3482 = vpop.f32.mrb[0].mxu0
  %v3483 = vadd.f32 0.0, %v3482
  %v3484 = vpop.f32.mrb[0].mxu0
  %3485 = vdwg.mxu0
  %vm3486 = vcmask 80896
  %v3487 = vsel %vm3486, %v3483, -inf
  %3488 = vmax.xlane.f32.xlu0 %v3487
  %v3489 = vpop.xlane.xlu0 %3488
  %v3490 = vsub.f32 %v3483, %v3489
  %v3491 = vmul.f32 %v3490, 1.442695
  %v3492 = vpow.pop %v3491
  %v3493 = vsel %vm3486, %v3492, 0.0
  %3494 = vadd.xlane.f32.xlu0 %v3493
  %v3495 = vpop.xlane.xlu0 %3494
  %v3496 = vlog2.pop %v3495
  %v3497 = vmul.f32 %v3496, 0.6931472
  %v3498 = vsub.f32 %v3490, %v3497
  %3499 = vst.msk [vmem:[%s10] sm:$0xff] %vm3486, %v3498
  // Predicated region
  $region42: #{net_forward.1} parent=0 // pred_check
    _
  $region43: #{net_forward.1} parent=0 // pred_check_branch
    %3501 = sbr.rel (0) target = $region45
  $region44: #{net_forward.1} parent=0 // pred_region
    _
  $region45: #{net_forward.1} parent=0 // pred_fallthru
    _
  // Predicated region
  $region46: #{net_forward.1} parent=0 // pred_check
    _
  $region47: #{net_forward.1} parent=0 // pred_check_branch
    %3503 = sbr.rel (0) target = $region49
  $region48: #{net_forward.1} parent=0 // pred_region
    _
  $region49: #{net_forward.1} parent=0 // pred_fallthru
    _

</llo_original>
